<compile_context>
chip_gen: v6e
topology: v6e:2x2x1
jax: 0.10.0
libtpu: 0.0.40
codegen_flags: <defaults>
</compile_context>

<pallas_src>
import math
import jax
import jax.numpy as jnp
from jax.experimental import pallas as pl
from jax.experimental.pallas import tpu as pltpu

N_PER_GRAPH = 32
NUM_GRAPHS = 2
N = N_PER_GRAPH * NUM_GRAPHS
HIDDEN = 64
IN_XYZ = 3
FIELDS_DIM = 5
IN_DIM = IN_XYZ + FIELDS_DIM            # planes[0]
OUT_DIM = 4                             # planes[-1]
RATIO = 0.8


# ---------- exact-GELU (torch.nn.GELU default, erf-based) ----------
def _erf(x):
    # Abramowitz & Stegun 7.1.26 (abs err ~1.5e-7, i.e. f32-exact GELU).
    a1, a2, a3, a4, a5 = 0.254829592, -0.284496736, 1.421413741, -1.453152027, 1.061405429
    p = 0.3275911
    s = jnp.where(x >= 0.0, 1.0, -1.0)
    ax = jnp.abs(x)
    t = 1.0 / (1.0 + p * ax)
    poly = ((((a5 * t + a4) * t + a3) * t + a2) * t + a1) * t
    return s * (1.0 - poly * jnp.exp(-ax * ax))


def _gelu(x):
    return 0.5 * x * (1.0 + _erf(x * 0.7071067811865476))


# ---------------- fused forward kernel (one graph per grid step) ----------------
def make_kernel(ks, n, hidden):
    k1, k2, k3 = ks

    def kernel(x0_ref, adj_ref,
               wl1, wr1, b1, p1,
               wl2, wr2, b2, p2,
               wl3, wr3, b3, p3,
               l1a, l1b, lb1, l2w, lb2, l3w, lb3,
               out_ref):
        x = x0_ref[0]                                   # [n, IN_DIM]
        adj = adj_ref[0]                                # [n, n]  A[dst, src]

        ri = jax.lax.broadcasted_iota(jnp.int32, (n, n), 0)
        ci = jax.lax.broadcasted_iota(jnp.int32, (n, n), 1)
        eye = ri == ci
        j_lt_i = ci < ri                                # index tie-break: j < i

        kc = jnp.ones((n, 1), jnp.float32)              # keep mask (column)
        kr = jnp.ones((1, n), jnp.float32)              # keep mask (row)
        acc_max = jnp.zeros((1, hidden), jnp.float32)   # sum_l gmp
        acc_mean = jnp.zeros((1, hidden), jnp.float32)  # sum_l gap

        layers = ((wl1, wr1, b1, p1, k1),
                  (wl2, wr2, b2, p2, k2),
                  (wl3, wr3, b3, p3, k3))

        for wl_ref, wr_ref, b_ref, p_ref, k in layers:
            # --- SAGEConv (aggr='mean') + GELU; normalization folded into adj ---
            deg = jnp.sum(adj, axis=1, keepdims=True)
            adjn = adj * (1.0 / jnp.maximum(deg, 1.0))
            agg = jnp.dot(adjn, x, preferred_element_type=jnp.float32)
            h = (jnp.dot(agg, wl_ref[...], preferred_element_type=jnp.float32)
                 + jnp.dot(x, wr_ref[...], preferred_element_type=jnp.float32)
                 + b_ref[...])
            x = _gelu(h)                                # [n, hidden]

            # --- TopKPooling: score, in-kernel top-k (pairwise rank), scale, mask ---
            # score = tanh(x . w / ||w||); w pre-normalized and stored as a row.
            sc = jnp.tanh(jnp.sum(x * p_ref[...], axis=1, keepdims=True))          # [n,1]
            # exact "transpose" of the score column via masked sublane-reduce
            sr = jnp.sum(jnp.where(eye, sc, 0.0), axis=0, keepdims=True)            # [1,n]
            beats = (sr > sc) | ((sr == sc) & j_lt_i)   # [n,n]: node j outranks node i
            rank = jnp.sum(jnp.where(beats, 1.0, 0.0) * kr, axis=1, keepdims=True)  # among kept j
            kc = kc * (rank < float(k)).astype(jnp.float32)
            kr = jnp.sum(jnp.where(eye, kc, 0.0), axis=0, keepdims=True)
            x = x * sc * kc                             # kept nodes scaled by score, dropped -> 0
            adj = adj * kc * kr                         # remove edges touching dropped nodes

            # --- readout: global max / mean over kept nodes, accumulated over layers ---
            acc_max = acc_max + jnp.max(jnp.where(kc > 0.5, x, -jnp.inf),
                                        axis=0, keepdims=True)
            acc_mean = acc_mean + jnp.sum(x, axis=0, keepdims=True) * (1.0 / float(k))

        # --- MLP head (lin1 split into the [max | mean] halves) ---
        z = (jnp.dot(acc_max, l1a[...], preferred_element_type=jnp.float32)
             + jnp.dot(acc_mean, l1b[...], preferred_element_type=jnp.float32)
             + lb1[...])
        hm = _gelu(z)
        hm = _gelu(jnp.dot(hm, l2w[...], preferred_element_type=jnp.float32) + lb2[...])
        out_ref[0] = jnp.dot(hm, l3w[...], preferred_element_type=jnp.float32) + lb3[...]

    return kernel


# ---------------- wrapper ----------------
def prep_params(params):
    flat = []
    for i in (1, 2, 3):
        c = params[f'conv{i}']
        p = params[f'pool{i}']
        p_hat = (p / jnp.linalg.norm(p)).reshape(1, HIDDEN)   # tanh(x . w / ||w||), row form
        flat += [c['wl'], c['wr'], c['bl'], p_hat]
    flat += [params['lin1_w'][:HIDDEN], params['lin1_w'][HIDDEN:], params['lin1_b'],
             params['lin2_w'], params['lin2_b'],
             params['lin3_w'], params['lin3_b']]
    return flat


def recognizer_forward(x_nodes, fields, adj_blocks, params):
    # data.x[:, :3] ++ fields, split into per-graph blocks
    x0 = jnp.concatenate([x_nodes[:, :IN_XYZ], fields], axis=-1)
    x0 = x0.reshape(NUM_GRAPHS, N_PER_GRAPH, IN_DIM)

    # static per-layer top-k sizes (all graphs have N_PER_GRAPH nodes)
    ks, c = [], N_PER_GRAPH
    for _ in range(3):
        c = int(math.ceil(RATIO * c))
        ks.append(c)

    flat = prep_params(params)

    def wspec(arr):
        nd = arr.ndim
        return pl.BlockSpec(arr.shape, lambda g, nd=nd: (0,) * nd)

    in_specs = [pl.BlockSpec((1, N_PER_GRAPH, IN_DIM), lambda g: (g, 0, 0)),
                pl.BlockSpec((1, N_PER_GRAPH, N_PER_GRAPH), lambda g: (g, 0, 0))]
    in_specs += [wspec(w) for w in flat]

    out = pl.pallas_call(
        make_kernel(tuple(ks), N_PER_GRAPH, HIDDEN),
        out_shape=jax.ShapeDtypeStruct((NUM_GRAPHS, 1, OUT_DIM), jnp.float32),
        grid=(NUM_GRAPHS,),
        in_specs=in_specs,
        out_specs=pl.BlockSpec((1, 1, OUT_DIM), lambda g: (g, 0, 0)),
        compiler_params=pltpu.CompilerParams(dimension_semantics=("parallel",)),
    )(x0, adj_blocks, *flat)
    return out.reshape(NUM_GRAPHS, OUT_DIM)


def init_params(key):
    keys = jax.random.split(key, 18)

    def dense(k, fin, fout):
        return 0.1 * jax.random.normal(k, (fin, fout), dtype=jnp.float32)

    params = {}
    dims = [IN_DIM, HIDDEN, HIDDEN]
    for i in range(3):
        params[f'conv{i + 1}'] = {
            'wl': dense(keys[3 * i], dims[i], HIDDEN),
            'wr': dense(keys[3 * i + 1], dims[i], HIDDEN),
            'bl': 0.1 * jax.random.normal(keys[3 * i + 2], (1, HIDDEN), dtype=jnp.float32),
        }
        params[f'pool{i + 1}'] = jax.random.normal(keys[9 + i], (HIDDEN,), dtype=jnp.float32)
    params['lin1_w'] = dense(keys[12], 2 * HIDDEN, HIDDEN)
    params['lin1_b'] = 0.1 * jax.random.normal(keys[13], (1, HIDDEN), dtype=jnp.float32)
    params['lin2_w'] = dense(keys[14], HIDDEN, HIDDEN)
    params['lin2_b'] = 0.1 * jax.random.normal(keys[15], (1, HIDDEN), dtype=jnp.float32)
    params['lin3_w'] = dense(keys[16], HIDDEN, OUT_DIM)
    params['lin3_b'] = 0.1 * jax.random.normal(keys[17], (1, OUT_DIM), dtype=jnp.float32)
    return params


if __name__ == "__main__":
    key = jax.random.PRNGKey(0)
    kx, kf, ksrc, kdst, kp = jax.random.split(key, 5)

    # data.x (only first 3 columns used), fields, and a random edge set per graph.
    x_nodes = jax.random.normal(kx, (N, 6), dtype=jnp.float32)
    fields = jax.random.normal(kf, (N, FIELDS_DIM), dtype=jnp.float32)
    E = 96
    src = jax.random.randint(ksrc, (NUM_GRAPHS, E), 0, N_PER_GRAPH)
    dst = jax.random.randint(kdst, (NUM_GRAPHS, E), 0, N_PER_GRAPH)
    # block-diagonal adjacency stored as per-graph blocks A[g, dst, src] = 1
    # (edge set, no multi-edges; edges never cross graphs, as in a PyG batch)
    adj_blocks = jnp.zeros((NUM_GRAPHS, N_PER_GRAPH, N_PER_GRAPH), dtype=jnp.float32)
    for g in range(NUM_GRAPHS):
        adj_blocks = adj_blocks.at[g, dst[g], src[g]].set(1.0)

    params = init_params(kp)

    # TODO(synk): edge_attr is carried/filtered by TopKPooling in the reference
    # module but never used by any compute, so it is omitted here.
    fwd = jax.jit(recognizer_forward)
    out = fwd(x_nodes, fields, adj_blocks, params)
    out = jax.block_until_ready(out)
    assert out.shape == (NUM_GRAPHS, OUT_DIM) and out.dtype == jnp.float32
    assert bool(jnp.all(jnp.isfinite(out)))
    print("KERNEL_OK")
</pallas_src>

<mosaic_0001>
module attributes {stable_mosaic.version = 11 : i64} {
  func.func @kernel(%arg0: i32, %arg1: memref<1x32x8xf32, #tpu.memory_space<vmem>>, %arg2: memref<1x32x32xf32, #tpu.memory_space<vmem>>, %arg3: memref<8x64xf32, #tpu.memory_space<vmem>>, %arg4: memref<8x64xf32, #tpu.memory_space<vmem>>, %arg5: memref<1x64xf32, #tpu.memory_space<vmem>>, %arg6: memref<1x64xf32, #tpu.memory_space<vmem>>, %arg7: memref<64x64xf32, #tpu.memory_space<vmem>>, %arg8: memref<64x64xf32, #tpu.memory_space<vmem>>, %arg9: memref<1x64xf32, #tpu.memory_space<vmem>>, %arg10: memref<1x64xf32, #tpu.memory_space<vmem>>, %arg11: memref<64x64xf32, #tpu.memory_space<vmem>>, %arg12: memref<64x64xf32, #tpu.memory_space<vmem>>, %arg13: memref<1x64xf32, #tpu.memory_space<vmem>>, %arg14: memref<1x64xf32, #tpu.memory_space<vmem>>, %arg15: memref<64x64xf32, #tpu.memory_space<vmem>>, %arg16: memref<64x64xf32, #tpu.memory_space<vmem>>, %arg17: memref<1x64xf32, #tpu.memory_space<vmem>>, %arg18: memref<64x64xf32, #tpu.memory_space<vmem>>, %arg19: memref<1x64xf32, #tpu.memory_space<vmem>>, %arg20: memref<64x4xf32, #tpu.memory_space<vmem>>, %arg21: memref<1x4xf32, #tpu.memory_space<vmem>>, %arg22: memref<1x1x4xf32, #tpu.memory_space<vmem>>) attributes {dimension_semantics = [#tpu.dimension_semantics<parallel>], iteration_bounds = array<i64: 2>, scalar_prefetch = 0 : i64, scratch_operands = 0 : i64, tpu.core_type = #tpu.core_type<tc>, window_params = [{transform_indices = @transform_0, window_bounds = array<i64: 1, 32, 8>}, {transform_indices = @transform_1, window_bounds = array<i64: 1, 32, 32>}, {pipeline_mode = #tpu.pipeline_mode<synchronous>, transform_indices = @transform_2, window_bounds = array<i64: 8, 64>}, {pipeline_mode = #tpu.pipeline_mode<synchronous>, transform_indices = @transform_3, window_bounds = array<i64: 8, 64>}, {pipeline_mode = #tpu.pipeline_mode<synchronous>, transform_indices = @transform_4, window_bounds = array<i64: 1, 64>}, {pipeline_mode = #tpu.pipeline_mode<synchronous>, transform_indices = @transform_5, window_bounds = array<i64: 1, 64>}, {pipeline_mode = #tpu.pipeline_mode<synchronous>, transform_indices = @transform_6, window_bounds = array<i64: 64, 64>}, {pipeline_mode = #tpu.pipeline_mode<synchronous>, transform_indices = @transform_7, window_bounds = array<i64: 64, 64>}, {pipeline_mode = #tpu.pipeline_mode<synchronous>, transform_indices = @transform_8, window_bounds = array<i64: 1, 64>}, {pipeline_mode = #tpu.pipeline_mode<synchronous>, transform_indices = @transform_9, window_bounds = array<i64: 1, 64>}, {pipeline_mode = #tpu.pipeline_mode<synchronous>, transform_indices = @transform_10, window_bounds = array<i64: 64, 64>}, {pipeline_mode = #tpu.pipeline_mode<synchronous>, transform_indices = @transform_11, window_bounds = array<i64: 64, 64>}, {pipeline_mode = #tpu.pipeline_mode<synchronous>, transform_indices = @transform_12, window_bounds = array<i64: 1, 64>}, {pipeline_mode = #tpu.pipeline_mode<synchronous>, transform_indices = @transform_13, window_bounds = array<i64: 1, 64>}, {pipeline_mode = #tpu.pipeline_mode<synchronous>, transform_indices = @transform_14, window_bounds = array<i64: 64, 64>}, {pipeline_mode = #tpu.pipeline_mode<synchronous>, transform_indices = @transform_15, window_bounds = array<i64: 64, 64>}, {pipeline_mode = #tpu.pipeline_mode<synchronous>, transform_indices = @transform_16, window_bounds = array<i64: 1, 64>}, {pipeline_mode = #tpu.pipeline_mode<synchronous>, transform_indices = @transform_17, window_bounds = array<i64: 64, 64>}, {pipeline_mode = #tpu.pipeline_mode<synchronous>, transform_indices = @transform_18, window_bounds = array<i64: 1, 64>}, {pipeline_mode = #tpu.pipeline_mode<synchronous>, transform_indices = @transform_19, window_bounds = array<i64: 64, 4>}, {pipeline_mode = #tpu.pipeline_mode<synchronous>, transform_indices = @transform_20, window_bounds = array<i64: 1, 4>}, {transform_indices = @transform_21, window_bounds = array<i64: 1, 1, 4>}]} {
    %c0 = arith.constant 0 : index
    %c0_0 = arith.constant 0 : index
    %c0_1 = arith.constant 0 : index
    %0 = vector.load %arg1[%c0, %c0_0, %c0_1] : memref<1x32x8xf32, #tpu.memory_space<vmem>>, vector<1x32x8xf32>
    %1 = vector.shape_cast %0 : vector<1x32x8xf32> to vector<32x8xf32>
    %c0_2 = arith.constant 0 : index
    %c0_3 = arith.constant 0 : index
    %c0_4 = arith.constant 0 : index
    %2 = vector.load %arg2[%c0_2, %c0_3, %c0_4] : memref<1x32x32xf32, #tpu.memory_space<vmem>>, vector<1x32x32xf32>
    %3 = vector.shape_cast %2 : vector<1x32x32xf32> to vector<32x32xf32>
    %4 = tpu.iota {dimensions = array<i32: 0>} : vector<32x32xi32>
    %5 = tpu.iota {dimensions = array<i32: 1>} : vector<32x32xi32>
    %6 = arith.cmpi eq, %4, %5 : vector<32x32xi32>
    %7 = arith.cmpi slt, %5, %4 : vector<32x32xi32>
    %cst = arith.constant 1.000000e+00 : f32
    %8 = vector.broadcast %cst : f32 to vector<32x1xf32>
    %cst_5 = arith.constant 1.000000e+00 : f32
    %9 = vector.broadcast %cst_5 : f32 to vector<1x32xf32>
    %cst_6 = arith.constant 0.000000e+00 : f32
    %10 = vector.broadcast %cst_6 : f32 to vector<1x64xf32>
    %cst_7 = arith.constant 0.000000e+00 : f32
    %11 = vector.broadcast %cst_7 : f32 to vector<1x64xf32>
    %cst_8 = arith.constant dense<0.000000e+00> : vector<32xf32>
    %12 = vector.multi_reduction <add>, %3, %cst_8 [1] : vector<32x32xf32> to vector<32xf32>
    %13 = vector.shape_cast %12 : vector<32xf32> to vector<32x1xf32>
    %cst_9 = arith.constant 1.000000e+00 : f32
    %14 = vector.broadcast %cst_9 : f32 to vector<32x1xf32>
    %15 = arith.maximumf %13, %14 : vector<32x1xf32>
    %cst_10 = arith.constant 1.000000e+00 : f32
    %16 = vector.broadcast %cst_10 : f32 to vector<32x1xf32>
    %17 = arith.divf %16, %15 : vector<32x1xf32>
    %18 = vector.broadcast %17 : vector<32x1xf32> to vector<32x32xf32>
    %19 = arith.mulf %3, %18 : vector<32x32xf32>
    %cst_11 = arith.constant dense<0.000000e+00> : vector<32x8xf32>
    %20 = tpu.matmul %19, %1, %cst_11 {dimension_numbers = #tpu.dot_dimension_numbers<[1], [0], [0], [1], [0, 0, 1, 1], [], []>} : vector<32x32xf32>, vector<32x8xf32>, vector<32x8xf32> -> vector<32x8xf32>
    %c0_12 = arith.constant 0 : index
    %c0_13 = arith.constant 0 : index
    %21 = vector.load %arg3[%c0_12, %c0_13] : memref<8x64xf32, #tpu.memory_space<vmem>>, vector<8x64xf32>
    %cst_14 = arith.constant dense<0.000000e+00> : vector<32x64xf32>
    %22 = tpu.matmul %20, %21, %cst_14 {dimension_numbers = #tpu.dot_dimension_numbers<[1], [0], [0], [1], [0, 0, 1, 1], [], []>} : vector<32x8xf32>, vector<8x64xf32>, vector<32x64xf32> -> vector<32x64xf32>
    %c0_15 = arith.constant 0 : index
    %c0_16 = arith.constant 0 : index
    %23 = vector.load %arg4[%c0_15, %c0_16] : memref<8x64xf32, #tpu.memory_space<vmem>>, vector<8x64xf32>
    %cst_17 = arith.constant dense<0.000000e+00> : vector<32x64xf32>
    %24 = tpu.matmul %1, %23, %cst_17 {dimension_numbers = #tpu.dot_dimension_numbers<[1], [0], [0], [1], [0, 0, 1, 1], [], []>} : vector<32x8xf32>, vector<8x64xf32>, vector<32x64xf32> -> vector<32x64xf32>
    %25 = arith.addf %22, %24 : vector<32x64xf32>
    %c0_18 = arith.constant 0 : index
    %c0_19 = arith.constant 0 : index
    %26 = vector.load %arg5[%c0_18, %c0_19] : memref<1x64xf32, #tpu.memory_space<vmem>>, vector<1x64xf32>
    %27 = vector.broadcast %26 : vector<1x64xf32> to vector<32x64xf32>
    %28 = arith.addf %25, %27 : vector<32x64xf32>
    %cst_20 = arith.constant 5.000000e-01 : f32
    %29 = vector.broadcast %cst_20 : f32 to vector<32x64xf32>
    %30 = arith.mulf %29, %28 : vector<32x64xf32>
    %cst_21 = arith.constant 0.707106769 : f32
    %31 = vector.broadcast %cst_21 : f32 to vector<32x64xf32>
    %32 = arith.mulf %28, %31 : vector<32x64xf32>
    %cst_22 = arith.constant 0.000000e+00 : f32
    %33 = vector.broadcast %cst_22 : f32 to vector<32x64xf32>
    %34 = arith.cmpf oge, %32, %33 : vector<32x64xf32>
    %cst_23 = arith.constant 1.000000e+00 : f32
    %cst_24 = arith.constant -1.000000e+00 : f32
    %35 = vector.broadcast %cst_23 : f32 to vector<32x64xf32>
    %36 = vector.broadcast %cst_24 : f32 to vector<32x64xf32>
    %37 = arith.select %34, %35, %36 : vector<32x64xi1>, vector<32x64xf32>
    %38 = math.absf %32 : vector<32x64xf32>
    %cst_25 = arith.constant 0.327591091 : f32
    %39 = vector.broadcast %cst_25 : f32 to vector<32x64xf32>
    %40 = arith.mulf %39, %38 : vector<32x64xf32>
    %cst_26 = arith.constant 1.000000e+00 : f32
    %41 = vector.broadcast %cst_26 : f32 to vector<32x64xf32>
    %42 = arith.addf %41, %40 : vector<32x64xf32>
    %cst_27 = arith.constant 1.000000e+00 : f32
    %43 = vector.broadcast %cst_27 : f32 to vector<32x64xf32>
    %44 = arith.divf %43, %42 : vector<32x64xf32>
    %cst_28 = arith.constant 1.06140542 : f32
    %45 = vector.broadcast %cst_28 : f32 to vector<32x64xf32>
    %46 = arith.mulf %45, %44 : vector<32x64xf32>
    %cst_29 = arith.constant -1.45315206 : f32
    %47 = vector.broadcast %cst_29 : f32 to vector<32x64xf32>
    %48 = arith.addf %46, %47 : vector<32x64xf32>
    %49 = arith.mulf %48, %44 : vector<32x64xf32>
    %cst_30 = arith.constant 1.42141378 : f32
    %50 = vector.broadcast %cst_30 : f32 to vector<32x64xf32>
    %51 = arith.addf %49, %50 : vector<32x64xf32>
    %52 = arith.mulf %51, %44 : vector<32x64xf32>
    %cst_31 = arith.constant -0.284496725 : f32
    %53 = vector.broadcast %cst_31 : f32 to vector<32x64xf32>
    %54 = arith.addf %52, %53 : vector<32x64xf32>
    %55 = arith.mulf %54, %44 : vector<32x64xf32>
    %cst_32 = arith.constant 0.254829586 : f32
    %56 = vector.broadcast %cst_32 : f32 to vector<32x64xf32>
    %57 = arith.addf %55, %56 : vector<32x64xf32>
    %58 = arith.mulf %57, %44 : vector<32x64xf32>
    %cst_33 = arith.constant 0.000000e+00 : f32
    %59 = vector.broadcast %cst_33 : f32 to vector<32x64xf32>
    %60 = arith.subf %59, %38 : vector<32x64xf32>
    %61 = arith.mulf %60, %38 : vector<32x64xf32>
    %62 = math.exp %61 : vector<32x64xf32>
    %63 = arith.mulf %58, %62 : vector<32x64xf32>
    %cst_34 = arith.constant 1.000000e+00 : f32
    %64 = vector.broadcast %cst_34 : f32 to vector<32x64xf32>
    %65 = arith.subf %64, %63 : vector<32x64xf32>
    %66 = arith.mulf %37, %65 : vector<32x64xf32>
    %cst_35 = arith.constant 1.000000e+00 : f32
    %67 = vector.broadcast %cst_35 : f32 to vector<32x64xf32>
    %68 = arith.addf %67, %66 : vector<32x64xf32>
    %69 = arith.mulf %30, %68 : vector<32x64xf32>
    %c0_36 = arith.constant 0 : index
    %c0_37 = arith.constant 0 : index
    %70 = vector.load %arg6[%c0_36, %c0_37] : memref<1x64xf32, #tpu.memory_space<vmem>>, vector<1x64xf32>
    %71 = vector.broadcast %70 : vector<1x64xf32> to vector<32x64xf32>
    %72 = arith.mulf %69, %71 : vector<32x64xf32>
    %cst_38 = arith.constant dense<0.000000e+00> : vector<32xf32>
    %73 = vector.multi_reduction <add>, %72, %cst_38 [1] : vector<32x64xf32> to vector<32xf32>
    %74 = vector.shape_cast %73 : vector<32xf32> to vector<32x1xf32>
    %75 = math.tanh %74 : vector<32x1xf32>
    %cst_39 = arith.constant 0.000000e+00 : f32
    %76 = vector.shape_cast %75 : vector<32x1xf32> to vector<32x1xf32>
    %77 = vector.broadcast %76 : vector<32x1xf32> to vector<32x32xf32>
    %78 = vector.broadcast %cst_39 : f32 to vector<32x32xf32>
    %79 = arith.select %6, %77, %78 : vector<32x32xi1>, vector<32x32xf32>
    %cst_40 = arith.constant dense<0.000000e+00> : vector<32xf32>
    %80 = vector.multi_reduction <add>, %79, %cst_40 [0] : vector<32x32xf32> to vector<32xf32>
    %81 = vector.shape_cast %80 : vector<32xf32> to vector<1x32xf32>
    %82 = vector.broadcast %81 : vector<1x32xf32> to vector<32x32xf32>
    %83 = vector.broadcast %75 : vector<32x1xf32> to vector<32x32xf32>
    %84 = arith.cmpf ogt, %82, %83 : vector<32x32xf32>
    %85 = vector.broadcast %81 : vector<1x32xf32> to vector<32x32xf32>
    %86 = vector.broadcast %75 : vector<32x1xf32> to vector<32x32xf32>
    %87 = arith.cmpf oeq, %85, %86 : vector<32x32xf32>
    %88 = arith.andi %87, %7 : vector<32x32xi1>
    %89 = arith.ori %84, %88 : vector<32x32xi1>
    %cst_41 = arith.constant 1.000000e+00 : f32
    %cst_42 = arith.constant 0.000000e+00 : f32
    %90 = vector.broadcast %cst_41 : f32 to vector<32x32xf32>
    %91 = vector.broadcast %cst_42 : f32 to vector<32x32xf32>
    %92 = arith.select %89, %90, %91 : vector<32x32xi1>, vector<32x32xf32>
    %93 = vector.broadcast %9 : vector<1x32xf32> to vector<32x32xf32>
    %94 = arith.mulf %92, %93 : vector<32x32xf32>
    %cst_43 = arith.constant dense<0.000000e+00> : vector<32xf32>
    %95 = vector.multi_reduction <add>, %94, %cst_43 [1] : vector<32x32xf32> to vector<32xf32>
    %96 = vector.shape_cast %95 : vector<32xf32> to vector<32x1xf32>
    %cst_44 = arith.constant 2.600000e+01 : f32
    %97 = vector.broadcast %cst_44 : f32 to vector<32x1xf32>
    %98 = arith.cmpf olt, %96, %97 : vector<32x1xf32>
    %99 = arith.extui %98 : vector<32x1xi1> to vector<32x1xi32>
    %100 = arith.sitofp %99 : vector<32x1xi32> to vector<32x1xf32>
    %101 = arith.mulf %8, %100 : vector<32x1xf32>
    %cst_45 = arith.constant 0.000000e+00 : f32
    %102 = vector.shape_cast %101 : vector<32x1xf32> to vector<32x1xf32>
    %103 = vector.broadcast %102 : vector<32x1xf32> to vector<32x32xf32>
    %104 = vector.broadcast %cst_45 : f32 to vector<32x32xf32>
    %105 = arith.select %6, %103, %104 : vector<32x32xi1>, vector<32x32xf32>
    %cst_46 = arith.constant dense<0.000000e+00> : vector<32xf32>
    %106 = vector.multi_reduction <add>, %105, %cst_46 [0] : vector<32x32xf32> to vector<32xf32>
    %107 = vector.shape_cast %106 : vector<32xf32> to vector<1x32xf32>
    %108 = vector.broadcast %75 : vector<32x1xf32> to vector<32x64xf32>
    %109 = arith.mulf %69, %108 : vector<32x64xf32>
    %110 = vector.broadcast %101 : vector<32x1xf32> to vector<32x64xf32>
    %111 = arith.mulf %109, %110 : vector<32x64xf32>
    %112 = vector.broadcast %101 : vector<32x1xf32> to vector<32x32xf32>
    %113 = arith.mulf %3, %112 : vector<32x32xf32>
    %114 = vector.broadcast %107 : vector<1x32xf32> to vector<32x32xf32>
    %115 = arith.mulf %113, %114 : vector<32x32xf32>
    %cst_47 = arith.constant 5.000000e-01 : f32
    %116 = vector.broadcast %cst_47 : f32 to vector<32x1xf32>
    %117 = arith.cmpf ogt, %101, %116 : vector<32x1xf32>
    %cst_48 = arith.constant 0xFF800000 : f32
    %118 = vector.shape_cast %117 : vector<32x1xi1> to vector<32x1xi1>
    %119 = vector.broadcast %118 : vector<32x1xi1> to vector<32x64xi1>
    %120 = vector.broadcast %cst_48 : f32 to vector<32x64xf32>
    %121 = arith.select %119, %111, %120 : vector<32x64xi1>, vector<32x64xf32>
    %cst_49 = arith.constant dense<0xFF800000> : vector<64xf32>
    %122 = vector.multi_reduction <maximumf>, %121, %cst_49 [0] : vector<32x64xf32> to vector<64xf32>
    %123 = vector.shape_cast %122 : vector<64xf32> to vector<1x64xf32>
    %124 = arith.addf %10, %123 : vector<1x64xf32>
    %cst_50 = arith.constant dense<0.000000e+00> : vector<64xf32>
    %125 = vector.multi_reduction <add>, %111, %cst_50 [0] : vector<32x64xf32> to vector<64xf32>
    %126 = vector.shape_cast %125 : vector<64xf32> to vector<1x64xf32>
    %cst_51 = arith.constant 0.0384615399 : f32
    %127 = vector.broadcast %cst_51 : f32 to vector<1x64xf32>
    %128 = arith.mulf %126, %127 : vector<1x64xf32>
    %129 = arith.addf %11, %128 : vector<1x64xf32>
    %cst_52 = arith.constant dense<0.000000e+00> : vector<32xf32>
    %130 = vector.multi_reduction <add>, %115, %cst_52 [1] : vector<32x32xf32> to vector<32xf32>
    %131 = vector.shape_cast %130 : vector<32xf32> to vector<32x1xf32>
    %cst_53 = arith.constant 1.000000e+00 : f32
    %132 = vector.broadcast %cst_53 : f32 to vector<32x1xf32>
    %133 = arith.maximumf %131, %132 : vector<32x1xf32>
    %cst_54 = arith.constant 1.000000e+00 : f32
    %134 = vector.broadcast %cst_54 : f32 to vector<32x1xf32>
    %135 = arith.divf %134, %133 : vector<32x1xf32>
    %136 = vector.broadcast %135 : vector<32x1xf32> to vector<32x32xf32>
    %137 = arith.mulf %115, %136 : vector<32x32xf32>
    %cst_55 = arith.constant dense<0.000000e+00> : vector<32x64xf32>
    %138 = tpu.matmul %137, %111, %cst_55 {dimension_numbers = #tpu.dot_dimension_numbers<[1], [0], [0], [1], [0, 0, 1, 1], [], []>} : vector<32x32xf32>, vector<32x64xf32>, vector<32x64xf32> -> vector<32x64xf32>
    %c0_56 = arith.constant 0 : index
    %c0_57 = arith.constant 0 : index
    %139 = vector.load %arg7[%c0_56, %c0_57] : memref<64x64xf32, #tpu.memory_space<vmem>>, vector<64x64xf32>
    %cst_58 = arith.constant dense<0.000000e+00> : vector<32x64xf32>
    %140 = tpu.matmul %138, %139, %cst_58 {dimension_numbers = #tpu.dot_dimension_numbers<[1], [0], [0], [1], [0, 0, 1, 1], [], []>} : vector<32x64xf32>, vector<64x64xf32>, vector<32x64xf32> -> vector<32x64xf32>
    %c0_59 = arith.constant 0 : index
    %c0_60 = arith.constant 0 : index
    %141 = vector.load %arg8[%c0_59, %c0_60] : memref<64x64xf32, #tpu.memory_space<vmem>>, vector<64x64xf32>
    %cst_61 = arith.constant dense<0.000000e+00> : vector<32x64xf32>
    %142 = tpu.matmul %111, %141, %cst_61 {dimension_numbers = #tpu.dot_dimension_numbers<[1], [0], [0], [1], [0, 0, 1, 1], [], []>} : vector<32x64xf32>, vector<64x64xf32>, vector<32x64xf32> -> vector<32x64xf32>
    %143 = arith.addf %140, %142 : vector<32x64xf32>
    %c0_62 = arith.constant 0 : index
    %c0_63 = arith.constant 0 : index
    %144 = vector.load %arg9[%c0_62, %c0_63] : memref<1x64xf32, #tpu.memory_space<vmem>>, vector<1x64xf32>
    %145 = vector.broadcast %144 : vector<1x64xf32> to vector<32x64xf32>
    %146 = arith.addf %143, %145 : vector<32x64xf32>
    %cst_64 = arith.constant 5.000000e-01 : f32
    %147 = vector.broadcast %cst_64 : f32 to vector<32x64xf32>
    %148 = arith.mulf %147, %146 : vector<32x64xf32>
    %cst_65 = arith.constant 0.707106769 : f32
    %149 = vector.broadcast %cst_65 : f32 to vector<32x64xf32>
    %150 = arith.mulf %146, %149 : vector<32x64xf32>
    %cst_66 = arith.constant 0.000000e+00 : f32
    %151 = vector.broadcast %cst_66 : f32 to vector<32x64xf32>
    %152 = arith.cmpf oge, %150, %151 : vector<32x64xf32>
    %cst_67 = arith.constant 1.000000e+00 : f32
    %cst_68 = arith.constant -1.000000e+00 : f32
    %153 = vector.broadcast %cst_67 : f32 to vector<32x64xf32>
    %154 = vector.broadcast %cst_68 : f32 to vector<32x64xf32>
    %155 = arith.select %152, %153, %154 : vector<32x64xi1>, vector<32x64xf32>
    %156 = math.absf %150 : vector<32x64xf32>
    %cst_69 = arith.constant 0.327591091 : f32
    %157 = vector.broadcast %cst_69 : f32 to vector<32x64xf32>
    %158 = arith.mulf %157, %156 : vector<32x64xf32>
    %cst_70 = arith.constant 1.000000e+00 : f32
    %159 = vector.broadcast %cst_70 : f32 to vector<32x64xf32>
    %160 = arith.addf %159, %158 : vector<32x64xf32>
    %cst_71 = arith.constant 1.000000e+00 : f32
    %161 = vector.broadcast %cst_71 : f32 to vector<32x64xf32>
    %162 = arith.divf %161, %160 : vector<32x64xf32>
    %cst_72 = arith.constant 1.06140542 : f32
    %163 = vector.broadcast %cst_72 : f32 to vector<32x64xf32>
    %164 = arith.mulf %163, %162 : vector<32x64xf32>
    %cst_73 = arith.constant -1.45315206 : f32
    %165 = vector.broadcast %cst_73 : f32 to vector<32x64xf32>
    %166 = arith.addf %164, %165 : vector<32x64xf32>
    %167 = arith.mulf %166, %162 : vector<32x64xf32>
    %cst_74 = arith.constant 1.42141378 : f32
    %168 = vector.broadcast %cst_74 : f32 to vector<32x64xf32>
    %169 = arith.addf %167, %168 : vector<32x64xf32>
    %170 = arith.mulf %169, %162 : vector<32x64xf32>
    %cst_75 = arith.constant -0.284496725 : f32
    %171 = vector.broadcast %cst_75 : f32 to vector<32x64xf32>
    %172 = arith.addf %170, %171 : vector<32x64xf32>
    %173 = arith.mulf %172, %162 : vector<32x64xf32>
    %cst_76 = arith.constant 0.254829586 : f32
    %174 = vector.broadcast %cst_76 : f32 to vector<32x64xf32>
    %175 = arith.addf %173, %174 : vector<32x64xf32>
    %176 = arith.mulf %175, %162 : vector<32x64xf32>
    %cst_77 = arith.constant 0.000000e+00 : f32
    %177 = vector.broadcast %cst_77 : f32 to vector<32x64xf32>
    %178 = arith.subf %177, %156 : vector<32x64xf32>
    %179 = arith.mulf %178, %156 : vector<32x64xf32>
    %180 = math.exp %179 : vector<32x64xf32>
    %181 = arith.mulf %176, %180 : vector<32x64xf32>
    %cst_78 = arith.constant 1.000000e+00 : f32
    %182 = vector.broadcast %cst_78 : f32 to vector<32x64xf32>
    %183 = arith.subf %182, %181 : vector<32x64xf32>
    %184 = arith.mulf %155, %183 : vector<32x64xf32>
    %cst_79 = arith.constant 1.000000e+00 : f32
    %185 = vector.broadcast %cst_79 : f32 to vector<32x64xf32>
    %186 = arith.addf %185, %184 : vector<32x64xf32>
    %187 = arith.mulf %148, %186 : vector<32x64xf32>
    %c0_80 = arith.constant 0 : index
    %c0_81 = arith.constant 0 : index
    %188 = vector.load %arg10[%c0_80, %c0_81] : memref<1x64xf32, #tpu.memory_space<vmem>>, vector<1x64xf32>
    %189 = vector.broadcast %188 : vector<1x64xf32> to vector<32x64xf32>
    %190 = arith.mulf %187, %189 : vector<32x64xf32>
    %cst_82 = arith.constant dense<0.000000e+00> : vector<32xf32>
    %191 = vector.multi_reduction <add>, %190, %cst_82 [1] : vector<32x64xf32> to vector<32xf32>
    %192 = vector.shape_cast %191 : vector<32xf32> to vector<32x1xf32>
    %193 = math.tanh %192 : vector<32x1xf32>
    %cst_83 = arith.constant 0.000000e+00 : f32
    %194 = vector.shape_cast %193 : vector<32x1xf32> to vector<32x1xf32>
    %195 = vector.broadcast %194 : vector<32x1xf32> to vector<32x32xf32>
    %196 = vector.broadcast %cst_83 : f32 to vector<32x32xf32>
    %197 = arith.select %6, %195, %196 : vector<32x32xi1>, vector<32x32xf32>
    %cst_84 = arith.constant dense<0.000000e+00> : vector<32xf32>
    %198 = vector.multi_reduction <add>, %197, %cst_84 [0] : vector<32x32xf32> to vector<32xf32>
    %199 = vector.shape_cast %198 : vector<32xf32> to vector<1x32xf32>
    %200 = vector.broadcast %199 : vector<1x32xf32> to vector<32x32xf32>
    %201 = vector.broadcast %193 : vector<32x1xf32> to vector<32x32xf32>
    %202 = arith.cmpf ogt, %200, %201 : vector<32x32xf32>
    %203 = vector.broadcast %199 : vector<1x32xf32> to vector<32x32xf32>
    %204 = vector.broadcast %193 : vector<32x1xf32> to vector<32x32xf32>
    %205 = arith.cmpf oeq, %203, %204 : vector<32x32xf32>
    %206 = arith.andi %205, %7 : vector<32x32xi1>
    %207 = arith.ori %202, %206 : vector<32x32xi1>
    %cst_85 = arith.constant 1.000000e+00 : f32
    %cst_86 = arith.constant 0.000000e+00 : f32
    %208 = vector.broadcast %cst_85 : f32 to vector<32x32xf32>
    %209 = vector.broadcast %cst_86 : f32 to vector<32x32xf32>
    %210 = arith.select %207, %208, %209 : vector<32x32xi1>, vector<32x32xf32>
    %211 = vector.broadcast %107 : vector<1x32xf32> to vector<32x32xf32>
    %212 = arith.mulf %210, %211 : vector<32x32xf32>
    %cst_87 = arith.constant dense<0.000000e+00> : vector<32xf32>
    %213 = vector.multi_reduction <add>, %212, %cst_87 [1] : vector<32x32xf32> to vector<32xf32>
    %214 = vector.shape_cast %213 : vector<32xf32> to vector<32x1xf32>
    %cst_88 = arith.constant 2.100000e+01 : f32
    %215 = vector.broadcast %cst_88 : f32 to vector<32x1xf32>
    %216 = arith.cmpf olt, %214, %215 : vector<32x1xf32>
    %217 = arith.extui %216 : vector<32x1xi1> to vector<32x1xi32>
    %218 = arith.sitofp %217 : vector<32x1xi32> to vector<32x1xf32>
    %219 = arith.mulf %101, %218 : vector<32x1xf32>
    %cst_89 = arith.constant 0.000000e+00 : f32
    %220 = vector.shape_cast %219 : vector<32x1xf32> to vector<32x1xf32>
    %221 = vector.broadcast %220 : vector<32x1xf32> to vector<32x32xf32>
    %222 = vector.broadcast %cst_89 : f32 to vector<32x32xf32>
    %223 = arith.select %6, %221, %222 : vector<32x32xi1>, vector<32x32xf32>
    %cst_90 = arith.constant dense<0.000000e+00> : vector<32xf32>
    %224 = vector.multi_reduction <add>, %223, %cst_90 [0] : vector<32x32xf32> to vector<32xf32>
    %225 = vector.shape_cast %224 : vector<32xf32> to vector<1x32xf32>
    %226 = vector.broadcast %193 : vector<32x1xf32> to vector<32x64xf32>
    %227 = arith.mulf %187, %226 : vector<32x64xf32>
    %228 = vector.broadcast %219 : vector<32x1xf32> to vector<32x64xf32>
    %229 = arith.mulf %227, %228 : vector<32x64xf32>
    %230 = vector.broadcast %219 : vector<32x1xf32> to vector<32x32xf32>
    %231 = arith.mulf %115, %230 : vector<32x32xf32>
    %232 = vector.broadcast %225 : vector<1x32xf32> to vector<32x32xf32>
    %233 = arith.mulf %231, %232 : vector<32x32xf32>
    %cst_91 = arith.constant 5.000000e-01 : f32
    %234 = vector.broadcast %cst_91 : f32 to vector<32x1xf32>
    %235 = arith.cmpf ogt, %219, %234 : vector<32x1xf32>
    %cst_92 = arith.constant 0xFF800000 : f32
    %236 = vector.shape_cast %235 : vector<32x1xi1> to vector<32x1xi1>
    %237 = vector.broadcast %236 : vector<32x1xi1> to vector<32x64xi1>
    %238 = vector.broadcast %cst_92 : f32 to vector<32x64xf32>
    %239 = arith.select %237, %229, %238 : vector<32x64xi1>, vector<32x64xf32>
    %cst_93 = arith.constant dense<0xFF800000> : vector<64xf32>
    %240 = vector.multi_reduction <maximumf>, %239, %cst_93 [0] : vector<32x64xf32> to vector<64xf32>
    %241 = vector.shape_cast %240 : vector<64xf32> to vector<1x64xf32>
    %242 = arith.addf %124, %241 : vector<1x64xf32>
    %cst_94 = arith.constant dense<0.000000e+00> : vector<64xf32>
    %243 = vector.multi_reduction <add>, %229, %cst_94 [0] : vector<32x64xf32> to vector<64xf32>
    %244 = vector.shape_cast %243 : vector<64xf32> to vector<1x64xf32>
    %cst_95 = arith.constant 0.0476190485 : f32
    %245 = vector.broadcast %cst_95 : f32 to vector<1x64xf32>
    %246 = arith.mulf %244, %245 : vector<1x64xf32>
    %247 = arith.addf %129, %246 : vector<1x64xf32>
    %cst_96 = arith.constant dense<0.000000e+00> : vector<32xf32>
    %248 = vector.multi_reduction <add>, %233, %cst_96 [1] : vector<32x32xf32> to vector<32xf32>
    %249 = vector.shape_cast %248 : vector<32xf32> to vector<32x1xf32>
    %cst_97 = arith.constant 1.000000e+00 : f32
    %250 = vector.broadcast %cst_97 : f32 to vector<32x1xf32>
    %251 = arith.maximumf %249, %250 : vector<32x1xf32>
    %cst_98 = arith.constant 1.000000e+00 : f32
    %252 = vector.broadcast %cst_98 : f32 to vector<32x1xf32>
    %253 = arith.divf %252, %251 : vector<32x1xf32>
    %254 = vector.broadcast %253 : vector<32x1xf32> to vector<32x32xf32>
    %255 = arith.mulf %233, %254 : vector<32x32xf32>
    %cst_99 = arith.constant dense<0.000000e+00> : vector<32x64xf32>
    %256 = tpu.matmul %255, %229, %cst_99 {dimension_numbers = #tpu.dot_dimension_numbers<[1], [0], [0], [1], [0, 0, 1, 1], [], []>} : vector<32x32xf32>, vector<32x64xf32>, vector<32x64xf32> -> vector<32x64xf32>
    %c0_100 = arith.constant 0 : index
    %c0_101 = arith.constant 0 : index
    %257 = vector.load %arg11[%c0_100, %c0_101] : memref<64x64xf32, #tpu.memory_space<vmem>>, vector<64x64xf32>
    %cst_102 = arith.constant dense<0.000000e+00> : vector<32x64xf32>
    %258 = tpu.matmul %256, %257, %cst_102 {dimension_numbers = #tpu.dot_dimension_numbers<[1], [0], [0], [1], [0, 0, 1, 1], [], []>} : vector<32x64xf32>, vector<64x64xf32>, vector<32x64xf32> -> vector<32x64xf32>
    %c0_103 = arith.constant 0 : index
    %c0_104 = arith.constant 0 : index
    %259 = vector.load %arg12[%c0_103, %c0_104] : memref<64x64xf32, #tpu.memory_space<vmem>>, vector<64x64xf32>
    %cst_105 = arith.constant dense<0.000000e+00> : vector<32x64xf32>
    %260 = tpu.matmul %229, %259, %cst_105 {dimension_numbers = #tpu.dot_dimension_numbers<[1], [0], [0], [1], [0, 0, 1, 1], [], []>} : vector<32x64xf32>, vector<64x64xf32>, vector<32x64xf32> -> vector<32x64xf32>
    %261 = arith.addf %258, %260 : vector<32x64xf32>
    %c0_106 = arith.constant 0 : index
    %c0_107 = arith.constant 0 : index
    %262 = vector.load %arg13[%c0_106, %c0_107] : memref<1x64xf32, #tpu.memory_space<vmem>>, vector<1x64xf32>
    %263 = vector.broadcast %262 : vector<1x64xf32> to vector<32x64xf32>
    %264 = arith.addf %261, %263 : vector<32x64xf32>
    %cst_108 = arith.constant 5.000000e-01 : f32
    %265 = vector.broadcast %cst_108 : f32 to vector<32x64xf32>
    %266 = arith.mulf %265, %264 : vector<32x64xf32>
    %cst_109 = arith.constant 0.707106769 : f32
    %267 = vector.broadcast %cst_109 : f32 to vector<32x64xf32>
    %268 = arith.mulf %264, %267 : vector<32x64xf32>
    %cst_110 = arith.constant 0.000000e+00 : f32
    %269 = vector.broadcast %cst_110 : f32 to vector<32x64xf32>
    %270 = arith.cmpf oge, %268, %269 : vector<32x64xf32>
    %cst_111 = arith.constant 1.000000e+00 : f32
    %cst_112 = arith.constant -1.000000e+00 : f32
    %271 = vector.broadcast %cst_111 : f32 to vector<32x64xf32>
    %272 = vector.broadcast %cst_112 : f32 to vector<32x64xf32>
    %273 = arith.select %270, %271, %272 : vector<32x64xi1>, vector<32x64xf32>
    %274 = math.absf %268 : vector<32x64xf32>
    %cst_113 = arith.constant 0.327591091 : f32
    %275 = vector.broadcast %cst_113 : f32 to vector<32x64xf32>
    %276 = arith.mulf %275, %274 : vector<32x64xf32>
    %cst_114 = arith.constant 1.000000e+00 : f32
    %277 = vector.broadcast %cst_114 : f32 to vector<32x64xf32>
    %278 = arith.addf %277, %276 : vector<32x64xf32>
    %cst_115 = arith.constant 1.000000e+00 : f32
    %279 = vector.broadcast %cst_115 : f32 to vector<32x64xf32>
    %280 = arith.divf %279, %278 : vector<32x64xf32>
    %cst_116 = arith.constant 1.06140542 : f32
    %281 = vector.broadcast %cst_116 : f32 to vector<32x64xf32>
    %282 = arith.mulf %281, %280 : vector<32x64xf32>
    %cst_117 = arith.constant -1.45315206 : f32
    %283 = vector.broadcast %cst_117 : f32 to vector<32x64xf32>
    %284 = arith.addf %282, %283 : vector<32x64xf32>
    %285 = arith.mulf %284, %280 : vector<32x64xf32>
    %cst_118 = arith.constant 1.42141378 : f32
    %286 = vector.broadcast %cst_118 : f32 to vector<32x64xf32>
    %287 = arith.addf %285, %286 : vector<32x64xf32>
    %288 = arith.mulf %287, %280 : vector<32x64xf32>
    %cst_119 = arith.constant -0.284496725 : f32
    %289 = vector.broadcast %cst_119 : f32 to vector<32x64xf32>
    %290 = arith.addf %288, %289 : vector<32x64xf32>
    %291 = arith.mulf %290, %280 : vector<32x64xf32>
    %cst_120 = arith.constant 0.254829586 : f32
    %292 = vector.broadcast %cst_120 : f32 to vector<32x64xf32>
    %293 = arith.addf %291, %292 : vector<32x64xf32>
    %294 = arith.mulf %293, %280 : vector<32x64xf32>
    %cst_121 = arith.constant 0.000000e+00 : f32
    %295 = vector.broadcast %cst_121 : f32 to vector<32x64xf32>
    %296 = arith.subf %295, %274 : vector<32x64xf32>
    %297 = arith.mulf %296, %274 : vector<32x64xf32>
    %298 = math.exp %297 : vector<32x64xf32>
    %299 = arith.mulf %294, %298 : vector<32x64xf32>
    %cst_122 = arith.constant 1.000000e+00 : f32
    %300 = vector.broadcast %cst_122 : f32 to vector<32x64xf32>
    %301 = arith.subf %300, %299 : vector<32x64xf32>
    %302 = arith.mulf %273, %301 : vector<32x64xf32>
    %cst_123 = arith.constant 1.000000e+00 : f32
    %303 = vector.broadcast %cst_123 : f32 to vector<32x64xf32>
    %304 = arith.addf %303, %302 : vector<32x64xf32>
    %305 = arith.mulf %266, %304 : vector<32x64xf32>
    %c0_124 = arith.constant 0 : index
    %c0_125 = arith.constant 0 : index
    %306 = vector.load %arg14[%c0_124, %c0_125] : memref<1x64xf32, #tpu.memory_space<vmem>>, vector<1x64xf32>
    %307 = vector.broadcast %306 : vector<1x64xf32> to vector<32x64xf32>
    %308 = arith.mulf %305, %307 : vector<32x64xf32>
    %cst_126 = arith.constant dense<0.000000e+00> : vector<32xf32>
    %309 = vector.multi_reduction <add>, %308, %cst_126 [1] : vector<32x64xf32> to vector<32xf32>
    %310 = vector.shape_cast %309 : vector<32xf32> to vector<32x1xf32>
    %311 = math.tanh %310 : vector<32x1xf32>
    %cst_127 = arith.constant 0.000000e+00 : f32
    %312 = vector.shape_cast %311 : vector<32x1xf32> to vector<32x1xf32>
    %313 = vector.broadcast %312 : vector<32x1xf32> to vector<32x32xf32>
    %314 = vector.broadcast %cst_127 : f32 to vector<32x32xf32>
    %315 = arith.select %6, %313, %314 : vector<32x32xi1>, vector<32x32xf32>
    %cst_128 = arith.constant dense<0.000000e+00> : vector<32xf32>
    %316 = vector.multi_reduction <add>, %315, %cst_128 [0] : vector<32x32xf32> to vector<32xf32>
    %317 = vector.shape_cast %316 : vector<32xf32> to vector<1x32xf32>
    %318 = vector.broadcast %317 : vector<1x32xf32> to vector<32x32xf32>
    %319 = vector.broadcast %311 : vector<32x1xf32> to vector<32x32xf32>
    %320 = arith.cmpf ogt, %318, %319 : vector<32x32xf32>
    %321 = vector.broadcast %317 : vector<1x32xf32> to vector<32x32xf32>
    %322 = vector.broadcast %311 : vector<32x1xf32> to vector<32x32xf32>
    %323 = arith.cmpf oeq, %321, %322 : vector<32x32xf32>
    %324 = arith.andi %323, %7 : vector<32x32xi1>
    %325 = arith.ori %320, %324 : vector<32x32xi1>
    %cst_129 = arith.constant 1.000000e+00 : f32
    %cst_130 = arith.constant 0.000000e+00 : f32
    %326 = vector.broadcast %cst_129 : f32 to vector<32x32xf32>
    %327 = vector.broadcast %cst_130 : f32 to vector<32x32xf32>
    %328 = arith.select %325, %326, %327 : vector<32x32xi1>, vector<32x32xf32>
    %329 = vector.broadcast %225 : vector<1x32xf32> to vector<32x32xf32>
    %330 = arith.mulf %328, %329 : vector<32x32xf32>
    %cst_131 = arith.constant dense<0.000000e+00> : vector<32xf32>
    %331 = vector.multi_reduction <add>, %330, %cst_131 [1] : vector<32x32xf32> to vector<32xf32>
    %332 = vector.shape_cast %331 : vector<32xf32> to vector<32x1xf32>
    %cst_132 = arith.constant 1.700000e+01 : f32
    %333 = vector.broadcast %cst_132 : f32 to vector<32x1xf32>
    %334 = arith.cmpf olt, %332, %333 : vector<32x1xf32>
    %335 = arith.extui %334 : vector<32x1xi1> to vector<32x1xi32>
    %336 = arith.sitofp %335 : vector<32x1xi32> to vector<32x1xf32>
    %337 = arith.mulf %219, %336 : vector<32x1xf32>
    %338 = vector.broadcast %311 : vector<32x1xf32> to vector<32x64xf32>
    %339 = arith.mulf %305, %338 : vector<32x64xf32>
    %340 = vector.broadcast %337 : vector<32x1xf32> to vector<32x64xf32>
    %341 = arith.mulf %339, %340 : vector<32x64xf32>
    %cst_133 = arith.constant 5.000000e-01 : f32
    %342 = vector.broadcast %cst_133 : f32 to vector<32x1xf32>
    %343 = arith.cmpf ogt, %337, %342 : vector<32x1xf32>
    %cst_134 = arith.constant 0xFF800000 : f32
    %344 = vector.shape_cast %343 : vector<32x1xi1> to vector<32x1xi1>
    %345 = vector.broadcast %344 : vector<32x1xi1> to vector<32x64xi1>
    %346 = vector.broadcast %cst_134 : f32 to vector<32x64xf32>
    %347 = arith.select %345, %341, %346 : vector<32x64xi1>, vector<32x64xf32>
    %cst_135 = arith.constant dense<0xFF800000> : vector<64xf32>
    %348 = vector.multi_reduction <maximumf>, %347, %cst_135 [0] : vector<32x64xf32> to vector<64xf32>
    %349 = vector.shape_cast %348 : vector<64xf32> to vector<1x64xf32>
    %350 = arith.addf %242, %349 : vector<1x64xf32>
    %cst_136 = arith.constant dense<0.000000e+00> : vector<64xf32>
    %351 = vector.multi_reduction <add>, %341, %cst_136 [0] : vector<32x64xf32> to vector<64xf32>
    %352 = vector.shape_cast %351 : vector<64xf32> to vector<1x64xf32>
    %cst_137 = arith.constant 0.0588235296 : f32
    %353 = vector.broadcast %cst_137 : f32 to vector<1x64xf32>
    %354 = arith.mulf %352, %353 : vector<1x64xf32>
    %355 = arith.addf %247, %354 : vector<1x64xf32>
    %c0_138 = arith.constant 0 : index
    %c0_139 = arith.constant 0 : index
    %356 = vector.load %arg15[%c0_138, %c0_139] : memref<64x64xf32, #tpu.memory_space<vmem>>, vector<64x64xf32>
    %cst_140 = arith.constant dense<0.000000e+00> : vector<1x64xf32>
    %357 = tpu.matmul %350, %356, %cst_140 {dimension_numbers = #tpu.dot_dimension_numbers<[1], [0], [0], [1], [0, 0, 1, 1], [], []>} : vector<1x64xf32>, vector<64x64xf32>, vector<1x64xf32> -> vector<1x64xf32>
    %c0_141 = arith.constant 0 : index
    %c0_142 = arith.constant 0 : index
    %358 = vector.load %arg16[%c0_141, %c0_142] : memref<64x64xf32, #tpu.memory_space<vmem>>, vector<64x64xf32>
    %cst_143 = arith.constant dense<0.000000e+00> : vector<1x64xf32>
    %359 = tpu.matmul %355, %358, %cst_143 {dimension_numbers = #tpu.dot_dimension_numbers<[1], [0], [0], [1], [0, 0, 1, 1], [], []>} : vector<1x64xf32>, vector<64x64xf32>, vector<1x64xf32> -> vector<1x64xf32>
    %360 = arith.addf %357, %359 : vector<1x64xf32>
    %c0_144 = arith.constant 0 : index
    %c0_145 = arith.constant 0 : index
    %361 = vector.load %arg17[%c0_144, %c0_145] : memref<1x64xf32, #tpu.memory_space<vmem>>, vector<1x64xf32>
    %362 = arith.addf %360, %361 : vector<1x64xf32>
    %cst_146 = arith.constant 5.000000e-01 : f32
    %363 = vector.broadcast %cst_146 : f32 to vector<1x64xf32>
    %364 = arith.mulf %363, %362 : vector<1x64xf32>
    %cst_147 = arith.constant 0.707106769 : f32
    %365 = vector.broadcast %cst_147 : f32 to vector<1x64xf32>
    %366 = arith.mulf %362, %365 : vector<1x64xf32>
    %cst_148 = arith.constant 0.000000e+00 : f32
    %367 = vector.broadcast %cst_148 : f32 to vector<1x64xf32>
    %368 = arith.cmpf oge, %366, %367 : vector<1x64xf32>
    %cst_149 = arith.constant 1.000000e+00 : f32
    %cst_150 = arith.constant -1.000000e+00 : f32
    %369 = vector.broadcast %cst_149 : f32 to vector<1x64xf32>
    %370 = vector.broadcast %cst_150 : f32 to vector<1x64xf32>
    %371 = arith.select %368, %369, %370 : vector<1x64xi1>, vector<1x64xf32>
    %372 = math.absf %366 : vector<1x64xf32>
    %cst_151 = arith.constant 0.327591091 : f32
    %373 = vector.broadcast %cst_151 : f32 to vector<1x64xf32>
    %374 = arith.mulf %373, %372 : vector<1x64xf32>
    %cst_152 = arith.constant 1.000000e+00 : f32
    %375 = vector.broadcast %cst_152 : f32 to vector<1x64xf32>
    %376 = arith.addf %375, %374 : vector<1x64xf32>
    %cst_153 = arith.constant 1.000000e+00 : f32
    %377 = vector.broadcast %cst_153 : f32 to vector<1x64xf32>
    %378 = arith.divf %377, %376 : vector<1x64xf32>
    %cst_154 = arith.constant 1.06140542 : f32
    %379 = vector.broadcast %cst_154 : f32 to vector<1x64xf32>
    %380 = arith.mulf %379, %378 : vector<1x64xf32>
    %cst_155 = arith.constant -1.45315206 : f32
    %381 = vector.broadcast %cst_155 : f32 to vector<1x64xf32>
    %382 = arith.addf %380, %381 : vector<1x64xf32>
    %383 = arith.mulf %382, %378 : vector<1x64xf32>
    %cst_156 = arith.constant 1.42141378 : f32
    %384 = vector.broadcast %cst_156 : f32 to vector<1x64xf32>
    %385 = arith.addf %383, %384 : vector<1x64xf32>
    %386 = arith.mulf %385, %378 : vector<1x64xf32>
    %cst_157 = arith.constant -0.284496725 : f32
    %387 = vector.broadcast %cst_157 : f32 to vector<1x64xf32>
    %388 = arith.addf %386, %387 : vector<1x64xf32>
    %389 = arith.mulf %388, %378 : vector<1x64xf32>
    %cst_158 = arith.constant 0.254829586 : f32
    %390 = vector.broadcast %cst_158 : f32 to vector<1x64xf32>
    %391 = arith.addf %389, %390 : vector<1x64xf32>
    %392 = arith.mulf %391, %378 : vector<1x64xf32>
    %cst_159 = arith.constant 0.000000e+00 : f32
    %393 = vector.broadcast %cst_159 : f32 to vector<1x64xf32>
    %394 = arith.subf %393, %372 : vector<1x64xf32>
    %395 = arith.mulf %394, %372 : vector<1x64xf32>
    %396 = math.exp %395 : vector<1x64xf32>
    %397 = arith.mulf %392, %396 : vector<1x64xf32>
    %cst_160 = arith.constant 1.000000e+00 : f32
    %398 = vector.broadcast %cst_160 : f32 to vector<1x64xf32>
    %399 = arith.subf %398, %397 : vector<1x64xf32>
    %400 = arith.mulf %371, %399 : vector<1x64xf32>
    %cst_161 = arith.constant 1.000000e+00 : f32
    %401 = vector.broadcast %cst_161 : f32 to vector<1x64xf32>
    %402 = arith.addf %401, %400 : vector<1x64xf32>
    %403 = arith.mulf %364, %402 : vector<1x64xf32>
    %c0_162 = arith.constant 0 : index
    %c0_163 = arith.constant 0 : index
    %404 = vector.load %arg18[%c0_162, %c0_163] : memref<64x64xf32, #tpu.memory_space<vmem>>, vector<64x64xf32>
    %cst_164 = arith.constant dense<0.000000e+00> : vector<1x64xf32>
    %405 = tpu.matmul %403, %404, %cst_164 {dimension_numbers = #tpu.dot_dimension_numbers<[1], [0], [0], [1], [0, 0, 1, 1], [], []>} : vector<1x64xf32>, vector<64x64xf32>, vector<1x64xf32> -> vector<1x64xf32>
    %c0_165 = arith.constant 0 : index
    %c0_166 = arith.constant 0 : index
    %406 = vector.load %arg19[%c0_165, %c0_166] : memref<1x64xf32, #tpu.memory_space<vmem>>, vector<1x64xf32>
    %407 = arith.addf %405, %406 : vector<1x64xf32>
    %cst_167 = arith.constant 5.000000e-01 : f32
    %408 = vector.broadcast %cst_167 : f32 to vector<1x64xf32>
    %409 = arith.mulf %408, %407 : vector<1x64xf32>
    %cst_168 = arith.constant 0.707106769 : f32
    %410 = vector.broadcast %cst_168 : f32 to vector<1x64xf32>
    %411 = arith.mulf %407, %410 : vector<1x64xf32>
    %cst_169 = arith.constant 0.000000e+00 : f32
    %412 = vector.broadcast %cst_169 : f32 to vector<1x64xf32>
    %413 = arith.cmpf oge, %411, %412 : vector<1x64xf32>
    %cst_170 = arith.constant 1.000000e+00 : f32
    %cst_171 = arith.constant -1.000000e+00 : f32
    %414 = vector.broadcast %cst_170 : f32 to vector<1x64xf32>
    %415 = vector.broadcast %cst_171 : f32 to vector<1x64xf32>
    %416 = arith.select %413, %414, %415 : vector<1x64xi1>, vector<1x64xf32>
    %417 = math.absf %411 : vector<1x64xf32>
    %cst_172 = arith.constant 0.327591091 : f32
    %418 = vector.broadcast %cst_172 : f32 to vector<1x64xf32>
    %419 = arith.mulf %418, %417 : vector<1x64xf32>
    %cst_173 = arith.constant 1.000000e+00 : f32
    %420 = vector.broadcast %cst_173 : f32 to vector<1x64xf32>
    %421 = arith.addf %420, %419 : vector<1x64xf32>
    %cst_174 = arith.constant 1.000000e+00 : f32
    %422 = vector.broadcast %cst_174 : f32 to vector<1x64xf32>
    %423 = arith.divf %422, %421 : vector<1x64xf32>
    %cst_175 = arith.constant 1.06140542 : f32
    %424 = vector.broadcast %cst_175 : f32 to vector<1x64xf32>
    %425 = arith.mulf %424, %423 : vector<1x64xf32>
    %cst_176 = arith.constant -1.45315206 : f32
    %426 = vector.broadcast %cst_176 : f32 to vector<1x64xf32>
    %427 = arith.addf %425, %426 : vector<1x64xf32>
    %428 = arith.mulf %427, %423 : vector<1x64xf32>
    %cst_177 = arith.constant 1.42141378 : f32
    %429 = vector.broadcast %cst_177 : f32 to vector<1x64xf32>
    %430 = arith.addf %428, %429 : vector<1x64xf32>
    %431 = arith.mulf %430, %423 : vector<1x64xf32>
    %cst_178 = arith.constant -0.284496725 : f32
    %432 = vector.broadcast %cst_178 : f32 to vector<1x64xf32>
    %433 = arith.addf %431, %432 : vector<1x64xf32>
    %434 = arith.mulf %433, %423 : vector<1x64xf32>
    %cst_179 = arith.constant 0.254829586 : f32
    %435 = vector.broadcast %cst_179 : f32 to vector<1x64xf32>
    %436 = arith.addf %434, %435 : vector<1x64xf32>
    %437 = arith.mulf %436, %423 : vector<1x64xf32>
    %cst_180 = arith.constant 0.000000e+00 : f32
    %438 = vector.broadcast %cst_180 : f32 to vector<1x64xf32>
    %439 = arith.subf %438, %417 : vector<1x64xf32>
    %440 = arith.mulf %439, %417 : vector<1x64xf32>
    %441 = math.exp %440 : vector<1x64xf32>
    %442 = arith.mulf %437, %441 : vector<1x64xf32>
    %cst_181 = arith.constant 1.000000e+00 : f32
    %443 = vector.broadcast %cst_181 : f32 to vector<1x64xf32>
    %444 = arith.subf %443, %442 : vector<1x64xf32>
    %445 = arith.mulf %416, %444 : vector<1x64xf32>
    %cst_182 = arith.constant 1.000000e+00 : f32
    %446 = vector.broadcast %cst_182 : f32 to vector<1x64xf32>
    %447 = arith.addf %446, %445 : vector<1x64xf32>
    %448 = arith.mulf %409, %447 : vector<1x64xf32>
    %c0_183 = arith.constant 0 : index
    %c0_184 = arith.constant 0 : index
    %449 = vector.load %arg20[%c0_183, %c0_184] : memref<64x4xf32, #tpu.memory_space<vmem>>, vector<64x4xf32>
    %cst_185 = arith.constant dense<0.000000e+00> : vector<1x4xf32>
    %450 = tpu.matmul %448, %449, %cst_185 {dimension_numbers = #tpu.dot_dimension_numbers<[1], [0], [0], [1], [0, 0, 1, 1], [], []>} : vector<1x64xf32>, vector<64x4xf32>, vector<1x4xf32> -> vector<1x4xf32>
    %c0_186 = arith.constant 0 : index
    %c0_187 = arith.constant 0 : index
    %451 = vector.load %arg21[%c0_186, %c0_187] : memref<1x4xf32, #tpu.memory_space<vmem>>, vector<1x4xf32>
    %452 = arith.addf %450, %451 : vector<1x4xf32>
    %c0_188 = arith.constant 0 : index
    %c0_189 = arith.constant 0 : index
    %c0_190 = arith.constant 0 : index
    %453 = vector.load %arg22[%c0_188, %c0_189, %c0_190] : memref<1x1x4xf32, #tpu.memory_space<vmem>>, vector<1x1x4xf32>
    %454 = vector.shape_cast %453 : vector<1x1x4xf32> to vector<1x4xf32>
    %455 = vector.shape_cast %452 : vector<1x4xf32> to vector<1x1x4xf32>
    tpu.vector_store %arg22[%c0_188, %c0_189, %c0_190], %455 {strides = array<i32>} : memref<1x1x4xf32, #tpu.memory_space<vmem>>, vector<1x1x4xf32>,
    return
  }
  func.func @transform_0(%arg0: i32) -> (i32, i32, i32) {
    %c0_i32 = arith.constant 0 : i32
    %c0_i32_0 = arith.constant 0 : i32
    %c0_i32_1 = arith.constant 0 : i32
    return %arg0, %c0_i32, %c0_i32_0 : i32, i32, i32
  }
  func.func @transform_1(%arg0: i32) -> (i32, i32, i32) {
    %c0_i32 = arith.constant 0 : i32
    %c0_i32_0 = arith.constant 0 : i32
    %c0_i32_1 = arith.constant 0 : i32
    return %arg0, %c0_i32, %c0_i32_0 : i32, i32, i32
  }
  func.func @transform_2(%arg0: i32) -> (i32, i32) {
    %c0_i32 = arith.constant 0 : i32
    %c0_i32_0 = arith.constant 0 : i32
    %c0_i32_1 = arith.constant 0 : i32
    return %c0_i32, %c0_i32_0 : i32, i32
  }
  func.func @transform_3(%arg0: i32) -> (i32, i32) {
    %c0_i32 = arith.constant 0 : i32
    %c0_i32_0 = arith.constant 0 : i32
    %c0_i32_1 = arith.constant 0 : i32
    return %c0_i32, %c0_i32_0 : i32, i32
  }
  func.func @transform_4(%arg0: i32) -> (i32, i32) {
    %c0_i32 = arith.constant 0 : i32
    %c0_i32_0 = arith.constant 0 : i32
    %c0_i32_1 = arith.constant 0 : i32
    return %c0_i32, %c0_i32_0 : i32, i32
  }
  func.func @transform_5(%arg0: i32) -> (i32, i32) {
    %c0_i32 = arith.constant 0 : i32
    %c0_i32_0 = arith.constant 0 : i32
    %c0_i32_1 = arith.constant 0 : i32
    return %c0_i32, %c0_i32_0 : i32, i32
  }
  func.func @transform_6(%arg0: i32) -> (i32, i32) {
    %c0_i32 = arith.constant 0 : i32
    %c0_i32_0 = arith.constant 0 : i32
    %c0_i32_1 = arith.constant 0 : i32
    return %c0_i32, %c0_i32_0 : i32, i32
  }
  func.func @transform_7(%arg0: i32) -> (i32, i32) {
    %c0_i32 = arith.constant 0 : i32
    %c0_i32_0 = arith.constant 0 : i32
    %c0_i32_1 = arith.constant 0 : i32
    return %c0_i32, %c0_i32_0 : i32, i32
  }
  func.func @transform_8(%arg0: i32) -> (i32, i32) {
    %c0_i32 = arith.constant 0 : i32
    %c0_i32_0 = arith.constant 0 : i32
    %c0_i32_1 = arith.constant 0 : i32
    return %c0_i32, %c0_i32_0 : i32, i32
  }
  func.func @transform_9(%arg0: i32) -> (i32, i32) {
    %c0_i32 = arith.constant 0 : i32
    %c0_i32_0 = arith.constant 0 : i32
    %c0_i32_1 = arith.constant 0 : i32
    return %c0_i32, %c0_i32_0 : i32, i32
  }
  func.func @transform_10(%arg0: i32) -> (i32, i32) {
    %c0_i32 = arith.constant 0 : i32
    %c0_i32_0 = arith.constant 0 : i32
    %c0_i32_1 = arith.constant 0 : i32
    return %c0_i32, %c0_i32_0 : i32, i32
  }
  func.func @transform_11(%arg0: i32) -> (i32, i32) {
    %c0_i32 = arith.constant 0 : i32
    %c0_i32_0 = arith.constant 0 : i32
    %c0_i32_1 = arith.constant 0 : i32
    return %c0_i32, %c0_i32_0 : i32, i32
  }
  func.func @transform_12(%arg0: i32) -> (i32, i32) {
    %c0_i32 = arith.constant 0 : i32
    %c0_i32_0 = arith.constant 0 : i32
    %c0_i32_1 = arith.constant 0 : i32
    return %c0_i32, %c0_i32_0 : i32, i32
  }
  func.func @transform_13(%arg0: i32) -> (i32, i32) {
    %c0_i32 = arith.constant 0 : i32
    %c0_i32_0 = arith.constant 0 : i32
    %c0_i32_1 = arith.constant 0 : i32
    return %c0_i32, %c0_i32_0 : i32, i32
  }
  func.func @transform_14(%arg0: i32) -> (i32, i32) {
    %c0_i32 = arith.constant 0 : i32
    %c0_i32_0 = arith.constant 0 : i32
    %c0_i32_1 = arith.constant 0 : i32
    return %c0_i32, %c0_i32_0 : i32, i32
  }
  func.func @transform_15(%arg0: i32) -> (i32, i32) {
    %c0_i32 = arith.constant 0 : i32
    %c0_i32_0 = arith.constant 0 : i32
    %c0_i32_1 = arith.constant 0 : i32
    return %c0_i32, %c0_i32_0 : i32, i32
  }
  func.func @transform_16(%arg0: i32) -> (i32, i32) {
    %c0_i32 = arith.constant 0 : i32
    %c0_i32_0 = arith.constant 0 : i32
    %c0_i32_1 = arith.constant 0 : i32
    return %c0_i32, %c0_i32_0 : i32, i32
  }
  func.func @transform_17(%arg0: i32) -> (i32, i32) {
    %c0_i32 = arith.constant 0 : i32
    %c0_i32_0 = arith.constant 0 : i32
    %c0_i32_1 = arith.constant 0 : i32
    return %c0_i32, %c0_i32_0 : i32, i32
  }
  func.func @transform_18(%arg0: i32) -> (i32, i32) {
    %c0_i32 = arith.constant 0 : i32
    %c0_i32_0 = arith.constant 0 : i32
    %c0_i32_1 = arith.constant 0 : i32
    return %c0_i32, %c0_i32_0 : i32, i32
  }
  func.func @transform_19(%arg0: i32) -> (i32, i32) {
    %c0_i32 = arith.constant 0 : i32
    %c0_i32_0 = arith.constant 0 : i32
    %c0_i32_1 = arith.constant 0 : i32
    return %c0_i32, %c0_i32_0 : i32, i32
  }
  func.func @transform_20(%arg0: i32) -> (i32, i32) {
    %c0_i32 = arith.constant 0 : i32
    %c0_i32_0 = arith.constant 0 : i32
    %c0_i32_1 = arith.constant 0 : i32
    return %c0_i32, %c0_i32_0 : i32, i32
  }
  func.func @transform_21(%arg0: i32) -> (i32, i32, i32) {
    %c0_i32 = arith.constant 0 : i32
    %c0_i32_0 = arith.constant 0 : i32
    %c0_i32_1 = arith.constant 0 : i32
    return %arg0, %c0_i32, %c0_i32_0 : i32, i32, i32
  }
}

</mosaic_0001>

<llo_original>
// kernel: recognizer_forward.1
$region0: #{recognizer_forward.1}
  #allocation0 [shape = 'u32[]', space=smem, size = 0x4, offset = 0x4, fixed_abs, tag = 'smem constant byte address 0x4 - core index']
  #allocation1 [shape = 'u32[144,128]{1,0:T(1,128)}', space=vmem, size = 0x12000, scoped, tag = 'internal scratch']
  %s0 = inlined_call_operand.vmem [shape: f32[2,32,8], index: 0, kind: input, shape index: {}]
  %s1 = inlined_call_operand.vmem [shape: f32[2,32,32], index: 1, kind: input, shape index: {}]
  %s2 = inlined_call_operand.vmem [shape: f32[8,64], index: 2, kind: input, shape index: {}]
  %s3 = inlined_call_operand.vmem [shape: f32[8,64], index: 3, kind: input, shape index: {}]
  %s4 = inlined_call_operand.vmem [shape: f32[1,64], index: 4, kind: input, shape index: {}]
  %s5 = inlined_call_operand.vmem [shape: f32[1,64], index: 5, kind: input, shape index: {}]
  %s6 = inlined_call_operand.vmem [shape: f32[64,64], index: 6, kind: input, shape index: {}]
  %s7 = inlined_call_operand.vmem [shape: f32[64,64], index: 7, kind: input, shape index: {}]
  %s8 = inlined_call_operand.vmem [shape: f32[1,64], index: 8, kind: input, shape index: {}]
  %s9 = inlined_call_operand.vmem [shape: f32[1,64], index: 9, kind: input, shape index: {}]
  %s10 = inlined_call_operand.vmem [shape: f32[64,64], index: 10, kind: input, shape index: {}]
  %s11 = inlined_call_operand.vmem [shape: f32[64,64], index: 11, kind: input, shape index: {}]
  %s12 = inlined_call_operand.vmem [shape: f32[1,64], index: 12, kind: input, shape index: {}]
  %s13 = inlined_call_operand.vmem [shape: f32[1,64], index: 13, kind: input, shape index: {}]
  %s14 = inlined_call_operand.vmem [shape: f32[64,64], index: 14, kind: input, shape index: {}]
  %s15 = inlined_call_operand.vmem [shape: f32[64,64], index: 15, kind: input, shape index: {}]
  %s16 = inlined_call_operand.vmem [shape: f32[1,64], index: 16, kind: input, shape index: {}]
  %s17 = inlined_call_operand.vmem [shape: f32[64,64], index: 17, kind: input, shape index: {}]
  %s18 = inlined_call_operand.vmem [shape: f32[1,64], index: 18, kind: input, shape index: {}]
  %s19 = inlined_call_operand.vmem [shape: f32[64,4], index: 19, kind: input, shape index: {}]
  %s20 = inlined_call_operand.vmem [shape: f32[1,4], index: 20, kind: input, shape index: {}]
  %s21 = inlined_call_operand.hbm [shape: f32[2,1,4], index: 21, kind: output, shape index: {}]
  %s22 = sld [smem:[#allocation0]]
  $region117: #{recognizer_forward.1} parent=0
    _
  %s24 = ssub.s32 1, %s22
  %s25 = scalar_select 0, %s24, %s22
  $region1: #{recognizer_forward.1} parent=0
    #allocation2 [shape = 'u8[1024]{0}', space=vmem, size = 0x400, scoped, tag = 'output window, operand 0']
    #allocation3 [shape = 's32[2]{0}', space=sflag, size = 0x8, scoped, tag = 'scoped memory for recognizer_forward.1']
    %26 = vsyncpa [#allocation3], 0
    %s27 = scalar_lea.sflag [#allocation3], 1
    %28 = vsyncpa %s27, 0
    loop: start=0, step=1, limit=4
    $region2: #{recognizer_forward.1} parent=1 // loop_pre_header
      _
    $region3: #{recognizer_forward.1} parent=1 // loop_header
      %s30 = sphi 0, %s34
      %p31 = scmp.ge.s32.totalorder %s30, 4
      %s40 = sphi 0, %s42
      %s43 = sphi 0, %s40
      %s44 = sphi 0, %s43
      %s60 = sphi 0, %s44
      %s66 = sphi 0, %s68
      %s69 = sphi 0, %s66
      %s70 = sphi 0, %s69
      %s86 = sphi 0, %s70
      %s90 = sphi 0, %s90
      %s92 = sphi 0, %s90
      %s93 = sphi 0, %s92
      %s107 = sphi 0, %s93
      %s111 = sphi 0, %s111
      %s113 = sphi 0, %s111
      %s114 = sphi 0, %s113
      %s128 = sphi 0, %s114
      %s132 = sphi 0, %s132
      %s134 = sphi 0, %s132
      %s135 = sphi 0, %s134
      %s149 = sphi 0, %s135
      %s153 = sphi 0, %s153
      %s155 = sphi 0, %s153
      %s156 = sphi 0, %s155
      %s170 = sphi 0, %s156
      %s174 = sphi 0, %s174
      %s176 = sphi 0, %s174
      %s177 = sphi 0, %s176
      %s191 = sphi 0, %s177
      %s195 = sphi 0, %s195
      %s197 = sphi 0, %s195
      %s198 = sphi 0, %s197
      %s212 = sphi 0, %s198
      %s216 = sphi 0, %s216
      %s218 = sphi 0, %s216
      %s219 = sphi 0, %s218
      %s233 = sphi 0, %s219
      %s237 = sphi 0, %s237
      %s239 = sphi 0, %s237
      %s240 = sphi 0, %s239
      %s254 = sphi 0, %s240
      %s258 = sphi 0, %s258
      %s260 = sphi 0, %s258
      %s261 = sphi 0, %s260
      %s275 = sphi 0, %s261
      %s279 = sphi 0, %s279
      %s281 = sphi 0, %s279
      %s282 = sphi 0, %s281
      %s296 = sphi 0, %s282
      %s300 = sphi 0, %s300
      %s302 = sphi 0, %s300
      %s303 = sphi 0, %s302
      %s317 = sphi 0, %s303
      %s321 = sphi 0, %s321
      %s323 = sphi 0, %s321
      %s324 = sphi 0, %s323
      %s338 = sphi 0, %s324
      %s342 = sphi 0, %s342
      %s344 = sphi 0, %s342
      %s345 = sphi 0, %s344
      %s359 = sphi 0, %s345
      %s363 = sphi 0, %s363
      %s365 = sphi 0, %s363
      %s366 = sphi 0, %s365
      %s380 = sphi 0, %s366
      %s384 = sphi 0, %s384
      %s386 = sphi 0, %s384
      %s387 = sphi 0, %s386
      %s401 = sphi 0, %s387
      %s405 = sphi 0, %s405
      %s407 = sphi 0, %s405
      %s408 = sphi 0, %s407
      %s422 = sphi 0, %s408
      %s426 = sphi 0, %s426
      %s428 = sphi 0, %s426
      %s429 = sphi 0, %s428
      %s443 = sphi 0, %s429
      %s447 = sphi 0, %s447
      %s449 = sphi 0, %s447
      %s450 = sphi 0, %s449
      %s464 = sphi 0, %s450
      %s468 = sphi 0, %s468
      %s470 = sphi 0, %s468
      %s471 = sphi 0, %s470
      %s485 = sphi 0, %s471
      %s491 = sphi 0, %s493
      %s494 = sphi 0, %s491
      %s495 = sphi 0, %s494
      %s511 = sphi 0, %s495
    $region4: #{recognizer_forward.1} parent=1 // loop_header_branch
      %33 = sbr.rel (%p31) target = $region8
    $region5: #{recognizer_forward.1} parent=1 // loop_body
      %s35 = ssub.s32 %s30, 1
      %s36 = ssub.s32 %s30, 2
      %s37 = sadd.s32 %s30, 1
      %s38 = ssub.s32 %s30, %s37
      %p39 = scmp.eq.s32.totalorder %s38, 0
      %s41 = sadd.s32 %s40, 1
      %s42 = scalar_select %p39, %s40, %s41
      %p45 = pneg %p39
      %p46 = scmp.eq.s32.totalorder %s30, 1
      %p47 = por %p45, %p46
      %p48 = scmp.ne.s32.totalorder %s40, %s43
      %p49 = scmp.eq.s32.totalorder %s30, 0
      %p50 = por %p48, %p49
      %p51 = scmp.ne.s32.totalorder %s40, %s43
      %p52 = scmp.eq.s32.totalorder %s35, 1
      %p53 = por %p51, %p52
      %p54 = scmp.ne.s32.totalorder %s43, %s44
      %p55 = scmp.eq.s32.totalorder %s35, 0
      %p56 = por %p54, %p55
      %p57 = scmp.ne.s32.totalorder %s43, %s44
      %p58 = scmp.eq.s32.totalorder %s36, 1
      %p59 = por %p57, %p58
      %p61 = scmp.ne.s32.totalorder %s44, %s60
      %p62 = scmp.eq.s32.totalorder %s36, 0
      %p63 = por %p61, %p62
      %s64 = ssub.s32 %s30, %s37
      %p65 = scmp.eq.s32.totalorder %s64, 0
      %s67 = sadd.s32 %s66, 1
      %s68 = scalar_select %p65, %s66, %s67
      %p71 = pneg %p65
      %p72 = scmp.eq.s32.totalorder %s30, 1
      %p73 = por %p71, %p72
      %p74 = scmp.ne.s32.totalorder %s66, %s69
      %p75 = scmp.eq.s32.totalorder %s30, 0
      %p76 = por %p74, %p75
      %p77 = scmp.ne.s32.totalorder %s66, %s69
      %p78 = scmp.eq.s32.totalorder %s35, 1
      %p79 = por %p77, %p78
      %p80 = scmp.ne.s32.totalorder %s69, %s70
      %p81 = scmp.eq.s32.totalorder %s35, 0
      %p82 = por %p80, %p81
      %p83 = scmp.ne.s32.totalorder %s69, %s70
      %p84 = scmp.eq.s32.totalorder %s36, 1
      %p85 = por %p83, %p84
      %p87 = scmp.ne.s32.totalorder %s70, %s86
      %p88 = scmp.eq.s32.totalorder %s36, 0
      %p89 = por %p87, %p88
      %s91 = sadd.s32 %s90, 1
      %p94 = scmp.eq.s32.totalorder %s30, 1
      %p95 = scmp.ne.s32.totalorder %s90, %s92
      %p96 = scmp.eq.s32.totalorder %s30, 0
      %p97 = por %p95, %p96
      %p98 = scmp.ne.s32.totalorder %s90, %s92
      %p99 = scmp.eq.s32.totalorder %s35, 1
      %p100 = por %p98, %p99
      %p101 = scmp.ne.s32.totalorder %s92, %s93
      %p102 = scmp.eq.s32.totalorder %s35, 0
      %p103 = por %p101, %p102
      %p104 = scmp.ne.s32.totalorder %s92, %s93
      %p105 = scmp.eq.s32.totalorder %s36, 1
      %p106 = por %p104, %p105
      %p108 = scmp.ne.s32.totalorder %s93, %s107
      %p109 = scmp.eq.s32.totalorder %s36, 0
      %p110 = por %p108, %p109
      %s112 = sadd.s32 %s111, 1
      %p115 = scmp.eq.s32.totalorder %s30, 1
      %p116 = scmp.ne.s32.totalorder %s111, %s113
      %p117 = scmp.eq.s32.totalorder %s30, 0
      %p118 = por %p116, %p117
      %p119 = scmp.ne.s32.totalorder %s111, %s113
      %p120 = scmp.eq.s32.totalorder %s35, 1
      %p121 = por %p119, %p120
      %p122 = scmp.ne.s32.totalorder %s113, %s114
      %p123 = scmp.eq.s32.totalorder %s35, 0
      %p124 = por %p122, %p123
      %p125 = scmp.ne.s32.totalorder %s113, %s114
      %p126 = scmp.eq.s32.totalorder %s36, 1
      %p127 = por %p125, %p126
      %p129 = scmp.ne.s32.totalorder %s114, %s128
      %p130 = scmp.eq.s32.totalorder %s36, 0
      %p131 = por %p129, %p130
      %s133 = sadd.s32 %s132, 1
      %p136 = scmp.eq.s32.totalorder %s30, 1
      %p137 = scmp.ne.s32.totalorder %s132, %s134
      %p138 = scmp.eq.s32.totalorder %s30, 0
      %p139 = por %p137, %p138
      %p140 = scmp.ne.s32.totalorder %s132, %s134
      %p141 = scmp.eq.s32.totalorder %s35, 1
      %p142 = por %p140, %p141
      %p143 = scmp.ne.s32.totalorder %s134, %s135
      %p144 = scmp.eq.s32.totalorder %s35, 0
      %p145 = por %p143, %p144
      %p146 = scmp.ne.s32.totalorder %s134, %s135
      %p147 = scmp.eq.s32.totalorder %s36, 1
      %p148 = por %p146, %p147
      %p150 = scmp.ne.s32.totalorder %s135, %s149
      %p151 = scmp.eq.s32.totalorder %s36, 0
      %p152 = por %p150, %p151
      %s154 = sadd.s32 %s153, 1
      %p157 = scmp.eq.s32.totalorder %s30, 1
      %p158 = scmp.ne.s32.totalorder %s153, %s155
      %p159 = scmp.eq.s32.totalorder %s30, 0
      %p160 = por %p158, %p159
      %p161 = scmp.ne.s32.totalorder %s153, %s155
      %p162 = scmp.eq.s32.totalorder %s35, 1
      %p163 = por %p161, %p162
      %p164 = scmp.ne.s32.totalorder %s155, %s156
      %p165 = scmp.eq.s32.totalorder %s35, 0
      %p166 = por %p164, %p165
      %p167 = scmp.ne.s32.totalorder %s155, %s156
      %p168 = scmp.eq.s32.totalorder %s36, 1
      %p169 = por %p167, %p168
      %p171 = scmp.ne.s32.totalorder %s156, %s170
      %p172 = scmp.eq.s32.totalorder %s36, 0
      %p173 = por %p171, %p172
      %s175 = sadd.s32 %s174, 1
      %p178 = scmp.eq.s32.totalorder %s30, 1
      %p179 = scmp.ne.s32.totalorder %s174, %s176
      %p180 = scmp.eq.s32.totalorder %s30, 0
      %p181 = por %p179, %p180
      %p182 = scmp.ne.s32.totalorder %s174, %s176
      %p183 = scmp.eq.s32.totalorder %s35, 1
      %p184 = por %p182, %p183
      %p185 = scmp.ne.s32.totalorder %s176, %s177
      %p186 = scmp.eq.s32.totalorder %s35, 0
      %p187 = por %p185, %p186
      %p188 = scmp.ne.s32.totalorder %s176, %s177
      %p189 = scmp.eq.s32.totalorder %s36, 1
      %p190 = por %p188, %p189
      %p192 = scmp.ne.s32.totalorder %s177, %s191
      %p193 = scmp.eq.s32.totalorder %s36, 0
      %p194 = por %p192, %p193
      %s196 = sadd.s32 %s195, 1
      %p199 = scmp.eq.s32.totalorder %s30, 1
      %p200 = scmp.ne.s32.totalorder %s195, %s197
      %p201 = scmp.eq.s32.totalorder %s30, 0
      %p202 = por %p200, %p201
      %p203 = scmp.ne.s32.totalorder %s195, %s197
      %p204 = scmp.eq.s32.totalorder %s35, 1
      %p205 = por %p203, %p204
      %p206 = scmp.ne.s32.totalorder %s197, %s198
      %p207 = scmp.eq.s32.totalorder %s35, 0
      %p208 = por %p206, %p207
      %p209 = scmp.ne.s32.totalorder %s197, %s198
      %p210 = scmp.eq.s32.totalorder %s36, 1
      %p211 = por %p209, %p210
      %p213 = scmp.ne.s32.totalorder %s198, %s212
      %p214 = scmp.eq.s32.totalorder %s36, 0
      %p215 = por %p213, %p214
      %s217 = sadd.s32 %s216, 1
      %p220 = scmp.eq.s32.totalorder %s30, 1
      %p221 = scmp.ne.s32.totalorder %s216, %s218
      %p222 = scmp.eq.s32.totalorder %s30, 0
      %p223 = por %p221, %p222
      %p224 = scmp.ne.s32.totalorder %s216, %s218
      %p225 = scmp.eq.s32.totalorder %s35, 1
      %p226 = por %p224, %p225
      %p227 = scmp.ne.s32.totalorder %s218, %s219
      %p228 = scmp.eq.s32.totalorder %s35, 0
      %p229 = por %p227, %p228
      %p230 = scmp.ne.s32.totalorder %s218, %s219
      %p231 = scmp.eq.s32.totalorder %s36, 1
      %p232 = por %p230, %p231
      %p234 = scmp.ne.s32.totalorder %s219, %s233
      %p235 = scmp.eq.s32.totalorder %s36, 0
      %p236 = por %p234, %p235
      %s238 = sadd.s32 %s237, 1
      %p241 = scmp.eq.s32.totalorder %s30, 1
      %p242 = scmp.ne.s32.totalorder %s237, %s239
      %p243 = scmp.eq.s32.totalorder %s30, 0
      %p244 = por %p242, %p243
      %p245 = scmp.ne.s32.totalorder %s237, %s239
      %p246 = scmp.eq.s32.totalorder %s35, 1
      %p247 = por %p245, %p246
      %p248 = scmp.ne.s32.totalorder %s239, %s240
      %p249 = scmp.eq.s32.totalorder %s35, 0
      %p250 = por %p248, %p249
      %p251 = scmp.ne.s32.totalorder %s239, %s240
      %p252 = scmp.eq.s32.totalorder %s36, 1
      %p253 = por %p251, %p252
      %p255 = scmp.ne.s32.totalorder %s240, %s254
      %p256 = scmp.eq.s32.totalorder %s36, 0
      %p257 = por %p255, %p256
      %s259 = sadd.s32 %s258, 1
      %p262 = scmp.eq.s32.totalorder %s30, 1
      %p263 = scmp.ne.s32.totalorder %s258, %s260
      %p264 = scmp.eq.s32.totalorder %s30, 0
      %p265 = por %p263, %p264
      %p266 = scmp.ne.s32.totalorder %s258, %s260
      %p267 = scmp.eq.s32.totalorder %s35, 1
      %p268 = por %p266, %p267
      %p269 = scmp.ne.s32.totalorder %s260, %s261
      %p270 = scmp.eq.s32.totalorder %s35, 0
      %p271 = por %p269, %p270
      %p272 = scmp.ne.s32.totalorder %s260, %s261
      %p273 = scmp.eq.s32.totalorder %s36, 1
      %p274 = por %p272, %p273
      %p276 = scmp.ne.s32.totalorder %s261, %s275
      %p277 = scmp.eq.s32.totalorder %s36, 0
      %p278 = por %p276, %p277
      %s280 = sadd.s32 %s279, 1
      %p283 = scmp.eq.s32.totalorder %s30, 1
      %p284 = scmp.ne.s32.totalorder %s279, %s281
      %p285 = scmp.eq.s32.totalorder %s30, 0
      %p286 = por %p284, %p285
      %p287 = scmp.ne.s32.totalorder %s279, %s281
      %p288 = scmp.eq.s32.totalorder %s35, 1
      %p289 = por %p287, %p288
      %p290 = scmp.ne.s32.totalorder %s281, %s282
      %p291 = scmp.eq.s32.totalorder %s35, 0
      %p292 = por %p290, %p291
      %p293 = scmp.ne.s32.totalorder %s281, %s282
      %p294 = scmp.eq.s32.totalorder %s36, 1
      %p295 = por %p293, %p294
      %p297 = scmp.ne.s32.totalorder %s282, %s296
      %p298 = scmp.eq.s32.totalorder %s36, 0
      %p299 = por %p297, %p298
      %s301 = sadd.s32 %s300, 1
      %p304 = scmp.eq.s32.totalorder %s30, 1
      %p305 = scmp.ne.s32.totalorder %s300, %s302
      %p306 = scmp.eq.s32.totalorder %s30, 0
      %p307 = por %p305, %p306
      %p308 = scmp.ne.s32.totalorder %s300, %s302
      %p309 = scmp.eq.s32.totalorder %s35, 1
      %p310 = por %p308, %p309
      %p311 = scmp.ne.s32.totalorder %s302, %s303
      %p312 = scmp.eq.s32.totalorder %s35, 0
      %p313 = por %p311, %p312
      %p314 = scmp.ne.s32.totalorder %s302, %s303
      %p315 = scmp.eq.s32.totalorder %s36, 1
      %p316 = por %p314, %p315
      %p318 = scmp.ne.s32.totalorder %s303, %s317
      %p319 = scmp.eq.s32.totalorder %s36, 0
      %p320 = por %p318, %p319
      %s322 = sadd.s32 %s321, 1
      %p325 = scmp.eq.s32.totalorder %s30, 1
      %p326 = scmp.ne.s32.totalorder %s321, %s323
      %p327 = scmp.eq.s32.totalorder %s30, 0
      %p328 = por %p326, %p327
      %p329 = scmp.ne.s32.totalorder %s321, %s323
      %p330 = scmp.eq.s32.totalorder %s35, 1
      %p331 = por %p329, %p330
      %p332 = scmp.ne.s32.totalorder %s323, %s324
      %p333 = scmp.eq.s32.totalorder %s35, 0
      %p334 = por %p332, %p333
      %p335 = scmp.ne.s32.totalorder %s323, %s324
      %p336 = scmp.eq.s32.totalorder %s36, 1
      %p337 = por %p335, %p336
      %p339 = scmp.ne.s32.totalorder %s324, %s338
      %p340 = scmp.eq.s32.totalorder %s36, 0
      %p341 = por %p339, %p340
      %s343 = sadd.s32 %s342, 1
      %p346 = scmp.eq.s32.totalorder %s30, 1
      %p347 = scmp.ne.s32.totalorder %s342, %s344
      %p348 = scmp.eq.s32.totalorder %s30, 0
      %p349 = por %p347, %p348
      %p350 = scmp.ne.s32.totalorder %s342, %s344
      %p351 = scmp.eq.s32.totalorder %s35, 1
      %p352 = por %p350, %p351
      %p353 = scmp.ne.s32.totalorder %s344, %s345
      %p354 = scmp.eq.s32.totalorder %s35, 0
      %p355 = por %p353, %p354
      %p356 = scmp.ne.s32.totalorder %s344, %s345
      %p357 = scmp.eq.s32.totalorder %s36, 1
      %p358 = por %p356, %p357
      %p360 = scmp.ne.s32.totalorder %s345, %s359
      %p361 = scmp.eq.s32.totalorder %s36, 0
      %p362 = por %p360, %p361
      %s364 = sadd.s32 %s363, 1
      %p367 = scmp.eq.s32.totalorder %s30, 1
      %p368 = scmp.ne.s32.totalorder %s363, %s365
      %p369 = scmp.eq.s32.totalorder %s30, 0
      %p370 = por %p368, %p369
      %p371 = scmp.ne.s32.totalorder %s363, %s365
      %p372 = scmp.eq.s32.totalorder %s35, 1
      %p373 = por %p371, %p372
      %p374 = scmp.ne.s32.totalorder %s365, %s366
      %p375 = scmp.eq.s32.totalorder %s35, 0
      %p376 = por %p374, %p375
      %p377 = scmp.ne.s32.totalorder %s365, %s366
      %p378 = scmp.eq.s32.totalorder %s36, 1
      %p379 = por %p377, %p378
      %p381 = scmp.ne.s32.totalorder %s366, %s380
      %p382 = scmp.eq.s32.totalorder %s36, 0
      %p383 = por %p381, %p382
      %s385 = sadd.s32 %s384, 1
      %p388 = scmp.eq.s32.totalorder %s30, 1
      %p389 = scmp.ne.s32.totalorder %s384, %s386
      %p390 = scmp.eq.s32.totalorder %s30, 0
      %p391 = por %p389, %p390
      %p392 = scmp.ne.s32.totalorder %s384, %s386
      %p393 = scmp.eq.s32.totalorder %s35, 1
      %p394 = por %p392, %p393
      %p395 = scmp.ne.s32.totalorder %s386, %s387
      %p396 = scmp.eq.s32.totalorder %s35, 0
      %p397 = por %p395, %p396
      %p398 = scmp.ne.s32.totalorder %s386, %s387
      %p399 = scmp.eq.s32.totalorder %s36, 1
      %p400 = por %p398, %p399
      %p402 = scmp.ne.s32.totalorder %s387, %s401
      %p403 = scmp.eq.s32.totalorder %s36, 0
      %p404 = por %p402, %p403
      %s406 = sadd.s32 %s405, 1
      %p409 = scmp.eq.s32.totalorder %s30, 1
      %p410 = scmp.ne.s32.totalorder %s405, %s407
      %p411 = scmp.eq.s32.totalorder %s30, 0
      %p412 = por %p410, %p411
      %p413 = scmp.ne.s32.totalorder %s405, %s407
      %p414 = scmp.eq.s32.totalorder %s35, 1
      %p415 = por %p413, %p414
      %p416 = scmp.ne.s32.totalorder %s407, %s408
      %p417 = scmp.eq.s32.totalorder %s35, 0
      %p418 = por %p416, %p417
      %p419 = scmp.ne.s32.totalorder %s407, %s408
      %p420 = scmp.eq.s32.totalorder %s36, 1
      %p421 = por %p419, %p420
      %p423 = scmp.ne.s32.totalorder %s408, %s422
      %p424 = scmp.eq.s32.totalorder %s36, 0
      %p425 = por %p423, %p424
      %s427 = sadd.s32 %s426, 1
      %p430 = scmp.eq.s32.totalorder %s30, 1
      %p431 = scmp.ne.s32.totalorder %s426, %s428
      %p432 = scmp.eq.s32.totalorder %s30, 0
      %p433 = por %p431, %p432
      %p434 = scmp.ne.s32.totalorder %s426, %s428
      %p435 = scmp.eq.s32.totalorder %s35, 1
      %p436 = por %p434, %p435
      %p437 = scmp.ne.s32.totalorder %s428, %s429
      %p438 = scmp.eq.s32.totalorder %s35, 0
      %p439 = por %p437, %p438
      %p440 = scmp.ne.s32.totalorder %s428, %s429
      %p441 = scmp.eq.s32.totalorder %s36, 1
      %p442 = por %p440, %p441
      %p444 = scmp.ne.s32.totalorder %s429, %s443
      %p445 = scmp.eq.s32.totalorder %s36, 0
      %p446 = por %p444, %p445
      %s448 = sadd.s32 %s447, 1
      %p451 = scmp.eq.s32.totalorder %s30, 1
      %p452 = scmp.ne.s32.totalorder %s447, %s449
      %p453 = scmp.eq.s32.totalorder %s30, 0
      %p454 = por %p452, %p453
      %p455 = scmp.ne.s32.totalorder %s447, %s449
      %p456 = scmp.eq.s32.totalorder %s35, 1
      %p457 = por %p455, %p456
      %p458 = scmp.ne.s32.totalorder %s449, %s450
      %p459 = scmp.eq.s32.totalorder %s35, 0
      %p460 = por %p458, %p459
      %p461 = scmp.ne.s32.totalorder %s449, %s450
      %p462 = scmp.eq.s32.totalorder %s36, 1
      %p463 = por %p461, %p462
      %p465 = scmp.ne.s32.totalorder %s450, %s464
      %p466 = scmp.eq.s32.totalorder %s36, 0
      %p467 = por %p465, %p466
      %s469 = sadd.s32 %s468, 1
      %p472 = scmp.eq.s32.totalorder %s30, 1
      %p473 = scmp.ne.s32.totalorder %s468, %s470
      %p474 = scmp.eq.s32.totalorder %s30, 0
      %p475 = por %p473, %p474
      %p476 = scmp.ne.s32.totalorder %s468, %s470
      %p477 = scmp.eq.s32.totalorder %s35, 1
      %p478 = por %p476, %p477
      %p479 = scmp.ne.s32.totalorder %s470, %s471
      %p480 = scmp.eq.s32.totalorder %s35, 0
      %p481 = por %p479, %p480
      %p482 = scmp.ne.s32.totalorder %s470, %s471
      %p483 = scmp.eq.s32.totalorder %s36, 1
      %p484 = por %p482, %p483
      %p486 = scmp.ne.s32.totalorder %s471, %s485
      %p487 = scmp.eq.s32.totalorder %s36, 0
      %p488 = por %p486, %p487
      %s489 = ssub.s32 %s30, %s37
      %p490 = scmp.eq.s32.totalorder %s489, 0
      %s492 = sadd.s32 %s491, 1
      %s493 = scalar_select %p490, %s491, %s492
      %p496 = pneg %p490
      %p497 = scmp.eq.s32.totalorder %s30, 1
      %p498 = por %p496, %p497
      %p499 = scmp.ne.s32.totalorder %s491, %s494
      %p500 = scmp.eq.s32.totalorder %s30, 0
      %p501 = por %p499, %p500
      %p502 = scmp.ne.s32.totalorder %s491, %s494
      %p503 = scmp.eq.s32.totalorder %s35, 1
      %p504 = por %p502, %p503
      %p505 = scmp.ne.s32.totalorder %s494, %s495
      %p506 = scmp.eq.s32.totalorder %s35, 0
      %p507 = por %p505, %p506
      %p508 = scmp.ne.s32.totalorder %s494, %s495
      %p509 = scmp.eq.s32.totalorder %s36, 1
      %p510 = por %p508, %p509
      %p512 = scmp.ne.s32.totalorder %s495, %s511
      %p513 = scmp.eq.s32.totalorder %s36, 0
      %p514 = por %p512, %p513
      %p515 = scmp.le.s32.totalorder 1, %s30
      %p516 = scmp.lt.s32.totalorder %s30, 3
      %p517 = pnand %p515, %p516
      %p518 = pneg %p517
      // Predicated region
      $region9: #{recognizer_forward.1} parent=5 // pred_check
        _
      $region10: #{recognizer_forward.1} parent=5 // pred_check_branch
        %520 = sbr.rel (%p517) target = $region12
      $region11: #{recognizer_forward.1} parent=5 // pred_region
        %s521 = ssub.s32 %s30, 1
        // Predicated region
        $region13: #{recognizer_forward.1} parent=11 // pred_check
          %p522 = pneg %p103
        $region14: #{recognizer_forward.1} parent=11 // pred_check_branch
          %524 = sbr.rel (%p522) target = $region16
        $region15: #{recognizer_forward.1} parent=11 // pred_region
          _
        $region16: #{recognizer_forward.1} parent=11 // pred_fallthru
          _
        // Predicated region
        $region17: #{recognizer_forward.1} parent=11 // pred_check
          %p525 = pneg %p124
        $region18: #{recognizer_forward.1} parent=11 // pred_check_branch
          %527 = sbr.rel (%p525) target = $region20
        $region19: #{recognizer_forward.1} parent=11 // pred_region
          _
        $region20: #{recognizer_forward.1} parent=11 // pred_fallthru
          _
        // Predicated region
        $region21: #{recognizer_forward.1} parent=11 // pred_check
          %p528 = pneg %p145
        $region22: #{recognizer_forward.1} parent=11 // pred_check_branch
          %530 = sbr.rel (%p528) target = $region24
        $region23: #{recognizer_forward.1} parent=11 // pred_region
          _
        $region24: #{recognizer_forward.1} parent=11 // pred_fallthru
          _
        // Predicated region
        $region25: #{recognizer_forward.1} parent=11 // pred_check
          %p531 = pneg %p166
        $region26: #{recognizer_forward.1} parent=11 // pred_check_branch
          %533 = sbr.rel (%p531) target = $region28
        $region27: #{recognizer_forward.1} parent=11 // pred_region
          _
        $region28: #{recognizer_forward.1} parent=11 // pred_fallthru
          _
        // Predicated region
        $region29: #{recognizer_forward.1} parent=11 // pred_check
          %p534 = pneg %p187
        $region30: #{recognizer_forward.1} parent=11 // pred_check_branch
          %536 = sbr.rel (%p534) target = $region32
        $region31: #{recognizer_forward.1} parent=11 // pred_region
          _
        $region32: #{recognizer_forward.1} parent=11 // pred_fallthru
          _
        // Predicated region
        $region33: #{recognizer_forward.1} parent=11 // pred_check
          %p537 = pneg %p208
        $region34: #{recognizer_forward.1} parent=11 // pred_check_branch
          %539 = sbr.rel (%p537) target = $region36
        $region35: #{recognizer_forward.1} parent=11 // pred_region
          _
        $region36: #{recognizer_forward.1} parent=11 // pred_fallthru
          _
        // Predicated region
        $region37: #{recognizer_forward.1} parent=11 // pred_check
          %p540 = pneg %p229
        $region38: #{recognizer_forward.1} parent=11 // pred_check_branch
          %542 = sbr.rel (%p540) target = $region40
        $region39: #{recognizer_forward.1} parent=11 // pred_region
          _
        $region40: #{recognizer_forward.1} parent=11 // pred_fallthru
          _
        // Predicated region
        $region41: #{recognizer_forward.1} parent=11 // pred_check
          %p543 = pneg %p250
        $region42: #{recognizer_forward.1} parent=11 // pred_check_branch
          %545 = sbr.rel (%p543) target = $region44
        $region43: #{recognizer_forward.1} parent=11 // pred_region
          _
        $region44: #{recognizer_forward.1} parent=11 // pred_fallthru
          _
        // Predicated region
        $region45: #{recognizer_forward.1} parent=11 // pred_check
          %p546 = pneg %p271
        $region46: #{recognizer_forward.1} parent=11 // pred_check_branch
          %548 = sbr.rel (%p546) target = $region48
        $region47: #{recognizer_forward.1} parent=11 // pred_region
          _
        $region48: #{recognizer_forward.1} parent=11 // pred_fallthru
          _
        // Predicated region
        $region49: #{recognizer_forward.1} parent=11 // pred_check
          %p549 = pneg %p292
        $region50: #{recognizer_forward.1} parent=11 // pred_check_branch
          %551 = sbr.rel (%p549) target = $region52
        $region51: #{recognizer_forward.1} parent=11 // pred_region
          _
        $region52: #{recognizer_forward.1} parent=11 // pred_fallthru
          _
        // Predicated region
        $region53: #{recognizer_forward.1} parent=11 // pred_check
          %p552 = pneg %p313
        $region54: #{recognizer_forward.1} parent=11 // pred_check_branch
          %554 = sbr.rel (%p552) target = $region56
        $region55: #{recognizer_forward.1} parent=11 // pred_region
          _
        $region56: #{recognizer_forward.1} parent=11 // pred_fallthru
          _
        // Predicated region
        $region57: #{recognizer_forward.1} parent=11 // pred_check
          %p555 = pneg %p334
        $region58: #{recognizer_forward.1} parent=11 // pred_check_branch
          %557 = sbr.rel (%p555) target = $region60
        $region59: #{recognizer_forward.1} parent=11 // pred_region
          _
        $region60: #{recognizer_forward.1} parent=11 // pred_fallthru
          _
        // Predicated region
        $region61: #{recognizer_forward.1} parent=11 // pred_check
          %p558 = pneg %p355
        $region62: #{recognizer_forward.1} parent=11 // pred_check_branch
          %560 = sbr.rel (%p558) target = $region64
        $region63: #{recognizer_forward.1} parent=11 // pred_region
          _
        $region64: #{recognizer_forward.1} parent=11 // pred_fallthru
          _
        // Predicated region
        $region65: #{recognizer_forward.1} parent=11 // pred_check
          %p561 = pneg %p376
        $region66: #{recognizer_forward.1} parent=11 // pred_check_branch
          %563 = sbr.rel (%p561) target = $region68
        $region67: #{recognizer_forward.1} parent=11 // pred_region
          _
        $region68: #{recognizer_forward.1} parent=11 // pred_fallthru
          _
        // Predicated region
        $region69: #{recognizer_forward.1} parent=11 // pred_check
          %p564 = pneg %p397
        $region70: #{recognizer_forward.1} parent=11 // pred_check_branch
          %566 = sbr.rel (%p564) target = $region72
        $region71: #{recognizer_forward.1} parent=11 // pred_region
          _
        $region72: #{recognizer_forward.1} parent=11 // pred_fallthru
          _
        // Predicated region
        $region73: #{recognizer_forward.1} parent=11 // pred_check
          %p567 = pneg %p418
        $region74: #{recognizer_forward.1} parent=11 // pred_check_branch
          %569 = sbr.rel (%p567) target = $region76
        $region75: #{recognizer_forward.1} parent=11 // pred_region
          _
        $region76: #{recognizer_forward.1} parent=11 // pred_fallthru
          _
        // Predicated region
        $region77: #{recognizer_forward.1} parent=11 // pred_check
          %p570 = pneg %p439
        $region78: #{recognizer_forward.1} parent=11 // pred_check_branch
          %572 = sbr.rel (%p570) target = $region80
        $region79: #{recognizer_forward.1} parent=11 // pred_region
          _
        $region80: #{recognizer_forward.1} parent=11 // pred_fallthru
          _
        // Predicated region
        $region81: #{recognizer_forward.1} parent=11 // pred_check
          %p573 = pneg %p460
        $region82: #{recognizer_forward.1} parent=11 // pred_check_branch
          %575 = sbr.rel (%p573) target = $region84
        $region83: #{recognizer_forward.1} parent=11 // pred_region
          _
        $region84: #{recognizer_forward.1} parent=11 // pred_fallthru
          _
        // Predicated region
        $region85: #{recognizer_forward.1} parent=11 // pred_check
          %p576 = pneg %p481
        $region86: #{recognizer_forward.1} parent=11 // pred_check_branch
          %578 = sbr.rel (%p576) target = $region88
        $region87: #{recognizer_forward.1} parent=11 // pred_region
          _
        $region88: #{recognizer_forward.1} parent=11 // pred_fallthru
          _
      $region12: #{recognizer_forward.1} parent=5 // pred_fallthru
        _
      %p579 = scmp.lt.s32.totalorder %s30, 2
      // Predicated region
      $region89: #{recognizer_forward.1} parent=5 // pred_check
        %p580 = pneg %p579
      $region90: #{recognizer_forward.1} parent=5 // pred_check_branch
        %582 = sbr.rel (%p580) target = $region92
      $region91: #{recognizer_forward.1} parent=5 // pred_region
        // Predicated region
        $region93: #{recognizer_forward.1} parent=91 // pred_check
          %p583 = pneg %p50
        $region94: #{recognizer_forward.1} parent=91 // pred_check_branch
          %585 = sbr.rel (%p583) target = $region96
        $region95: #{recognizer_forward.1} parent=91 // pred_region
          %p586 = scmp.lt.s32.totalorder %s30, 1
          %s587 = scalar_select %p586, %s30, 1
          %s588 = smul.addr %s587, 4
          %s589 = smul.addr %s588, 8
          %s590 = scalar_lea.vmem %s0, %s589
        $region96: #{recognizer_forward.1} parent=91 // pred_fallthru
          _
        // Predicated region
        $region97: #{recognizer_forward.1} parent=91 // pred_check
          %p591 = pneg %p76
        $region98: #{recognizer_forward.1} parent=91 // pred_check_branch
          %593 = sbr.rel (%p591) target = $region100
        $region99: #{recognizer_forward.1} parent=91 // pred_region
          %p594 = scmp.lt.s32.totalorder %s30, 1
          %s595 = scalar_select %p594, %s30, 1
          %s596 = smul.addr %s595, 4
          %s597 = smul.addr %s596, 8
          %s598 = scalar_lea.vmem %s1, %s597
        $region100: #{recognizer_forward.1} parent=91 // pred_fallthru
          _
      $region92: #{recognizer_forward.1} parent=5 // pred_fallthru
        _
      %p599 = scmp.le.s32.totalorder 1, %s30
      %p600 = scmp.lt.s32.totalorder %s30, 3
      %p601 = pnand %p599, %p600
      %p602 = pneg %p601
      // Predicated region
      $region101: #{recognizer_forward.1} parent=5 // pred_check
        _
      $region102: #{recognizer_forward.1} parent=5 // pred_check_branch
        %604 = sbr.rel (%p601) target = $region104
      $region103: #{recognizer_forward.1} parent=5 // pred_region
        %s605 = ssub.s32 %s30, 1
        %p606 = scmp.lt.s32.totalorder %s35, 1
        %s607 = scalar_select %p606, %s35, 1
        %s608 = smul.addr %s607, 4
        %s609 = smul.addr %s608, 8
        %s610 = scalar_lea.vmem %s0, %s609
        %p611 = pneg %p56
        %p612 = pneg %p53
        %p613 = scmp.lt.s32.totalorder %s35, 1
        %s614 = scalar_select %p613, %s35, 1
        %s615 = smul.addr %s614, 4
        %s616 = smul.addr %s615, 8
        %s617 = scalar_lea.vmem %s1, %s616
        %p618 = pneg %p82
        %p619 = pneg %p79
        %p620 = pneg %p103
        %p621 = pneg %p100
        %p622 = pneg %p124
        %p623 = pneg %p121
        %p624 = pneg %p145
        %p625 = pneg %p142
        %p626 = pneg %p166
        %p627 = pneg %p163
        %p628 = pneg %p187
        %p629 = pneg %p184
        %p630 = pneg %p208
        %p631 = pneg %p205
        %p632 = pneg %p229
        %p633 = pneg %p226
        %p634 = pneg %p250
        %p635 = pneg %p247
        %p636 = pneg %p271
        %p637 = pneg %p268
        %p638 = pneg %p292
        %p639 = pneg %p289
        %p640 = pneg %p313
        %p641 = pneg %p310
        %p642 = pneg %p334
        %p643 = pneg %p331
        %p644 = pneg %p355
        %p645 = pneg %p352
        %p646 = pneg %p376
        %p647 = pneg %p373
        %p648 = pneg %p397
        %p649 = pneg %p394
        %p650 = pneg %p418
        %p651 = pneg %p415
        %p652 = pneg %p439
        %p653 = pneg %p436
        %p654 = pneg %p460
        %p655 = pneg %p457
        %p656 = pneg %p481
        %p657 = pneg %p478
        %p658 = pneg %p507
        %p659 = pneg %p504
        %s660 = sand.u32 %s494, 1
        %s661 = scalar_lea.sflag [#allocation3], %s660
        %s662 = sand.u32 %s494, 1
        %s663 = scalar_lea.vmem [#allocation2], %s662
        %p664 = scmp.lt.s32.totalorder %s35, 1
        %s665 = scalar_select %p664, %s35, 1
        %s666 = smul.addr %s665, 4
        %s667 = smul.addr %s666, 8
        %s668 = scalar_lea.vmem %s0, %s667
        %p669 = scmp.lt.s32.totalorder %s35, 1
        %s670 = scalar_select %p669, %s35, 1
        %s671 = smul.addr %s670, 4
        %s672 = smul.addr %s671, 8
        %s673 = scalar_lea.vmem %s1, %s672
        %v674 = vld [vmem:[%s668] sm:$0xff]
        %v675 = vld [vmem:[%s668 + $0x8] sm:$0xff]
        %v676 = vld [vmem:[%s668 + $0x10] sm:$0xff]
        %v677 = vld [vmem:[%s668 + $0x18] sm:$0xff]
        %v678 = vld [vmem:[%s673] sm:$0xff]
        %v679 = vld [vmem:[%s673 + $0x8] sm:$0xff]
        %v680 = vld [vmem:[%s673 + $0x10] sm:$0xff]
        %v681 = vld [vmem:[%s673 + $0x18] sm:$0xff]
        %v682 = vlaneseq
        %v683 = vshrl.u32 %v682, 7
        %v684 = vadd.s32 %v683, 8
        %v685 = vadd.s32 %v683, 16
        %v686 = vadd.s32 %v683, 24
        %v687 = vlaneseq
        %v688 = vand.u32 %v687, 127
        %vm689 = vcmp.eq.s32.totalorder %v683, %v688
        %vm690 = vcmp.eq.s32.totalorder %v684, %v688
        %vm691 = vcmp.eq.s32.totalorder %v685, %v688
        %vm692 = vcmp.eq.s32.totalorder %v686, %v688
        %vm693 = vcmp.lt.s32.totalorder %v688, %v683
        %vm694 = vcmp.lt.s32.totalorder %v688, %v684
        %vm695 = vcmp.lt.s32.totalorder %v688, %v685
        %vm696 = vcmp.lt.s32.totalorder %v688, %v686
        %vm697 = vcmask 261120
        %v698 = vsel %vm697, %v678, 0.0
        %699 = vadd.xlane.f32.xlu0 %v698
        %v700 = vpop.xlane.xlu0 %699
        %v701 = vsel %vm697, %v679, 0.0
        %702 = vadd.xlane.f32.xlu0 %v701
        %v703 = vpop.xlane.xlu0 %702
        %v704 = vsel %vm697, %v680, 0.0
        %705 = vadd.xlane.f32.xlu0 %v704
        %v706 = vpop.xlane.xlu0 %705
        %v707 = vsel %vm697, %v681, 0.0
        %708 = vadd.xlane.f32.xlu0 %v707
        %v709 = vpop.xlane.xlu0 %708
        %v710 = vmax.f32 %v700, 1.0
        %v711 = vmax.f32 %v703, 1.0
        %v712 = vmax.f32 %v706, 1.0
        %v713 = vmax.f32 %v709, 1.0
        %v714 = vrcp.pop %v710
        %v715 = vmul.f32 1.0, %v714
        %v716 = vrcp.pop %v711
        %v717 = vmul.f32 1.0, %v716
        %v718 = vrcp.pop %v712
        %v719 = vmul.f32 1.0, %v718
        %v720 = vrcp.pop %v713
        %v721 = vmul.f32 1.0, %v720
        %v722 = vmul.f32 %v678, %v715
        %v723 = vmul.f32 %v679, %v717
        %v724 = vmul.f32 %v680, %v719
        %v725 = vmul.f32 %v681, %v721
        %v727 = vsel %vm697, %v722, 0
        %v730 = vsel %vm697, %v723, 0
        %v733 = vsel %vm697, %v724, 0
        %v736 = vsel %vm697, %v725, 0
        %738 = vmatprep.subr.mxu0 0.0
        %739 = vmatpush1.msra.mxu0 0.0
        %740 = vmatprep.subr.mxu0 0.0
        %741 = vmatpush1.msra.mxu0 0.0
        %742 = vmatprep.subr.mxu0 0.0
        %743 = vmatpush1.msra.mxu0 0.0
        %744 = vmatprep.subr.mxu0 0.0
        %745 = vmatpush1.msra.mxu0 0.0
        %746 = vmatprep.subr.mxu0 0.0
        %747 = vmatpush1.msra.mxu0 0.0
        %748 = vmatprep.subr.mxu0 0.0
        %749 = vmatpush1.msra.mxu0 0.0
        %750 = vmatprep.subr.mxu0 0.0
        %751 = vmatpush1.msra.mxu0 0.0
        %752 = vmatprep.subr.mxu0 0.0
        %753 = vmatpush1.msra.mxu0 0.0
        %754 = vmatprep.subr.mxu0 0.0
        %755 = vmatpush1.msra.mxu0 0.0
        %756 = vmatprep.subr.mxu0 0.0
        %757 = vmatpush1.msra.mxu0 0.0
        %758 = vmatprep.subr.mxu0 0.0
        %759 = vmatpush1.msra.mxu0 0.0
        %760 = vmatprep.subr.mxu0 0.0
        %761 = vmatpush1.msra.mxu0 0.0
        %762 = vmatprep.subr.mxu0 0.0
        %763 = vmatpush1.msra.mxu0 %v677
        %764 = vmatprep.subr.mxu0 0.0
        %765 = vmatpush1.msra.mxu0 %v676
        %766 = vmatprep.subr.mxu0 0.0
        %767 = vmatpush1.msra.mxu0 %v675
        %768 = vmatprep.subr.mxu0 0.0
        %769 = vmatpush1.msra.mxu0 %v674
        %770 = vmatprep.subr.mxu0 0.0
        %771 = vmatpush2.msra.mxu0 0.0
        %772 = vmatprep.subr.mxu0 0.0
        %773 = vmatpush2.msra.mxu0 0.0
        %774 = vmatprep.subr.mxu0 0.0
        %775 = vmatpush2.msra.mxu0 0.0
        %776 = vmatprep.subr.mxu0 0.0
        %777 = vmatpush2.msra.mxu0 0.0
        %778 = vmatprep.subr.mxu0 0.0
        %779 = vmatpush2.msra.mxu0 0.0
        %780 = vmatprep.subr.mxu0 0.0
        %781 = vmatpush2.msra.mxu0 0.0
        %782 = vmatprep.subr.mxu0 0.0
        %783 = vmatpush2.msra.mxu0 0.0
        %784 = vmatprep.subr.mxu0 0.0
        %785 = vmatpush2.msra.mxu0 0.0
        %786 = vmatprep.subr.mxu0 0.0
        %787 = vmatpush2.msra.mxu0 0.0
        %788 = vmatprep.subr.mxu0 0.0
        %789 = vmatpush2.msra.mxu0 0.0
        %790 = vmatprep.subr.mxu0 0.0
        %791 = vmatpush2.msra.mxu0 0.0
        %792 = vmatprep.subr.mxu0 0.0
        %793 = vmatpush2.msra.mxu0 0.0
        %794 = vmatprep.subr.mxu0 0.0
        %795 = vmatpush2.msra.mxu0 0.0
        %796 = vmatprep.subr.mxu0 0.0
        %797 = vmatpush2.msra.mxu0 0.0
        %798 = vmatprep.subr.mxu0 0.0
        %799 = vmatpush2.msra.mxu0 0.0
        %800 = vmatprep.subr.mxu0 0.0
        %801 = vmatpush2.msra.mxu0 0.0
        %802 = vmatprep.mubr.f32.mxu0 0.0
        %803 = vmatmul.mubr.f32.gmra.mxu0 %v727
        %v804 = vpop.f32.mrf.mxu0
        %v805 = vadd.f32 0.0, %v804
        %v806 = vpop.f32.mrf.mxu0
        %807 = vmatprep.mubr.f32.mxu0 0.0
        %808 = vmatmul.mubr.f32.gmra.mxu0 %v730
        %v809 = vpop.f32.mrf.mxu0
        %v810 = vadd.f32 0.0, %v809
        %v811 = vpop.f32.mrf.mxu0
        %812 = vmatprep.mubr.f32.mxu0 0.0
        %813 = vmatmul.mubr.f32.gmra.mxu0 %v733
        %v814 = vpop.f32.mrf.mxu0
        %v815 = vadd.f32 0.0, %v814
        %v816 = vpop.f32.mrf.mxu0
        %817 = vmatprep.mubr.f32.mxu0 0.0
        %818 = vmatmul.mubr.f32.gmra.mxu0 %v736
        %v819 = vpop.f32.mrf.mxu0
        %v820 = vadd.f32 0.0, %v819
        %v821 = vpop.f32.mrf.mxu0
        %822 = vdwg.mxu0
        %v823 = vld [vmem:[%s2] sm:$0xff]
        %v824 = vld [vmem:[%s3] sm:$0xff]
        %vm825 = vcmask 64512
        %v827 = vsel %vm825, %v674, 0
        %v830 = vsel %vm825, %v675, 0
        %v833 = vsel %vm825, %v676, 0
        %v836 = vsel %vm825, %v677, 0
        %838 = vmatprep.subr.mxu0 0.0
        %839 = vmatpush1.msra.mxu0 0.0
        %840 = vmatprep.subr.mxu0 0.0
        %841 = vmatpush1.msra.mxu0 0.0
        %842 = vmatprep.subr.mxu0 0.0
        %843 = vmatpush1.msra.mxu0 0.0
        %844 = vmatprep.subr.mxu0 0.0
        %845 = vmatpush1.msra.mxu0 0.0
        %846 = vmatprep.subr.mxu0 0.0
        %847 = vmatpush1.msra.mxu0 0.0
        %848 = vmatprep.subr.mxu0 0.0
        %849 = vmatpush1.msra.mxu0 0.0
        %850 = vmatprep.subr.mxu0 0.0
        %851 = vmatpush1.msra.mxu0 0.0
        %852 = vmatprep.subr.mxu0 0.0
        %853 = vmatpush1.msra.mxu0 0.0
        %854 = vmatprep.subr.mxu0 0.0
        %855 = vmatpush1.msra.mxu0 0.0
        %856 = vmatprep.subr.mxu0 0.0
        %857 = vmatpush1.msra.mxu0 0.0
        %858 = vmatprep.subr.mxu0 0.0
        %859 = vmatpush1.msra.mxu0 0.0
        %860 = vmatprep.subr.mxu0 0.0
        %861 = vmatpush1.msra.mxu0 0.0
        %862 = vmatprep.subr.mxu0 0.0
        %863 = vmatpush1.msra.mxu0 0.0
        %864 = vmatprep.subr.mxu0 0.0
        %865 = vmatpush1.msra.mxu0 0.0
        %866 = vmatprep.subr.mxu0 0.0
        %867 = vmatpush1.msra.mxu0 0.0
        %868 = vmatprep.subr.mxu0 0.0
        %869 = vmatpush1.msra.mxu0 %v824
        %870 = vmatprep.subr.mxu0 0.0
        %871 = vmatpush2.msra.mxu0 0.0
        %872 = vmatprep.subr.mxu0 0.0
        %873 = vmatpush2.msra.mxu0 0.0
        %874 = vmatprep.subr.mxu0 0.0
        %875 = vmatpush2.msra.mxu0 0.0
        %876 = vmatprep.subr.mxu0 0.0
        %877 = vmatpush2.msra.mxu0 0.0
        %878 = vmatprep.subr.mxu0 0.0
        %879 = vmatpush2.msra.mxu0 0.0
        %880 = vmatprep.subr.mxu0 0.0
        %881 = vmatpush2.msra.mxu0 0.0
        %882 = vmatprep.subr.mxu0 0.0
        %883 = vmatpush2.msra.mxu0 0.0
        %884 = vmatprep.subr.mxu0 0.0
        %885 = vmatpush2.msra.mxu0 0.0
        %886 = vmatprep.subr.mxu0 0.0
        %887 = vmatpush2.msra.mxu0 0.0
        %888 = vmatprep.subr.mxu0 0.0
        %889 = vmatpush2.msra.mxu0 0.0
        %890 = vmatprep.subr.mxu0 0.0
        %891 = vmatpush2.msra.mxu0 0.0
        %892 = vmatprep.subr.mxu0 0.0
        %893 = vmatpush2.msra.mxu0 0.0
        %894 = vmatprep.subr.mxu0 0.0
        %895 = vmatpush2.msra.mxu0 0.0
        %896 = vmatprep.subr.mxu0 0.0
        %897 = vmatpush2.msra.mxu0 0.0
        %898 = vmatprep.subr.mxu0 0.0
        %899 = vmatpush2.msra.mxu0 0.0
        %900 = vmatprep.subr.mxu0 0.0
        %901 = vmatpush2.msra.mxu0 0.0
        %902 = vmatprep.mubr.f32.mxu0 0.0
        %903 = vmatmul.mubr.f32.gmra.mxu0 %v827
        %v904 = vpop.f32.mrf.mxu0
        %v905 = vadd.f32 0.0, %v904
        %v906 = vpop.f32.mrf.mxu0
        %907 = vmatprep.mubr.f32.mxu0 0.0
        %908 = vmatmul.mubr.f32.gmra.mxu0 %v830
        %v909 = vpop.f32.mrf.mxu0
        %v910 = vadd.f32 0.0, %v909
        %v911 = vpop.f32.mrf.mxu0
        %912 = vmatprep.mubr.f32.mxu0 0.0
        %913 = vmatmul.mubr.f32.gmra.mxu0 %v833
        %v914 = vpop.f32.mrf.mxu0
        %v915 = vadd.f32 0.0, %v914
        %v916 = vpop.f32.mrf.mxu0
        %917 = vmatprep.mubr.f32.mxu0 0.0
        %918 = vmatmul.mubr.f32.gmra.mxu0 %v836
        %v919 = vpop.f32.mrf.mxu0
        %v920 = vadd.f32 0.0, %v919
        %v921 = vpop.f32.mrf.mxu0
        %922 = vdwg.mxu0
        %v924 = vsel %vm825, %v805, 0
        %v927 = vsel %vm825, %v810, 0
        %v930 = vsel %vm825, %v815, 0
        %v933 = vsel %vm825, %v820, 0
        %935 = vmatprep.subr.mxu0 0.0
        %936 = vmatpush1.msra.mxu0 0.0
        %937 = vmatprep.subr.mxu0 0.0
        %938 = vmatpush1.msra.mxu0 0.0
        %939 = vmatprep.subr.mxu0 0.0
        %940 = vmatpush1.msra.mxu0 0.0
        %941 = vmatprep.subr.mxu0 0.0
        %942 = vmatpush1.msra.mxu0 0.0
        %943 = vmatprep.subr.mxu0 0.0
        %944 = vmatpush1.msra.mxu0 0.0
        %945 = vmatprep.subr.mxu0 0.0
        %946 = vmatpush1.msra.mxu0 0.0
        %947 = vmatprep.subr.mxu0 0.0
        %948 = vmatpush1.msra.mxu0 0.0
        %949 = vmatprep.subr.mxu0 0.0
        %950 = vmatpush1.msra.mxu0 0.0
        %951 = vmatprep.subr.mxu0 0.0
        %952 = vmatpush1.msra.mxu0 0.0
        %953 = vmatprep.subr.mxu0 0.0
        %954 = vmatpush1.msra.mxu0 0.0
        %955 = vmatprep.subr.mxu0 0.0
        %956 = vmatpush1.msra.mxu0 0.0
        %957 = vmatprep.subr.mxu0 0.0
        %958 = vmatpush1.msra.mxu0 0.0
        %959 = vmatprep.subr.mxu0 0.0
        %960 = vmatpush1.msra.mxu0 0.0
        %961 = vmatprep.subr.mxu0 0.0
        %962 = vmatpush1.msra.mxu0 0.0
        %963 = vmatprep.subr.mxu0 0.0
        %964 = vmatpush1.msra.mxu0 0.0
        %965 = vmatprep.subr.mxu0 0.0
        %966 = vmatpush1.msra.mxu0 %v823
        %967 = vmatprep.subr.mxu0 0.0
        %968 = vmatpush2.msra.mxu0 0.0
        %969 = vmatprep.subr.mxu0 0.0
        %970 = vmatpush2.msra.mxu0 0.0
        %971 = vmatprep.subr.mxu0 0.0
        %972 = vmatpush2.msra.mxu0 0.0
        %973 = vmatprep.subr.mxu0 0.0
        %974 = vmatpush2.msra.mxu0 0.0
        %975 = vmatprep.subr.mxu0 0.0
        %976 = vmatpush2.msra.mxu0 0.0
        %977 = vmatprep.subr.mxu0 0.0
        %978 = vmatpush2.msra.mxu0 0.0
        %979 = vmatprep.subr.mxu0 0.0
        %980 = vmatpush2.msra.mxu0 0.0
        %981 = vmatprep.subr.mxu0 0.0
        %982 = vmatpush2.msra.mxu0 0.0
        %983 = vmatprep.subr.mxu0 0.0
        %984 = vmatpush2.msra.mxu0 0.0
        %985 = vmatprep.subr.mxu0 0.0
        %986 = vmatpush2.msra.mxu0 0.0
        %987 = vmatprep.subr.mxu0 0.0
        %988 = vmatpush2.msra.mxu0 0.0
        %989 = vmatprep.subr.mxu0 0.0
        %990 = vmatpush2.msra.mxu0 0.0
        %991 = vmatprep.subr.mxu0 0.0
        %992 = vmatpush2.msra.mxu0 0.0
        %993 = vmatprep.subr.mxu0 0.0
        %994 = vmatpush2.msra.mxu0 0.0
        %995 = vmatprep.subr.mxu0 0.0
        %996 = vmatpush2.msra.mxu0 0.0
        %997 = vmatprep.subr.mxu0 0.0
        %998 = vmatpush2.msra.mxu0 0.0
        %999 = vmatprep.mubr.f32.mxu0 0.0
        %1000 = vmatmul.mubr.f32.gmra.mxu0 %v924
        %v1001 = vpop.f32.mrf.mxu0
        %v1002 = vadd.f32 %v905, %v1001
        %v1003 = vpop.f32.mrf.mxu0
        %1004 = vmatprep.mubr.f32.mxu0 0.0
        %1005 = vmatmul.mubr.f32.gmra.mxu0 %v927
        %v1006 = vpop.f32.mrf.mxu0
        %v1007 = vadd.f32 %v910, %v1006
        %v1008 = vpop.f32.mrf.mxu0
        %1009 = vmatprep.mubr.f32.mxu0 0.0
        %1010 = vmatmul.mubr.f32.gmra.mxu0 %v930
        %v1011 = vpop.f32.mrf.mxu0
        %v1012 = vadd.f32 %v915, %v1011
        %v1013 = vpop.f32.mrf.mxu0
        %1014 = vmatprep.mubr.f32.mxu0 0.0
        %1015 = vmatmul.mubr.f32.gmra.mxu0 %v933
        %v1016 = vpop.f32.mrf.mxu0
        %v1017 = vadd.f32 %v920, %v1016
        %v1018 = vpop.f32.mrf.mxu0
        %1019 = vdwg.mxu0
        %v1020 = vld [vmem:[%s4] sm:$0x1]
        %v1022 = vlaneseq
        %v1023 = vshrl.u32 %v1022, 7
        %v1024 = vsub.s32 0, %v1023
        %v1025 = vrot.slane %v1020, %v1024
        %v1027 = vadd.f32 %v1002, %v1025
        %v1028 = vadd.f32 %v1007, %v1025
        %v1029 = vadd.f32 %v1012, %v1025
        %v1030 = vadd.f32 %v1017, %v1025
        %v1031 = vmul.f32 %v1027, 0.5
        %v1032 = vmul.f32 %v1028, 0.5
        %v1033 = vmul.f32 %v1029, 0.5
        %v1034 = vmul.f32 %v1030, 0.5
        %v1035 = vmul.f32 %v1027, 0.70710677
        %v1036 = vmul.f32 %v1028, 0.70710677
        %v1037 = vmul.f32 %v1029, 0.70710677
        %v1038 = vmul.f32 %v1030, 0.70710677
        %vm1039 = vcmp.ge.f32.partialorder %v1035, 0.0
        %vm1040 = vcmp.ge.f32.partialorder %v1036, 0.0
        %vm1041 = vcmp.ge.f32.partialorder %v1037, 0.0
        %vm1042 = vcmp.ge.f32.partialorder %v1038, 0.0
        %v1043 = vsel %vm1039, 1.0, -1.0
        %v1044 = vsel %vm1040, 1.0, -1.0
        %v1045 = vsel %vm1041, 1.0, -1.0
        %v1046 = vsel %vm1042, 1.0, -1.0
        %v1047 = vand.u32 2147483647, %v1035
        %v1048 = vand.u32 2147483647, %v1036
        %v1049 = vand.u32 2147483647, %v1037
        %v1050 = vand.u32 2147483647, %v1038
        %v1051 = vmul.f32 %v1047, 0.3275911
        %v1052 = vmul.f32 %v1048, 0.3275911
        %v1053 = vmul.f32 %v1049, 0.3275911
        %v1054 = vmul.f32 %v1050, 0.3275911
        %v1055 = vadd.f32 %v1051, 1.0
        %v1056 = vadd.f32 %v1052, 1.0
        %v1057 = vadd.f32 %v1053, 1.0
        %v1058 = vadd.f32 %v1054, 1.0
        %v1059 = vrcp.pop %v1055
        %v1060 = vmul.f32 1.0, %v1059
        %v1061 = vrcp.pop %v1056
        %v1062 = vmul.f32 1.0, %v1061
        %v1063 = vrcp.pop %v1057
        %v1064 = vmul.f32 1.0, %v1063
        %v1065 = vrcp.pop %v1058
        %v1066 = vmul.f32 1.0, %v1065
        %v1067 = vmul.f32 %v1060, 1.0614054
        %v1068 = vmul.f32 %v1062, 1.0614054
        %v1069 = vmul.f32 %v1064, 1.0614054
        %v1070 = vmul.f32 %v1066, 1.0614054
        %v1071 = vadd.f32 %v1067, -1.4531521
        %v1072 = vadd.f32 %v1068, -1.4531521
        %v1073 = vadd.f32 %v1069, -1.4531521
        %v1074 = vadd.f32 %v1070, -1.4531521
        %v1075 = vmul.f32 %v1071, %v1060
        %v1076 = vmul.f32 %v1072, %v1062
        %v1077 = vmul.f32 %v1073, %v1064
        %v1078 = vmul.f32 %v1074, %v1066
        %v1079 = vadd.f32 %v1075, 1.4214138
        %v1080 = vadd.f32 %v1076, 1.4214138
        %v1081 = vadd.f32 %v1077, 1.4214138
        %v1082 = vadd.f32 %v1078, 1.4214138
        %v1083 = vmul.f32 %v1079, %v1060
        %v1084 = vmul.f32 %v1080, %v1062
        %v1085 = vmul.f32 %v1081, %v1064
        %v1086 = vmul.f32 %v1082, %v1066
        %v1087 = vadd.f32 %v1083, -0.28449672
        %v1088 = vadd.f32 %v1084, -0.28449672
        %v1089 = vadd.f32 %v1085, -0.28449672
        %v1090 = vadd.f32 %v1086, -0.28449672
        %v1091 = vmul.f32 %v1087, %v1060
        %v1092 = vmul.f32 %v1088, %v1062
        %v1093 = vmul.f32 %v1089, %v1064
        %v1094 = vmul.f32 %v1090, %v1066
        %v1095 = vadd.f32 %v1091, 0.2548296
        %v1096 = vadd.f32 %v1092, 0.2548296
        %v1097 = vadd.f32 %v1093, 0.2548296
        %v1098 = vadd.f32 %v1094, 0.2548296
        %v1099 = vmul.f32 %v1095, %v1060
        %v1100 = vmul.f32 %v1096, %v1062
        %v1101 = vmul.f32 %v1097, %v1064
        %v1102 = vmul.f32 %v1098, %v1066
        %v1103 = vsub.f32 0.0, %v1047
        %v1104 = vsub.f32 0.0, %v1048
        %v1105 = vsub.f32 0.0, %v1049
        %v1106 = vsub.f32 0.0, %v1050
        %v1107 = vmul.f32 %v1103, %v1047
        %v1108 = vmul.f32 %v1104, %v1048
        %v1109 = vmul.f32 %v1105, %v1049
        %v1110 = vmul.f32 %v1106, %v1050
        %v1111 = vmul.f32 %v1107, 1.442695
        %v1112 = vpow.pop %v1111
        %v1113 = vmul.f32 %v1108, 1.442695
        %v1114 = vpow.pop %v1113
        %v1115 = vmul.f32 %v1109, 1.442695
        %v1116 = vpow.pop %v1115
        %v1117 = vmul.f32 %v1110, 1.442695
        %v1118 = vpow.pop %v1117
        %v1119 = vmul.f32 %v1099, %v1112
        %v1120 = vmul.f32 %v1100, %v1114
        %v1121 = vmul.f32 %v1101, %v1116
        %v1122 = vmul.f32 %v1102, %v1118
        %v1123 = vsub.f32 1.0, %v1119
        %v1124 = vsub.f32 1.0, %v1120
        %v1125 = vsub.f32 1.0, %v1121
        %v1126 = vsub.f32 1.0, %v1122
        %v1127 = vmul.f32 %v1043, %v1123
        %v1128 = vmul.f32 %v1044, %v1124
        %v1129 = vmul.f32 %v1045, %v1125
        %v1130 = vmul.f32 %v1046, %v1126
        %v1131 = vadd.f32 %v1127, 1.0
        %v1132 = vadd.f32 %v1128, 1.0
        %v1133 = vadd.f32 %v1129, 1.0
        %v1134 = vadd.f32 %v1130, 1.0
        %v1135 = vmul.f32 %v1031, %v1131
        %v1136 = vmul.f32 %v1032, %v1132
        %v1137 = vmul.f32 %v1033, %v1133
        %v1138 = vmul.f32 %v1034, %v1134
        %v1139 = vld [vmem:[%s5] sm:$0x1]
        %v1141 = vlaneseq
        %v1142 = vshrl.u32 %v1141, 7
        %v1143 = vsub.s32 0, %v1142
        %v1144 = vrot.slane %v1139, %v1143
        %v1146 = vmul.f32 %v1135, %v1144
        %v1147 = vmul.f32 %v1136, %v1144
        %v1148 = vmul.f32 %v1137, %v1144
        %v1149 = vmul.f32 %v1138, %v1144
        %vm1150 = vcmask 523264
        %v1151 = vsel %vm1150, %v1146, 0.0
        %1152 = vadd.xlane.f32.xlu0 %v1151
        %v1153 = vpop.xlane.xlu0 %1152
        %v1154 = vsel %vm1150, %v1147, 0.0
        %1155 = vadd.xlane.f32.xlu0 %v1154
        %v1156 = vpop.xlane.xlu0 %1155
        %v1157 = vsel %vm1150, %v1148, 0.0
        %1158 = vadd.xlane.f32.xlu0 %v1157
        %v1159 = vpop.xlane.xlu0 %1158
        %v1160 = vsel %vm1150, %v1149, 0.0
        %1161 = vadd.xlane.f32.xlu0 %v1160
        %v1162 = vpop.xlane.xlu0 %1161
        %v1163 = vtanh.pop %v1153
        %v1164 = vtanh.pop %v1156
        %v1165 = vtanh.pop %v1159
        %v1166 = vtanh.pop %v1162
        %v1167 = vsel %vm689, %v1163, 0.0
        %v1168 = vsel %vm690, %v1164, 0.0
        %v1169 = vsel %vm691, %v1165, 0.0
        %v1170 = vsel %vm692, %v1166, 0.0
        %v1171 = vsel %vm697, %v1167, 0.0
        %v1172 = vsel %vm697, %v1168, 0.0
        %v1173 = vadd.f32 %v1171, %v1172
        %v1174 = vsel %vm697, %v1169, 0.0
        %v1175 = vadd.f32 %v1173, %v1174
        %v1176 = vsel %vm697, %v1170, 0.0
        %v1177 = vadd.f32 %v1175, %v1176
        %v1178 = vrot.slane %v1177, 4
        %v1179 = vadd.f32 %v1177, %v1178
        %v1180 = vrot.slane %v1179, 2
        %v1181 = vadd.f32 %v1179, %v1180
        %v1182 = vrot.slane %v1181, 1
        %v1183 = vadd.f32 %v1181, %v1182
        %vm1184 = vcmp.gt.f32.partialorder %v1183, %v1163
        %vm1185 = vcmp.gt.f32.partialorder %v1183, %v1164
        %vm1186 = vcmp.gt.f32.partialorder %v1183, %v1165
        %vm1187 = vcmp.gt.f32.partialorder %v1183, %v1166
        %vm1188 = vcmp.eq.f32.partialorder %v1183, %v1163
        %vm1189 = vcmp.eq.f32.partialorder %v1183, %v1164
        %vm1190 = vcmp.eq.f32.partialorder %v1183, %v1165
        %vm1191 = vcmp.eq.f32.partialorder %v1183, %v1166
        %vm1192 = vmand %vm1188, %vm693
        %vm1193 = vmand %vm1189, %vm694
        %vm1194 = vmand %vm1190, %vm695
        %vm1195 = vmand %vm1191, %vm696
        %vm1196 = vmor %vm1184, %vm1192
        %vm1197 = vmor %vm1185, %vm1193
        %vm1198 = vmor %vm1186, %vm1194
        %vm1199 = vmor %vm1187, %vm1195
        %v1200 = vsel %vm1196, 1.0, 0.0
        %v1201 = vsel %vm1197, 1.0, 0.0
        %v1202 = vsel %vm1198, 1.0, 0.0
        %v1203 = vsel %vm1199, 1.0, 0.0
        %v1204 = vsel %vm697, %v1200, 0.0
        %1205 = vadd.xlane.f32.xlu0 %v1204
        %v1206 = vpop.xlane.xlu0 %1205
        %v1207 = vsel %vm697, %v1201, 0.0
        %1208 = vadd.xlane.f32.xlu0 %v1207
        %v1209 = vpop.xlane.xlu0 %1208
        %v1210 = vsel %vm697, %v1202, 0.0
        %1211 = vadd.xlane.f32.xlu0 %v1210
        %v1212 = vpop.xlane.xlu0 %1211
        %v1213 = vsel %vm697, %v1203, 0.0
        %1214 = vadd.xlane.f32.xlu0 %v1213
        %v1215 = vpop.xlane.xlu0 %1214
        %vm1216 = vcmp.lt.f32.partialorder %v1206, 26.0
        %vm1217 = vcmp.lt.f32.partialorder %v1209, 26.0
        %vm1218 = vcmp.lt.f32.partialorder %v1212, 26.0
        %vm1219 = vcmp.lt.f32.partialorder %v1215, 26.0
        %v1220 = vsel %vm1216, 1, 0
        %v1221 = vsel %vm1217, 1, 0
        %v1222 = vsel %vm1218, 1, 0
        %v1223 = vsel %vm1219, 1, 0
        %v1224 = vcvt.s32.f32 %v1220
        %v1225 = vcvt.s32.f32 %v1221
        %v1226 = vcvt.s32.f32 %v1222
        %v1227 = vcvt.s32.f32 %v1223
        %v1228 = vsel %vm689, %v1224, 0.0
        %v1229 = vsel %vm690, %v1225, 0.0
        %v1230 = vsel %vm691, %v1226, 0.0
        %v1231 = vsel %vm692, %v1227, 0.0
        %v1232 = vsel %vm697, %v1228, 0.0
        %v1233 = vsel %vm697, %v1229, 0.0
        %v1234 = vadd.f32 %v1232, %v1233
        %v1235 = vsel %vm697, %v1230, 0.0
        %v1236 = vadd.f32 %v1234, %v1235
        %v1237 = vsel %vm697, %v1231, 0.0
        %v1238 = vadd.f32 %v1236, %v1237
        %v1239 = vrot.slane %v1238, 4
        %v1240 = vadd.f32 %v1238, %v1239
        %v1241 = vrot.slane %v1240, 2
        %v1242 = vadd.f32 %v1240, %v1241
        %v1243 = vrot.slane %v1242, 1
        %v1244 = vadd.f32 %v1242, %v1243
        %v1245 = vmul.f32 %v1135, %v1163
        %v1246 = vmul.f32 %v1136, %v1164
        %v1247 = vmul.f32 %v1137, %v1165
        %v1248 = vmul.f32 %v1138, %v1166
        %v1249 = vmul.f32 %v1245, %v1224
        %v1250 = vmul.f32 %v1246, %v1225
        %v1251 = vmul.f32 %v1247, %v1226
        %v1252 = vmul.f32 %v1248, %v1227
        %v1253 = vmul.f32 %v678, %v1224
        %v1254 = vmul.f32 %v679, %v1225
        %v1255 = vmul.f32 %v680, %v1226
        %v1256 = vmul.f32 %v681, %v1227
        %v1257 = vmul.f32 %v1253, %v1244
        %v1258 = vmul.f32 %v1254, %v1244
        %v1259 = vmul.f32 %v1255, %v1244
        %v1260 = vmul.f32 %v1256, %v1244
        %vm1261 = vcmp.gt.f32.partialorder %v1224, 0.5
        %vm1262 = vcmp.gt.f32.partialorder %v1225, 0.5
        %vm1263 = vcmp.gt.f32.partialorder %v1226, 0.5
        %vm1264 = vcmp.gt.f32.partialorder %v1227, 0.5
        %v1265 = vsel %vm1261, 1, 0
        %v1266 = vsel %vm1262, 1, 0
        %v1267 = vsel %vm1263, 1, 0
        %v1268 = vsel %vm1264, 1, 0
        %vm1269 = vcmp.eq.s32.totalorder %v1265, 1
        %vm1270 = vcmp.eq.s32.totalorder %v1266, 1
        %vm1271 = vcmp.eq.s32.totalorder %v1267, 1
        %vm1272 = vcmp.eq.s32.totalorder %v1268, 1
        %v1273 = vsel %vm1269, %v1249, -inf
        %v1274 = vsel %vm1270, %v1250, -inf
        %v1275 = vsel %vm1271, %v1251, -inf
        %v1276 = vsel %vm1272, %v1252, -inf
        %v1277 = vsel %vm1150, %v1273, -inf
        %v1278 = vsel %vm1150, %v1274, -inf
        %v1279 = vsel %vm1150, %v1275, -inf
        %v1280 = vsel %vm1150, %v1276, -inf
        %v1281 = vmax.f32 %v1277, %v1278
        %v1282 = vmax.f32 %v1279, %v1280
        %v1283 = vmax.f32 %v1281, %v1282
        %v1284 = vrot.slane %v1283, 4
        %v1285 = vmax.f32 %v1283, %v1284
        %v1286 = vrot.slane %v1285, 2
        %v1287 = vmax.f32 %v1285, %v1286
        %v1288 = vrot.slane %v1287, 1
        %v1289 = vmax.f32 %v1287, %v1288
        %v1290 = vadd.f32 %v1289, 0.0
        %v1291 = vsel %vm1150, %v1249, 0.0
        %v1292 = vsel %vm1150, %v1250, 0.0
        %v1293 = vadd.f32 %v1291, %v1292
        %v1294 = vsel %vm1150, %v1251, 0.0
        %v1295 = vadd.f32 %v1293, %v1294
        %v1296 = vsel %vm1150, %v1252, 0.0
        %v1297 = vadd.f32 %v1295, %v1296
        %v1298 = vrot.slane %v1297, 4
        %v1299 = vadd.f32 %v1297, %v1298
        %v1300 = vrot.slane %v1299, 2
        %v1301 = vadd.f32 %v1299, %v1300
        %v1302 = vrot.slane %v1301, 1
        %v1303 = vadd.f32 %v1301, %v1302
        %v1304 = vmul.f32 %v1303, 0.03846154
        %v1305 = vadd.f32 %v1304, 0.0
        %v1306 = vsel %vm697, %v1257, 0.0
        %1307 = vadd.xlane.f32.xlu0 %v1306
        %v1308 = vpop.xlane.xlu0 %1307
        %v1309 = vsel %vm697, %v1258, 0.0
        %1310 = vadd.xlane.f32.xlu0 %v1309
        %v1311 = vpop.xlane.xlu0 %1310
        %v1312 = vsel %vm697, %v1259, 0.0
        %1313 = vadd.xlane.f32.xlu0 %v1312
        %v1314 = vpop.xlane.xlu0 %1313
        %v1315 = vsel %vm697, %v1260, 0.0
        %1316 = vadd.xlane.f32.xlu0 %v1315
        %v1317 = vpop.xlane.xlu0 %1316
        %v1318 = vmax.f32 %v1308, 1.0
        %v1319 = vmax.f32 %v1311, 1.0
        %v1320 = vmax.f32 %v1314, 1.0
        %v1321 = vmax.f32 %v1317, 1.0
        %v1322 = vrcp.pop %v1318
        %v1323 = vmul.f32 1.0, %v1322
        %v1324 = vrcp.pop %v1319
        %v1325 = vmul.f32 1.0, %v1324
        %v1326 = vrcp.pop %v1320
        %v1327 = vmul.f32 1.0, %v1326
        %v1328 = vrcp.pop %v1321
        %v1329 = vmul.f32 1.0, %v1328
        %v1330 = vmul.f32 %v1257, %v1323
        %v1331 = vmul.f32 %v1258, %v1325
        %v1332 = vmul.f32 %v1259, %v1327
        %v1333 = vmul.f32 %v1260, %v1329
        %v1335 = vsel %vm697, %v1330, 0
        %v1338 = vsel %vm697, %v1331, 0
        %v1341 = vsel %vm697, %v1332, 0
        %v1344 = vsel %vm697, %v1333, 0
        %1346 = vmatprep.subr.mxu0 0.0
        %1347 = vmatpush1.msra.mxu0 0.0
        %1348 = vmatprep.subr.mxu0 0.0
        %1349 = vmatpush1.msra.mxu0 0.0
        %1350 = vmatprep.subr.mxu0 0.0
        %1351 = vmatpush1.msra.mxu0 0.0
        %1352 = vmatprep.subr.mxu0 0.0
        %1353 = vmatpush1.msra.mxu0 0.0
        %1354 = vmatprep.subr.mxu0 0.0
        %1355 = vmatpush1.msra.mxu0 0.0
        %1356 = vmatprep.subr.mxu0 0.0
        %1357 = vmatpush1.msra.mxu0 0.0
        %1358 = vmatprep.subr.mxu0 0.0
        %1359 = vmatpush1.msra.mxu0 0.0
        %1360 = vmatprep.subr.mxu0 0.0
        %1361 = vmatpush1.msra.mxu0 0.0
        %1362 = vmatprep.subr.mxu0 0.0
        %1363 = vmatpush1.msra.mxu0 0.0
        %1364 = vmatprep.subr.mxu0 0.0
        %1365 = vmatpush1.msra.mxu0 0.0
        %1366 = vmatprep.subr.mxu0 0.0
        %1367 = vmatpush1.msra.mxu0 0.0
        %1368 = vmatprep.subr.mxu0 0.0
        %1369 = vmatpush1.msra.mxu0 0.0
        %1370 = vmatprep.subr.mxu0 0.0
        %1371 = vmatpush1.msra.mxu0 %v1252
        %1372 = vmatprep.subr.mxu0 0.0
        %1373 = vmatpush1.msra.mxu0 %v1251
        %1374 = vmatprep.subr.mxu0 0.0
        %1375 = vmatpush1.msra.mxu0 %v1250
        %1376 = vmatprep.subr.mxu0 0.0
        %1377 = vmatpush1.msra.mxu0 %v1249
        %1378 = vmatprep.subr.mxu0 0.0
        %1379 = vmatpush2.msra.mxu0 0.0
        %1380 = vmatprep.subr.mxu0 0.0
        %1381 = vmatpush2.msra.mxu0 0.0
        %1382 = vmatprep.subr.mxu0 0.0
        %1383 = vmatpush2.msra.mxu0 0.0
        %1384 = vmatprep.subr.mxu0 0.0
        %1385 = vmatpush2.msra.mxu0 0.0
        %1386 = vmatprep.subr.mxu0 0.0
        %1387 = vmatpush2.msra.mxu0 0.0
        %1388 = vmatprep.subr.mxu0 0.0
        %1389 = vmatpush2.msra.mxu0 0.0
        %1390 = vmatprep.subr.mxu0 0.0
        %1391 = vmatpush2.msra.mxu0 0.0
        %1392 = vmatprep.subr.mxu0 0.0
        %1393 = vmatpush2.msra.mxu0 0.0
        %1394 = vmatprep.subr.mxu0 0.0
        %1395 = vmatpush2.msra.mxu0 0.0
        %1396 = vmatprep.subr.mxu0 0.0
        %1397 = vmatpush2.msra.mxu0 0.0
        %1398 = vmatprep.subr.mxu0 0.0
        %1399 = vmatpush2.msra.mxu0 0.0
        %1400 = vmatprep.subr.mxu0 0.0
        %1401 = vmatpush2.msra.mxu0 0.0
        %1402 = vmatprep.subr.mxu0 0.0
        %1403 = vmatpush2.msra.mxu0 0.0
        %1404 = vmatprep.subr.mxu0 0.0
        %1405 = vmatpush2.msra.mxu0 0.0
        %1406 = vmatprep.subr.mxu0 0.0
        %1407 = vmatpush2.msra.mxu0 0.0
        %1408 = vmatprep.subr.mxu0 0.0
        %1409 = vmatpush2.msra.mxu0 0.0
        %1410 = vmatprep.mubr.f32.mxu0 0.0
        %1411 = vmatmul.mubr.f32.gmra.mxu0 %v1335
        %v1412 = vpop.f32.mrf.mxu0
        %v1413 = vadd.f32 0.0, %v1412
        %v1414 = vpop.f32.mrf.mxu0
        %1415 = vmatprep.mubr.f32.mxu0 0.0
        %1416 = vmatmul.mubr.f32.gmra.mxu0 %v1338
        %v1417 = vpop.f32.mrf.mxu0
        %v1418 = vadd.f32 0.0, %v1417
        %v1419 = vpop.f32.mrf.mxu0
        %1420 = vmatprep.mubr.f32.mxu0 0.0
        %1421 = vmatmul.mubr.f32.gmra.mxu0 %v1341
        %v1422 = vpop.f32.mrf.mxu0
        %v1423 = vadd.f32 0.0, %v1422
        %v1424 = vpop.f32.mrf.mxu0
        %1425 = vmatprep.mubr.f32.mxu0 0.0
        %1426 = vmatmul.mubr.f32.gmra.mxu0 %v1344
        %v1427 = vpop.f32.mrf.mxu0
        %v1428 = vadd.f32 0.0, %v1427
        %v1429 = vpop.f32.mrf.mxu0
        %1430 = vdwg.mxu0
        %v1431 = vld [vmem:[%s6] sm:$0xff]
        %v1432 = vld [vmem:[%s6 + $0x8] sm:$0xff]
        %v1433 = vld [vmem:[%s6 + $0x10] sm:$0xff]
        %v1434 = vld [vmem:[%s6 + $0x18] sm:$0xff]
        %v1435 = vld [vmem:[%s6 + $0x20] sm:$0xff]
        %v1436 = vld [vmem:[%s6 + $0x28] sm:$0xff]
        %v1437 = vld [vmem:[%s6 + $0x30] sm:$0xff]
        %v1438 = vld [vmem:[%s6 + $0x38] sm:$0xff]
        %v1439 = vld [vmem:[%s7] sm:$0xff]
        %v1440 = vld [vmem:[%s7 + $0x8] sm:$0xff]
        %v1441 = vld [vmem:[%s7 + $0x10] sm:$0xff]
        %v1442 = vld [vmem:[%s7 + $0x18] sm:$0xff]
        %v1443 = vld [vmem:[%s7 + $0x20] sm:$0xff]
        %v1444 = vld [vmem:[%s7 + $0x28] sm:$0xff]
        %v1445 = vld [vmem:[%s7 + $0x30] sm:$0xff]
        %v1446 = vld [vmem:[%s7 + $0x38] sm:$0xff]
        %v1448 = vsel %vm1150, %v1249, 0
        %v1451 = vsel %vm1150, %v1250, 0
        %v1454 = vsel %vm1150, %v1251, 0
        %v1457 = vsel %vm1150, %v1252, 0
        %1459 = vmatprep.subr.mxu0 0.0
        %1460 = vmatpush1.msra.mxu0 0.0
        %1461 = vmatprep.subr.mxu0 0.0
        %1462 = vmatpush1.msra.mxu0 0.0
        %1463 = vmatprep.subr.mxu0 0.0
        %1464 = vmatpush1.msra.mxu0 0.0
        %1465 = vmatprep.subr.mxu0 0.0
        %1466 = vmatpush1.msra.mxu0 0.0
        %1467 = vmatprep.subr.mxu0 0.0
        %1468 = vmatpush1.msra.mxu0 0.0
        %1469 = vmatprep.subr.mxu0 0.0
        %1470 = vmatpush1.msra.mxu0 0.0
        %1471 = vmatprep.subr.mxu0 0.0
        %1472 = vmatpush1.msra.mxu0 0.0
        %1473 = vmatprep.subr.mxu0 0.0
        %1474 = vmatpush1.msra.mxu0 0.0
        %1475 = vmatprep.subr.mxu0 0.0
        %1476 = vmatpush1.msra.mxu0 %v1446
        %1477 = vmatprep.subr.mxu0 0.0
        %1478 = vmatpush1.msra.mxu0 %v1445
        %1479 = vmatprep.subr.mxu0 0.0
        %1480 = vmatpush1.msra.mxu0 %v1444
        %1481 = vmatprep.subr.mxu0 0.0
        %1482 = vmatpush1.msra.mxu0 %v1443
        %1483 = vmatprep.subr.mxu0 0.0
        %1484 = vmatpush1.msra.mxu0 %v1442
        %1485 = vmatprep.subr.mxu0 0.0
        %1486 = vmatpush1.msra.mxu0 %v1441
        %1487 = vmatprep.subr.mxu0 0.0
        %1488 = vmatpush1.msra.mxu0 %v1440
        %1489 = vmatprep.subr.mxu0 0.0
        %1490 = vmatpush1.msra.mxu0 %v1439
        %1491 = vmatprep.subr.mxu0 0.0
        %1492 = vmatpush2.msra.mxu0 0.0
        %1493 = vmatprep.subr.mxu0 0.0
        %1494 = vmatpush2.msra.mxu0 0.0
        %1495 = vmatprep.subr.mxu0 0.0
        %1496 = vmatpush2.msra.mxu0 0.0
        %1497 = vmatprep.subr.mxu0 0.0
        %1498 = vmatpush2.msra.mxu0 0.0
        %1499 = vmatprep.subr.mxu0 0.0
        %1500 = vmatpush2.msra.mxu0 0.0
        %1501 = vmatprep.subr.mxu0 0.0
        %1502 = vmatpush2.msra.mxu0 0.0
        %1503 = vmatprep.subr.mxu0 0.0
        %1504 = vmatpush2.msra.mxu0 0.0
        %1505 = vmatprep.subr.mxu0 0.0
        %1506 = vmatpush2.msra.mxu0 0.0
        %1507 = vmatprep.subr.mxu0 0.0
        %1508 = vmatpush2.msra.mxu0 0.0
        %1509 = vmatprep.subr.mxu0 0.0
        %1510 = vmatpush2.msra.mxu0 0.0
        %1511 = vmatprep.subr.mxu0 0.0
        %1512 = vmatpush2.msra.mxu0 0.0
        %1513 = vmatprep.subr.mxu0 0.0
        %1514 = vmatpush2.msra.mxu0 0.0
        %1515 = vmatprep.subr.mxu0 0.0
        %1516 = vmatpush2.msra.mxu0 0.0
        %1517 = vmatprep.subr.mxu0 0.0
        %1518 = vmatpush2.msra.mxu0 0.0
        %1519 = vmatprep.subr.mxu0 0.0
        %1520 = vmatpush2.msra.mxu0 0.0
        %1521 = vmatprep.subr.mxu0 0.0
        %1522 = vmatpush2.msra.mxu0 0.0
        %1523 = vmatprep.mubr.f32.mxu0 0.0
        %1524 = vmatmul.mubr.f32.gmra.mxu0 %v1448
        %v1525 = vpop.f32.mrf.mxu0
        %v1526 = vadd.f32 0.0, %v1525
        %v1527 = vpop.f32.mrf.mxu0
        %1528 = vmatprep.mubr.f32.mxu0 0.0
        %1529 = vmatmul.mubr.f32.gmra.mxu0 %v1451
        %v1530 = vpop.f32.mrf.mxu0
        %v1531 = vadd.f32 0.0, %v1530
        %v1532 = vpop.f32.mrf.mxu0
        %1533 = vmatprep.mubr.f32.mxu0 0.0
        %1534 = vmatmul.mubr.f32.gmra.mxu0 %v1454
        %v1535 = vpop.f32.mrf.mxu0
        %v1536 = vadd.f32 0.0, %v1535
        %v1537 = vpop.f32.mrf.mxu0
        %1538 = vmatprep.mubr.f32.mxu0 0.0
        %1539 = vmatmul.mubr.f32.gmra.mxu0 %v1457
        %v1540 = vpop.f32.mrf.mxu0
        %v1541 = vadd.f32 0.0, %v1540
        %v1542 = vpop.f32.mrf.mxu0
        %1543 = vdwg.mxu0
        %v1545 = vsel %vm1150, %v1413, 0
        %v1548 = vsel %vm1150, %v1418, 0
        %v1551 = vsel %vm1150, %v1423, 0
        %v1554 = vsel %vm1150, %v1428, 0
        %1556 = vmatprep.subr.mxu0 0.0
        %1557 = vmatpush1.msra.mxu0 0.0
        %1558 = vmatprep.subr.mxu0 0.0
        %1559 = vmatpush1.msra.mxu0 0.0
        %1560 = vmatprep.subr.mxu0 0.0
        %1561 = vmatpush1.msra.mxu0 0.0
        %1562 = vmatprep.subr.mxu0 0.0
        %1563 = vmatpush1.msra.mxu0 0.0
        %1564 = vmatprep.subr.mxu0 0.0
        %1565 = vmatpush1.msra.mxu0 0.0
        %1566 = vmatprep.subr.mxu0 0.0
        %1567 = vmatpush1.msra.mxu0 0.0
        %1568 = vmatprep.subr.mxu0 0.0
        %1569 = vmatpush1.msra.mxu0 0.0
        %1570 = vmatprep.subr.mxu0 0.0
        %1571 = vmatpush1.msra.mxu0 0.0
        %1572 = vmatprep.subr.mxu0 0.0
        %1573 = vmatpush1.msra.mxu0 %v1438
        %1574 = vmatprep.subr.mxu0 0.0
        %1575 = vmatpush1.msra.mxu0 %v1437
        %1576 = vmatprep.subr.mxu0 0.0
        %1577 = vmatpush1.msra.mxu0 %v1436
        %1578 = vmatprep.subr.mxu0 0.0
        %1579 = vmatpush1.msra.mxu0 %v1435
        %1580 = vmatprep.subr.mxu0 0.0
        %1581 = vmatpush1.msra.mxu0 %v1434
        %1582 = vmatprep.subr.mxu0 0.0
        %1583 = vmatpush1.msra.mxu0 %v1433
        %1584 = vmatprep.subr.mxu0 0.0
        %1585 = vmatpush1.msra.mxu0 %v1432
        %1586 = vmatprep.subr.mxu0 0.0
        %1587 = vmatpush1.msra.mxu0 %v1431
        %1588 = vmatprep.subr.mxu0 0.0
        %1589 = vmatpush2.msra.mxu0 0.0
        %1590 = vmatprep.subr.mxu0 0.0
        %1591 = vmatpush2.msra.mxu0 0.0
        %1592 = vmatprep.subr.mxu0 0.0
        %1593 = vmatpush2.msra.mxu0 0.0
        %1594 = vmatprep.subr.mxu0 0.0
        %1595 = vmatpush2.msra.mxu0 0.0
        %1596 = vmatprep.subr.mxu0 0.0
        %1597 = vmatpush2.msra.mxu0 0.0
        %1598 = vmatprep.subr.mxu0 0.0
        %1599 = vmatpush2.msra.mxu0 0.0
        %1600 = vmatprep.subr.mxu0 0.0
        %1601 = vmatpush2.msra.mxu0 0.0
        %1602 = vmatprep.subr.mxu0 0.0
        %1603 = vmatpush2.msra.mxu0 0.0
        %1604 = vmatprep.subr.mxu0 0.0
        %1605 = vmatpush2.msra.mxu0 0.0
        %1606 = vmatprep.subr.mxu0 0.0
        %1607 = vmatpush2.msra.mxu0 0.0
        %1608 = vmatprep.subr.mxu0 0.0
        %1609 = vmatpush2.msra.mxu0 0.0
        %1610 = vmatprep.subr.mxu0 0.0
        %1611 = vmatpush2.msra.mxu0 0.0
        %1612 = vmatprep.subr.mxu0 0.0
        %1613 = vmatpush2.msra.mxu0 0.0
        %1614 = vmatprep.subr.mxu0 0.0
        %1615 = vmatpush2.msra.mxu0 0.0
        %1616 = vmatprep.subr.mxu0 0.0
        %1617 = vmatpush2.msra.mxu0 0.0
        %1618 = vmatprep.subr.mxu0 0.0
        %1619 = vmatpush2.msra.mxu0 0.0
        %1620 = vmatprep.mubr.f32.mxu0 0.0
        %1621 = vmatmul.mubr.f32.gmra.mxu0 %v1545
        %v1622 = vpop.f32.mrf.mxu0
        %v1623 = vadd.f32 %v1526, %v1622
        %v1624 = vpop.f32.mrf.mxu0
        %1625 = vmatprep.mubr.f32.mxu0 0.0
        %1626 = vmatmul.mubr.f32.gmra.mxu0 %v1548
        %v1627 = vpop.f32.mrf.mxu0
        %v1628 = vadd.f32 %v1531, %v1627
        %v1629 = vpop.f32.mrf.mxu0
        %1630 = vmatprep.mubr.f32.mxu0 0.0
        %1631 = vmatmul.mubr.f32.gmra.mxu0 %v1551
        %v1632 = vpop.f32.mrf.mxu0
        %v1633 = vadd.f32 %v1536, %v1632
        %v1634 = vpop.f32.mrf.mxu0
        %1635 = vmatprep.mubr.f32.mxu0 0.0
        %1636 = vmatmul.mubr.f32.gmra.mxu0 %v1554
        %v1637 = vpop.f32.mrf.mxu0
        %v1638 = vadd.f32 %v1541, %v1637
        %v1639 = vpop.f32.mrf.mxu0
        %1640 = vdwg.mxu0
        %v1641 = vld [vmem:[%s8] sm:$0x1]
        %v1643 = vlaneseq
        %v1644 = vshrl.u32 %v1643, 7
        %v1645 = vsub.s32 0, %v1644
        %v1646 = vrot.slane %v1641, %v1645
        %v1648 = vadd.f32 %v1623, %v1646
        %v1649 = vadd.f32 %v1628, %v1646
        %v1650 = vadd.f32 %v1633, %v1646
        %v1651 = vadd.f32 %v1638, %v1646
        %v1652 = vmul.f32 %v1648, 0.5
        %v1653 = vmul.f32 %v1649, 0.5
        %v1654 = vmul.f32 %v1650, 0.5
        %v1655 = vmul.f32 %v1651, 0.5
        %v1656 = vmul.f32 %v1648, 0.70710677
        %v1657 = vmul.f32 %v1649, 0.70710677
        %v1658 = vmul.f32 %v1650, 0.70710677
        %v1659 = vmul.f32 %v1651, 0.70710677
        %vm1660 = vcmp.ge.f32.partialorder %v1656, 0.0
        %vm1661 = vcmp.ge.f32.partialorder %v1657, 0.0
        %vm1662 = vcmp.ge.f32.partialorder %v1658, 0.0
        %vm1663 = vcmp.ge.f32.partialorder %v1659, 0.0
        %v1664 = vsel %vm1660, 1.0, -1.0
        %v1665 = vsel %vm1661, 1.0, -1.0
        %v1666 = vsel %vm1662, 1.0, -1.0
        %v1667 = vsel %vm1663, 1.0, -1.0
        %v1668 = vand.u32 2147483647, %v1656
        %v1669 = vand.u32 2147483647, %v1657
        %v1670 = vand.u32 2147483647, %v1658
        %v1671 = vand.u32 2147483647, %v1659
        %v1672 = vmul.f32 %v1668, 0.3275911
        %v1673 = vmul.f32 %v1669, 0.3275911
        %v1674 = vmul.f32 %v1670, 0.3275911
        %v1675 = vmul.f32 %v1671, 0.3275911
        %v1676 = vadd.f32 %v1672, 1.0
        %v1677 = vadd.f32 %v1673, 1.0
        %v1678 = vadd.f32 %v1674, 1.0
        %v1679 = vadd.f32 %v1675, 1.0
        %v1680 = vrcp.pop %v1676
        %v1681 = vmul.f32 1.0, %v1680
        %v1682 = vrcp.pop %v1677
        %v1683 = vmul.f32 1.0, %v1682
        %v1684 = vrcp.pop %v1678
        %v1685 = vmul.f32 1.0, %v1684
        %v1686 = vrcp.pop %v1679
        %v1687 = vmul.f32 1.0, %v1686
        %v1688 = vmul.f32 %v1681, 1.0614054
        %v1689 = vmul.f32 %v1683, 1.0614054
        %v1690 = vmul.f32 %v1685, 1.0614054
        %v1691 = vmul.f32 %v1687, 1.0614054
        %v1692 = vadd.f32 %v1688, -1.4531521
        %v1693 = vadd.f32 %v1689, -1.4531521
        %v1694 = vadd.f32 %v1690, -1.4531521
        %v1695 = vadd.f32 %v1691, -1.4531521
        %v1696 = vmul.f32 %v1692, %v1681
        %v1697 = vmul.f32 %v1693, %v1683
        %v1698 = vmul.f32 %v1694, %v1685
        %v1699 = vmul.f32 %v1695, %v1687
        %v1700 = vadd.f32 %v1696, 1.4214138
        %v1701 = vadd.f32 %v1697, 1.4214138
        %v1702 = vadd.f32 %v1698, 1.4214138
        %v1703 = vadd.f32 %v1699, 1.4214138
        %v1704 = vmul.f32 %v1700, %v1681
        %v1705 = vmul.f32 %v1701, %v1683
        %v1706 = vmul.f32 %v1702, %v1685
        %v1707 = vmul.f32 %v1703, %v1687
        %v1708 = vadd.f32 %v1704, -0.28449672
        %v1709 = vadd.f32 %v1705, -0.28449672
        %v1710 = vadd.f32 %v1706, -0.28449672
        %v1711 = vadd.f32 %v1707, -0.28449672
        %v1712 = vmul.f32 %v1708, %v1681
        %v1713 = vmul.f32 %v1709, %v1683
        %v1714 = vmul.f32 %v1710, %v1685
        %v1715 = vmul.f32 %v1711, %v1687
        %v1716 = vadd.f32 %v1712, 0.2548296
        %v1717 = vadd.f32 %v1713, 0.2548296
        %v1718 = vadd.f32 %v1714, 0.2548296
        %v1719 = vadd.f32 %v1715, 0.2548296
        %v1720 = vmul.f32 %v1716, %v1681
        %v1721 = vmul.f32 %v1717, %v1683
        %v1722 = vmul.f32 %v1718, %v1685
        %v1723 = vmul.f32 %v1719, %v1687
        %v1724 = vsub.f32 0.0, %v1668
        %v1725 = vsub.f32 0.0, %v1669
        %v1726 = vsub.f32 0.0, %v1670
        %v1727 = vsub.f32 0.0, %v1671
        %v1728 = vmul.f32 %v1724, %v1668
        %v1729 = vmul.f32 %v1725, %v1669
        %v1730 = vmul.f32 %v1726, %v1670
        %v1731 = vmul.f32 %v1727, %v1671
        %v1732 = vmul.f32 %v1728, 1.442695
        %v1733 = vpow.pop %v1732
        %v1734 = vmul.f32 %v1729, 1.442695
        %v1735 = vpow.pop %v1734
        %v1736 = vmul.f32 %v1730, 1.442695
        %v1737 = vpow.pop %v1736
        %v1738 = vmul.f32 %v1731, 1.442695
        %v1739 = vpow.pop %v1738
        %v1740 = vmul.f32 %v1720, %v1733
        %v1741 = vmul.f32 %v1721, %v1735
        %v1742 = vmul.f32 %v1722, %v1737
        %v1743 = vmul.f32 %v1723, %v1739
        %v1744 = vsub.f32 1.0, %v1740
        %v1745 = vsub.f32 1.0, %v1741
        %v1746 = vsub.f32 1.0, %v1742
        %v1747 = vsub.f32 1.0, %v1743
        %v1748 = vmul.f32 %v1664, %v1744
        %v1749 = vmul.f32 %v1665, %v1745
        %v1750 = vmul.f32 %v1666, %v1746
        %v1751 = vmul.f32 %v1667, %v1747
        %v1752 = vadd.f32 %v1748, 1.0
        %v1753 = vadd.f32 %v1749, 1.0
        %v1754 = vadd.f32 %v1750, 1.0
        %v1755 = vadd.f32 %v1751, 1.0
        %v1756 = vmul.f32 %v1652, %v1752
        %v1757 = vmul.f32 %v1653, %v1753
        %v1758 = vmul.f32 %v1654, %v1754
        %v1759 = vmul.f32 %v1655, %v1755
        %v1760 = vld [vmem:[%s9] sm:$0x1]
        %v1762 = vlaneseq
        %v1763 = vshrl.u32 %v1762, 7
        %v1764 = vsub.s32 0, %v1763
        %v1765 = vrot.slane %v1760, %v1764
        %v1767 = vmul.f32 %v1756, %v1765
        %v1768 = vmul.f32 %v1757, %v1765
        %v1769 = vmul.f32 %v1758, %v1765
        %v1770 = vmul.f32 %v1759, %v1765
        %v1771 = vsel %vm1150, %v1767, 0.0
        %1772 = vadd.xlane.f32.xlu0 %v1771
        %v1773 = vpop.xlane.xlu0 %1772
        %v1774 = vsel %vm1150, %v1768, 0.0
        %1775 = vadd.xlane.f32.xlu0 %v1774
        %v1776 = vpop.xlane.xlu0 %1775
        %v1777 = vsel %vm1150, %v1769, 0.0
        %1778 = vadd.xlane.f32.xlu0 %v1777
        %v1779 = vpop.xlane.xlu0 %1778
        %v1780 = vsel %vm1150, %v1770, 0.0
        %1781 = vadd.xlane.f32.xlu0 %v1780
        %v1782 = vpop.xlane.xlu0 %1781
        %v1783 = vtanh.pop %v1773
        %v1784 = vtanh.pop %v1776
        %v1785 = vtanh.pop %v1779
        %v1786 = vtanh.pop %v1782
        %v1787 = vsel %vm689, %v1783, 0.0
        %v1788 = vsel %vm690, %v1784, 0.0
        %v1789 = vsel %vm691, %v1785, 0.0
        %v1790 = vsel %vm692, %v1786, 0.0
        %v1791 = vsel %vm697, %v1787, 0.0
        %v1792 = vsel %vm697, %v1788, 0.0
        %v1793 = vadd.f32 %v1791, %v1792
        %v1794 = vsel %vm697, %v1789, 0.0
        %v1795 = vadd.f32 %v1793, %v1794
        %v1796 = vsel %vm697, %v1790, 0.0
        %v1797 = vadd.f32 %v1795, %v1796
        %v1798 = vrot.slane %v1797, 4
        %v1799 = vadd.f32 %v1797, %v1798
        %v1800 = vrot.slane %v1799, 2
        %v1801 = vadd.f32 %v1799, %v1800
        %v1802 = vrot.slane %v1801, 1
        %v1803 = vadd.f32 %v1801, %v1802
        %vm1804 = vcmp.gt.f32.partialorder %v1803, %v1783
        %vm1805 = vcmp.gt.f32.partialorder %v1803, %v1784
        %vm1806 = vcmp.gt.f32.partialorder %v1803, %v1785
        %vm1807 = vcmp.gt.f32.partialorder %v1803, %v1786
        %vm1808 = vcmp.eq.f32.partialorder %v1803, %v1783
        %vm1809 = vcmp.eq.f32.partialorder %v1803, %v1784
        %vm1810 = vcmp.eq.f32.partialorder %v1803, %v1785
        %vm1811 = vcmp.eq.f32.partialorder %v1803, %v1786
        %vm1812 = vmand %vm1808, %vm693
        %vm1813 = vmand %vm1809, %vm694
        %vm1814 = vmand %vm1810, %vm695
        %vm1815 = vmand %vm1811, %vm696
        %vm1816 = vmor %vm1804, %vm1812
        %vm1817 = vmor %vm1805, %vm1813
        %vm1818 = vmor %vm1806, %vm1814
        %vm1819 = vmor %vm1807, %vm1815
        %v1820 = vsel %vm1816, 1.0, 0.0
        %v1821 = vsel %vm1817, 1.0, 0.0
        %v1822 = vsel %vm1818, 1.0, 0.0
        %v1823 = vsel %vm1819, 1.0, 0.0
        %v1824 = vmul.f32 %v1820, %v1244
        %v1825 = vmul.f32 %v1821, %v1244
        %v1826 = vmul.f32 %v1822, %v1244
        %v1827 = vmul.f32 %v1823, %v1244
        %v1828 = vsel %vm697, %v1824, 0.0
        %1829 = vadd.xlane.f32.xlu0 %v1828
        %v1830 = vpop.xlane.xlu0 %1829
        %v1831 = vsel %vm697, %v1825, 0.0
        %1832 = vadd.xlane.f32.xlu0 %v1831
        %v1833 = vpop.xlane.xlu0 %1832
        %v1834 = vsel %vm697, %v1826, 0.0
        %1835 = vadd.xlane.f32.xlu0 %v1834
        %v1836 = vpop.xlane.xlu0 %1835
        %v1837 = vsel %vm697, %v1827, 0.0
        %1838 = vadd.xlane.f32.xlu0 %v1837
        %v1839 = vpop.xlane.xlu0 %1838
        %vm1840 = vcmp.lt.f32.partialorder %v1830, 21.0
        %vm1841 = vcmp.lt.f32.partialorder %v1833, 21.0
        %vm1842 = vcmp.lt.f32.partialorder %v1836, 21.0
        %vm1843 = vcmp.lt.f32.partialorder %v1839, 21.0
        %v1844 = vsel %vm1840, 1, 0
        %v1845 = vsel %vm1841, 1, 0
        %v1846 = vsel %vm1842, 1, 0
        %v1847 = vsel %vm1843, 1, 0
        %v1848 = vcvt.s32.f32 %v1844
        %v1849 = vcvt.s32.f32 %v1845
        %v1850 = vcvt.s32.f32 %v1846
        %v1851 = vcvt.s32.f32 %v1847
        %v1852 = vmul.f32 %v1224, %v1848
        %v1853 = vmul.f32 %v1225, %v1849
        %v1854 = vmul.f32 %v1226, %v1850
        %v1855 = vmul.f32 %v1227, %v1851
        %v1856 = vsel %vm689, %v1852, 0.0
        %v1857 = vsel %vm690, %v1853, 0.0
        %v1858 = vsel %vm691, %v1854, 0.0
        %v1859 = vsel %vm692, %v1855, 0.0
        %v1860 = vsel %vm697, %v1856, 0.0
        %v1861 = vsel %vm697, %v1857, 0.0
        %v1862 = vadd.f32 %v1860, %v1861
        %v1863 = vsel %vm697, %v1858, 0.0
        %v1864 = vadd.f32 %v1862, %v1863
        %v1865 = vsel %vm697, %v1859, 0.0
        %v1866 = vadd.f32 %v1864, %v1865
        %v1867 = vrot.slane %v1866, 4
        %v1868 = vadd.f32 %v1866, %v1867
        %v1869 = vrot.slane %v1868, 2
        %v1870 = vadd.f32 %v1868, %v1869
        %v1871 = vrot.slane %v1870, 1
        %v1872 = vadd.f32 %v1870, %v1871
        %v1873 = vmul.f32 %v1756, %v1783
        %v1874 = vmul.f32 %v1757, %v1784
        %v1875 = vmul.f32 %v1758, %v1785
        %v1876 = vmul.f32 %v1759, %v1786
        %v1877 = vmul.f32 %v1873, %v1852
        %v1878 = vmul.f32 %v1874, %v1853
        %v1879 = vmul.f32 %v1875, %v1854
        %v1880 = vmul.f32 %v1876, %v1855
        %v1881 = vmul.f32 %v1257, %v1852
        %v1882 = vmul.f32 %v1258, %v1853
        %v1883 = vmul.f32 %v1259, %v1854
        %v1884 = vmul.f32 %v1260, %v1855
        %v1885 = vmul.f32 %v1881, %v1872
        %v1886 = vmul.f32 %v1882, %v1872
        %v1887 = vmul.f32 %v1883, %v1872
        %v1888 = vmul.f32 %v1884, %v1872
        %vm1889 = vcmp.gt.f32.partialorder %v1852, 0.5
        %vm1890 = vcmp.gt.f32.partialorder %v1853, 0.5
        %vm1891 = vcmp.gt.f32.partialorder %v1854, 0.5
        %vm1892 = vcmp.gt.f32.partialorder %v1855, 0.5
        %v1893 = vsel %vm1889, 1, 0
        %v1894 = vsel %vm1890, 1, 0
        %v1895 = vsel %vm1891, 1, 0
        %v1896 = vsel %vm1892, 1, 0
        %vm1897 = vcmp.eq.s32.totalorder %v1893, 1
        %vm1898 = vcmp.eq.s32.totalorder %v1894, 1
        %vm1899 = vcmp.eq.s32.totalorder %v1895, 1
        %vm1900 = vcmp.eq.s32.totalorder %v1896, 1
        %v1901 = vsel %vm1897, %v1877, -inf
        %v1902 = vsel %vm1898, %v1878, -inf
        %v1903 = vsel %vm1899, %v1879, -inf
        %v1904 = vsel %vm1900, %v1880, -inf
        %v1905 = vsel %vm1150, %v1901, -inf
        %v1906 = vsel %vm1150, %v1902, -inf
        %v1907 = vsel %vm1150, %v1903, -inf
        %v1908 = vsel %vm1150, %v1904, -inf
        %v1909 = vmax.f32 %v1905, %v1906
        %v1910 = vmax.f32 %v1907, %v1908
        %v1911 = vmax.f32 %v1909, %v1910
        %v1912 = vrot.slane %v1911, 4
        %v1913 = vmax.f32 %v1911, %v1912
        %v1914 = vrot.slane %v1913, 2
        %v1915 = vmax.f32 %v1913, %v1914
        %v1916 = vrot.slane %v1915, 1
        %v1917 = vmax.f32 %v1915, %v1916
        %v1918 = vadd.f32 %v1290, %v1917
        %v1919 = vsel %vm1150, %v1877, 0.0
        %v1920 = vsel %vm1150, %v1878, 0.0
        %v1921 = vadd.f32 %v1919, %v1920
        %v1922 = vsel %vm1150, %v1879, 0.0
        %v1923 = vadd.f32 %v1921, %v1922
        %v1924 = vsel %vm1150, %v1880, 0.0
        %v1925 = vadd.f32 %v1923, %v1924
        %v1926 = vrot.slane %v1925, 4
        %v1927 = vadd.f32 %v1925, %v1926
        %v1928 = vrot.slane %v1927, 2
        %v1929 = vadd.f32 %v1927, %v1928
        %v1930 = vrot.slane %v1929, 1
        %v1931 = vadd.f32 %v1929, %v1930
        %v1932 = vmul.f32 %v1931, 0.04761905
        %v1933 = vadd.f32 %v1305, %v1932
        %v1934 = vsel %vm697, %v1885, 0.0
        %1935 = vadd.xlane.f32.xlu0 %v1934
        %v1936 = vpop.xlane.xlu0 %1935
        %v1937 = vsel %vm697, %v1886, 0.0
        %1938 = vadd.xlane.f32.xlu0 %v1937
        %v1939 = vpop.xlane.xlu0 %1938
        %v1940 = vsel %vm697, %v1887, 0.0
        %1941 = vadd.xlane.f32.xlu0 %v1940
        %v1942 = vpop.xlane.xlu0 %1941
        %v1943 = vsel %vm697, %v1888, 0.0
        %1944 = vadd.xlane.f32.xlu0 %v1943
        %v1945 = vpop.xlane.xlu0 %1944
        %v1946 = vmax.f32 %v1936, 1.0
        %v1947 = vmax.f32 %v1939, 1.0
        %v1948 = vmax.f32 %v1942, 1.0
        %v1949 = vmax.f32 %v1945, 1.0
        %v1950 = vrcp.pop %v1946
        %v1951 = vmul.f32 1.0, %v1950
        %v1952 = vrcp.pop %v1947
        %v1953 = vmul.f32 1.0, %v1952
        %v1954 = vrcp.pop %v1948
        %v1955 = vmul.f32 1.0, %v1954
        %v1956 = vrcp.pop %v1949
        %v1957 = vmul.f32 1.0, %v1956
        %v1958 = vmul.f32 %v1885, %v1951
        %v1959 = vmul.f32 %v1886, %v1953
        %v1960 = vmul.f32 %v1887, %v1955
        %v1961 = vmul.f32 %v1888, %v1957
        %v1963 = vsel %vm697, %v1958, 0
        %v1966 = vsel %vm697, %v1959, 0
        %v1969 = vsel %vm697, %v1960, 0
        %v1972 = vsel %vm697, %v1961, 0
        %1974 = vmatprep.subr.mxu0 0.0
        %1975 = vmatpush1.msra.mxu0 0.0
        %1976 = vmatprep.subr.mxu0 0.0
        %1977 = vmatpush1.msra.mxu0 0.0
        %1978 = vmatprep.subr.mxu0 0.0
        %1979 = vmatpush1.msra.mxu0 0.0
        %1980 = vmatprep.subr.mxu0 0.0
        %1981 = vmatpush1.msra.mxu0 0.0
        %1982 = vmatprep.subr.mxu0 0.0
        %1983 = vmatpush1.msra.mxu0 0.0
        %1984 = vmatprep.subr.mxu0 0.0
        %1985 = vmatpush1.msra.mxu0 0.0
        %1986 = vmatprep.subr.mxu0 0.0
        %1987 = vmatpush1.msra.mxu0 0.0
        %1988 = vmatprep.subr.mxu0 0.0
        %1989 = vmatpush1.msra.mxu0 0.0
        %1990 = vmatprep.subr.mxu0 0.0
        %1991 = vmatpush1.msra.mxu0 0.0
        %1992 = vmatprep.subr.mxu0 0.0
        %1993 = vmatpush1.msra.mxu0 0.0
        %1994 = vmatprep.subr.mxu0 0.0
        %1995 = vmatpush1.msra.mxu0 0.0
        %1996 = vmatprep.subr.mxu0 0.0
        %1997 = vmatpush1.msra.mxu0 0.0
        %1998 = vmatprep.subr.mxu0 0.0
        %1999 = vmatpush1.msra.mxu0 %v1880
        %2000 = vmatprep.subr.mxu0 0.0
        %2001 = vmatpush1.msra.mxu0 %v1879
        %2002 = vmatprep.subr.mxu0 0.0
        %2003 = vmatpush1.msra.mxu0 %v1878
        %2004 = vmatprep.subr.mxu0 0.0
        %2005 = vmatpush1.msra.mxu0 %v1877
        %2006 = vmatprep.subr.mxu0 0.0
        %2007 = vmatpush2.msra.mxu0 0.0
        %2008 = vmatprep.subr.mxu0 0.0
        %2009 = vmatpush2.msra.mxu0 0.0
        %2010 = vmatprep.subr.mxu0 0.0
        %2011 = vmatpush2.msra.mxu0 0.0
        %2012 = vmatprep.subr.mxu0 0.0
        %2013 = vmatpush2.msra.mxu0 0.0
        %2014 = vmatprep.subr.mxu0 0.0
        %2015 = vmatpush2.msra.mxu0 0.0
        %2016 = vmatprep.subr.mxu0 0.0
        %2017 = vmatpush2.msra.mxu0 0.0
        %2018 = vmatprep.subr.mxu0 0.0
        %2019 = vmatpush2.msra.mxu0 0.0
        %2020 = vmatprep.subr.mxu0 0.0
        %2021 = vmatpush2.msra.mxu0 0.0
        %2022 = vmatprep.subr.mxu0 0.0
        %2023 = vmatpush2.msra.mxu0 0.0
        %2024 = vmatprep.subr.mxu0 0.0
        %2025 = vmatpush2.msra.mxu0 0.0
        %2026 = vmatprep.subr.mxu0 0.0
        %2027 = vmatpush2.msra.mxu0 0.0
        %2028 = vmatprep.subr.mxu0 0.0
        %2029 = vmatpush2.msra.mxu0 0.0
        %2030 = vmatprep.subr.mxu0 0.0
        %2031 = vmatpush2.msra.mxu0 0.0
        %2032 = vmatprep.subr.mxu0 0.0
        %2033 = vmatpush2.msra.mxu0 0.0
        %2034 = vmatprep.subr.mxu0 0.0
        %2035 = vmatpush2.msra.mxu0 0.0
        %2036 = vmatprep.subr.mxu0 0.0
        %2037 = vmatpush2.msra.mxu0 0.0
        %2038 = vmatprep.mubr.f32.mxu0 0.0
        %2039 = vmatmul.mubr.f32.gmra.mxu0 %v1963
        %v2040 = vpop.f32.mrf.mxu0
        %v2041 = vadd.f32 0.0, %v2040
        %v2042 = vpop.f32.mrf.mxu0
        %2043 = vmatprep.mubr.f32.mxu0 0.0
        %2044 = vmatmul.mubr.f32.gmra.mxu0 %v1966
        %v2045 = vpop.f32.mrf.mxu0
        %v2046 = vadd.f32 0.0, %v2045
        %v2047 = vpop.f32.mrf.mxu0
        %2048 = vmatprep.mubr.f32.mxu0 0.0
        %2049 = vmatmul.mubr.f32.gmra.mxu0 %v1969
        %v2050 = vpop.f32.mrf.mxu0
        %v2051 = vadd.f32 0.0, %v2050
        %v2052 = vpop.f32.mrf.mxu0
        %2053 = vmatprep.mubr.f32.mxu0 0.0
        %2054 = vmatmul.mubr.f32.gmra.mxu0 %v1972
        %v2055 = vpop.f32.mrf.mxu0
        %v2056 = vadd.f32 0.0, %v2055
        %v2057 = vpop.f32.mrf.mxu0
        %2058 = vdwg.mxu0
        %v2059 = vld [vmem:[%s10] sm:$0xff]
        %v2060 = vld [vmem:[%s10 + $0x8] sm:$0xff]
        %v2061 = vld [vmem:[%s10 + $0x10] sm:$0xff]
        %v2062 = vld [vmem:[%s10 + $0x18] sm:$0xff]
        %v2063 = vld [vmem:[%s10 + $0x20] sm:$0xff]
        %v2064 = vld [vmem:[%s10 + $0x28] sm:$0xff]
        %v2065 = vld [vmem:[%s10 + $0x30] sm:$0xff]
        %v2066 = vld [vmem:[%s10 + $0x38] sm:$0xff]
        %v2067 = vld [vmem:[%s11] sm:$0xff]
        %v2068 = vld [vmem:[%s11 + $0x8] sm:$0xff]
        %v2069 = vld [vmem:[%s11 + $0x10] sm:$0xff]
        %v2070 = vld [vmem:[%s11 + $0x18] sm:$0xff]
        %v2071 = vld [vmem:[%s11 + $0x20] sm:$0xff]
        %v2072 = vld [vmem:[%s11 + $0x28] sm:$0xff]
        %v2073 = vld [vmem:[%s11 + $0x30] sm:$0xff]
        %v2074 = vld [vmem:[%s11 + $0x38] sm:$0xff]
        %v2076 = vsel %vm1150, %v1877, 0
        %v2079 = vsel %vm1150, %v1878, 0
        %v2082 = vsel %vm1150, %v1879, 0
        %v2085 = vsel %vm1150, %v1880, 0
        %2087 = vmatprep.subr.mxu0 0.0
        %2088 = vmatpush1.msra.mxu0 0.0
        %2089 = vmatprep.subr.mxu0 0.0
        %2090 = vmatpush1.msra.mxu0 0.0
        %2091 = vmatprep.subr.mxu0 0.0
        %2092 = vmatpush1.msra.mxu0 0.0
        %2093 = vmatprep.subr.mxu0 0.0
        %2094 = vmatpush1.msra.mxu0 0.0
        %2095 = vmatprep.subr.mxu0 0.0
        %2096 = vmatpush1.msra.mxu0 0.0
        %2097 = vmatprep.subr.mxu0 0.0
        %2098 = vmatpush1.msra.mxu0 0.0
        %2099 = vmatprep.subr.mxu0 0.0
        %2100 = vmatpush1.msra.mxu0 0.0
        %2101 = vmatprep.subr.mxu0 0.0
        %2102 = vmatpush1.msra.mxu0 0.0
        %2103 = vmatprep.subr.mxu0 0.0
        %2104 = vmatpush1.msra.mxu0 %v2074
        %2105 = vmatprep.subr.mxu0 0.0
        %2106 = vmatpush1.msra.mxu0 %v2073
        %2107 = vmatprep.subr.mxu0 0.0
        %2108 = vmatpush1.msra.mxu0 %v2072
        %2109 = vmatprep.subr.mxu0 0.0
        %2110 = vmatpush1.msra.mxu0 %v2071
        %2111 = vmatprep.subr.mxu0 0.0
        %2112 = vmatpush1.msra.mxu0 %v2070
        %2113 = vmatprep.subr.mxu0 0.0
        %2114 = vmatpush1.msra.mxu0 %v2069
        %2115 = vmatprep.subr.mxu0 0.0
        %2116 = vmatpush1.msra.mxu0 %v2068
        %2117 = vmatprep.subr.mxu0 0.0
        %2118 = vmatpush1.msra.mxu0 %v2067
        %2119 = vmatprep.subr.mxu0 0.0
        %2120 = vmatpush2.msra.mxu0 0.0
        %2121 = vmatprep.subr.mxu0 0.0
        %2122 = vmatpush2.msra.mxu0 0.0
        %2123 = vmatprep.subr.mxu0 0.0
        %2124 = vmatpush2.msra.mxu0 0.0
        %2125 = vmatprep.subr.mxu0 0.0
        %2126 = vmatpush2.msra.mxu0 0.0
        %2127 = vmatprep.subr.mxu0 0.0
        %2128 = vmatpush2.msra.mxu0 0.0
        %2129 = vmatprep.subr.mxu0 0.0
        %2130 = vmatpush2.msra.mxu0 0.0
        %2131 = vmatprep.subr.mxu0 0.0
        %2132 = vmatpush2.msra.mxu0 0.0
        %2133 = vmatprep.subr.mxu0 0.0
        %2134 = vmatpush2.msra.mxu0 0.0
        %2135 = vmatprep.subr.mxu0 0.0
        %2136 = vmatpush2.msra.mxu0 0.0
        %2137 = vmatprep.subr.mxu0 0.0
        %2138 = vmatpush2.msra.mxu0 0.0
        %2139 = vmatprep.subr.mxu0 0.0
        %2140 = vmatpush2.msra.mxu0 0.0
        %2141 = vmatprep.subr.mxu0 0.0
        %2142 = vmatpush2.msra.mxu0 0.0
        %2143 = vmatprep.subr.mxu0 0.0
        %2144 = vmatpush2.msra.mxu0 0.0
        %2145 = vmatprep.subr.mxu0 0.0
        %2146 = vmatpush2.msra.mxu0 0.0
        %2147 = vmatprep.subr.mxu0 0.0
        %2148 = vmatpush2.msra.mxu0 0.0
        %2149 = vmatprep.subr.mxu0 0.0
        %2150 = vmatpush2.msra.mxu0 0.0
        %2151 = vmatprep.mubr.f32.mxu0 0.0
        %2152 = vmatmul.mubr.f32.gmra.mxu0 %v2076
        %v2153 = vpop.f32.mrf.mxu0
        %v2154 = vadd.f32 0.0, %v2153
        %v2155 = vpop.f32.mrf.mxu0
        %2156 = vmatprep.mubr.f32.mxu0 0.0
        %2157 = vmatmul.mubr.f32.gmra.mxu0 %v2079
        %v2158 = vpop.f32.mrf.mxu0
        %v2159 = vadd.f32 0.0, %v2158
        %v2160 = vpop.f32.mrf.mxu0
        %2161 = vmatprep.mubr.f32.mxu0 0.0
        %2162 = vmatmul.mubr.f32.gmra.mxu0 %v2082
        %v2163 = vpop.f32.mrf.mxu0
        %v2164 = vadd.f32 0.0, %v2163
        %v2165 = vpop.f32.mrf.mxu0
        %2166 = vmatprep.mubr.f32.mxu0 0.0
        %2167 = vmatmul.mubr.f32.gmra.mxu0 %v2085
        %v2168 = vpop.f32.mrf.mxu0
        %v2169 = vadd.f32 0.0, %v2168
        %v2170 = vpop.f32.mrf.mxu0
        %2171 = vdwg.mxu0
        %v2173 = vsel %vm1150, %v2041, 0
        %v2176 = vsel %vm1150, %v2046, 0
        %v2179 = vsel %vm1150, %v2051, 0
        %v2182 = vsel %vm1150, %v2056, 0
        %2184 = vmatprep.subr.mxu0 0.0
        %2185 = vmatpush1.msra.mxu0 0.0
        %2186 = vmatprep.subr.mxu0 0.0
        %2187 = vmatpush1.msra.mxu0 0.0
        %2188 = vmatprep.subr.mxu0 0.0
        %2189 = vmatpush1.msra.mxu0 0.0
        %2190 = vmatprep.subr.mxu0 0.0
        %2191 = vmatpush1.msra.mxu0 0.0
        %2192 = vmatprep.subr.mxu0 0.0
        %2193 = vmatpush1.msra.mxu0 0.0
        %2194 = vmatprep.subr.mxu0 0.0
        %2195 = vmatpush1.msra.mxu0 0.0
        %2196 = vmatprep.subr.mxu0 0.0
        %2197 = vmatpush1.msra.mxu0 0.0
        %2198 = vmatprep.subr.mxu0 0.0
        %2199 = vmatpush1.msra.mxu0 0.0
        %2200 = vmatprep.subr.mxu0 0.0
        %2201 = vmatpush1.msra.mxu0 %v2066
        %2202 = vmatprep.subr.mxu0 0.0
        %2203 = vmatpush1.msra.mxu0 %v2065
        %2204 = vmatprep.subr.mxu0 0.0
        %2205 = vmatpush1.msra.mxu0 %v2064
        %2206 = vmatprep.subr.mxu0 0.0
        %2207 = vmatpush1.msra.mxu0 %v2063
        %2208 = vmatprep.subr.mxu0 0.0
        %2209 = vmatpush1.msra.mxu0 %v2062
        %2210 = vmatprep.subr.mxu0 0.0
        %2211 = vmatpush1.msra.mxu0 %v2061
        %2212 = vmatprep.subr.mxu0 0.0
        %2213 = vmatpush1.msra.mxu0 %v2060
        %2214 = vmatprep.subr.mxu0 0.0
        %2215 = vmatpush1.msra.mxu0 %v2059
        %2216 = vmatprep.subr.mxu0 0.0
        %2217 = vmatpush2.msra.mxu0 0.0
        %2218 = vmatprep.subr.mxu0 0.0
        %2219 = vmatpush2.msra.mxu0 0.0
        %2220 = vmatprep.subr.mxu0 0.0
        %2221 = vmatpush2.msra.mxu0 0.0
        %2222 = vmatprep.subr.mxu0 0.0
        %2223 = vmatpush2.msra.mxu0 0.0
        %2224 = vmatprep.subr.mxu0 0.0
        %2225 = vmatpush2.msra.mxu0 0.0
        %2226 = vmatprep.subr.mxu0 0.0
        %2227 = vmatpush2.msra.mxu0 0.0
        %2228 = vmatprep.subr.mxu0 0.0
        %2229 = vmatpush2.msra.mxu0 0.0
        %2230 = vmatprep.subr.mxu0 0.0
        %2231 = vmatpush2.msra.mxu0 0.0
        %2232 = vmatprep.subr.mxu0 0.0
        %2233 = vmatpush2.msra.mxu0 0.0
        %2234 = vmatprep.subr.mxu0 0.0
        %2235 = vmatpush2.msra.mxu0 0.0
        %2236 = vmatprep.subr.mxu0 0.0
        %2237 = vmatpush2.msra.mxu0 0.0
        %2238 = vmatprep.subr.mxu0 0.0
        %2239 = vmatpush2.msra.mxu0 0.0
        %2240 = vmatprep.subr.mxu0 0.0
        %2241 = vmatpush2.msra.mxu0 0.0
        %2242 = vmatprep.subr.mxu0 0.0
        %2243 = vmatpush2.msra.mxu0 0.0
        %2244 = vmatprep.subr.mxu0 0.0
        %2245 = vmatpush2.msra.mxu0 0.0
        %2246 = vmatprep.subr.mxu0 0.0
        %2247 = vmatpush2.msra.mxu0 0.0
        %2248 = vmatprep.mubr.f32.mxu0 0.0
        %2249 = vmatmul.mubr.f32.gmra.mxu0 %v2173
        %v2250 = vpop.f32.mrf.mxu0
        %v2251 = vadd.f32 %v2154, %v2250
        %v2252 = vpop.f32.mrf.mxu0
        %2253 = vmatprep.mubr.f32.mxu0 0.0
        %2254 = vmatmul.mubr.f32.gmra.mxu0 %v2176
        %v2255 = vpop.f32.mrf.mxu0
        %v2256 = vadd.f32 %v2159, %v2255
        %v2257 = vpop.f32.mrf.mxu0
        %2258 = vmatprep.mubr.f32.mxu0 0.0
        %2259 = vmatmul.mubr.f32.gmra.mxu0 %v2179
        %v2260 = vpop.f32.mrf.mxu0
        %v2261 = vadd.f32 %v2164, %v2260
        %v2262 = vpop.f32.mrf.mxu0
        %2263 = vmatprep.mubr.f32.mxu0 0.0
        %2264 = vmatmul.mubr.f32.gmra.mxu0 %v2182
        %v2265 = vpop.f32.mrf.mxu0
        %v2266 = vadd.f32 %v2169, %v2265
        %v2267 = vpop.f32.mrf.mxu0
        %2268 = vdwg.mxu0
        %v2269 = vld [vmem:[%s12] sm:$0x1]
        %v2271 = vlaneseq
        %v2272 = vshrl.u32 %v2271, 7
        %v2273 = vsub.s32 0, %v2272
        %v2274 = vrot.slane %v2269, %v2273
        %v2276 = vadd.f32 %v2251, %v2274
        %v2277 = vadd.f32 %v2256, %v2274
        %v2278 = vadd.f32 %v2261, %v2274
        %v2279 = vadd.f32 %v2266, %v2274
        %v2280 = vmul.f32 %v2276, 0.5
        %v2281 = vmul.f32 %v2277, 0.5
        %v2282 = vmul.f32 %v2278, 0.5
        %v2283 = vmul.f32 %v2279, 0.5
        %v2284 = vmul.f32 %v2276, 0.70710677
        %v2285 = vmul.f32 %v2277, 0.70710677
        %v2286 = vmul.f32 %v2278, 0.70710677
        %v2287 = vmul.f32 %v2279, 0.70710677
        %vm2288 = vcmp.ge.f32.partialorder %v2284, 0.0
        %vm2289 = vcmp.ge.f32.partialorder %v2285, 0.0
        %vm2290 = vcmp.ge.f32.partialorder %v2286, 0.0
        %vm2291 = vcmp.ge.f32.partialorder %v2287, 0.0
        %v2292 = vsel %vm2288, 1.0, -1.0
        %v2293 = vsel %vm2289, 1.0, -1.0
        %v2294 = vsel %vm2290, 1.0, -1.0
        %v2295 = vsel %vm2291, 1.0, -1.0
        %v2296 = vand.u32 2147483647, %v2284
        %v2297 = vand.u32 2147483647, %v2285
        %v2298 = vand.u32 2147483647, %v2286
        %v2299 = vand.u32 2147483647, %v2287
        %v2300 = vmul.f32 %v2296, 0.3275911
        %v2301 = vmul.f32 %v2297, 0.3275911
        %v2302 = vmul.f32 %v2298, 0.3275911
        %v2303 = vmul.f32 %v2299, 0.3275911
        %v2304 = vadd.f32 %v2300, 1.0
        %v2305 = vadd.f32 %v2301, 1.0
        %v2306 = vadd.f32 %v2302, 1.0
        %v2307 = vadd.f32 %v2303, 1.0
        %v2308 = vrcp.pop %v2304
        %v2309 = vmul.f32 1.0, %v2308
        %v2310 = vrcp.pop %v2305
        %v2311 = vmul.f32 1.0, %v2310
        %v2312 = vrcp.pop %v2306
        %v2313 = vmul.f32 1.0, %v2312
        %v2314 = vrcp.pop %v2307
        %v2315 = vmul.f32 1.0, %v2314
        %v2316 = vmul.f32 %v2309, 1.0614054
        %v2317 = vmul.f32 %v2311, 1.0614054
        %v2318 = vmul.f32 %v2313, 1.0614054
        %v2319 = vmul.f32 %v2315, 1.0614054
        %v2320 = vadd.f32 %v2316, -1.4531521
        %v2321 = vadd.f32 %v2317, -1.4531521
        %v2322 = vadd.f32 %v2318, -1.4531521
        %v2323 = vadd.f32 %v2319, -1.4531521
        %v2324 = vmul.f32 %v2320, %v2309
        %v2325 = vmul.f32 %v2321, %v2311
        %v2326 = vmul.f32 %v2322, %v2313
        %v2327 = vmul.f32 %v2323, %v2315
        %v2328 = vadd.f32 %v2324, 1.4214138
        %v2329 = vadd.f32 %v2325, 1.4214138
        %v2330 = vadd.f32 %v2326, 1.4214138
        %v2331 = vadd.f32 %v2327, 1.4214138
        %v2332 = vmul.f32 %v2328, %v2309
        %v2333 = vmul.f32 %v2329, %v2311
        %v2334 = vmul.f32 %v2330, %v2313
        %v2335 = vmul.f32 %v2331, %v2315
        %v2336 = vadd.f32 %v2332, -0.28449672
        %v2337 = vadd.f32 %v2333, -0.28449672
        %v2338 = vadd.f32 %v2334, -0.28449672
        %v2339 = vadd.f32 %v2335, -0.28449672
        %v2340 = vmul.f32 %v2336, %v2309
        %v2341 = vmul.f32 %v2337, %v2311
        %v2342 = vmul.f32 %v2338, %v2313
        %v2343 = vmul.f32 %v2339, %v2315
        %v2344 = vadd.f32 %v2340, 0.2548296
        %v2345 = vadd.f32 %v2341, 0.2548296
        %v2346 = vadd.f32 %v2342, 0.2548296
        %v2347 = vadd.f32 %v2343, 0.2548296
        %v2348 = vmul.f32 %v2344, %v2309
        %v2349 = vmul.f32 %v2345, %v2311
        %v2350 = vmul.f32 %v2346, %v2313
        %v2351 = vmul.f32 %v2347, %v2315
        %v2352 = vsub.f32 0.0, %v2296
        %v2353 = vsub.f32 0.0, %v2297
        %v2354 = vsub.f32 0.0, %v2298
        %v2355 = vsub.f32 0.0, %v2299
        %v2356 = vmul.f32 %v2352, %v2296
        %v2357 = vmul.f32 %v2353, %v2297
        %v2358 = vmul.f32 %v2354, %v2298
        %v2359 = vmul.f32 %v2355, %v2299
        %v2360 = vmul.f32 %v2356, 1.442695
        %v2361 = vpow.pop %v2360
        %v2362 = vmul.f32 %v2357, 1.442695
        %v2363 = vpow.pop %v2362
        %v2364 = vmul.f32 %v2358, 1.442695
        %v2365 = vpow.pop %v2364
        %v2366 = vmul.f32 %v2359, 1.442695
        %v2367 = vpow.pop %v2366
        %v2368 = vmul.f32 %v2348, %v2361
        %v2369 = vmul.f32 %v2349, %v2363
        %v2370 = vmul.f32 %v2350, %v2365
        %v2371 = vmul.f32 %v2351, %v2367
        %v2372 = vsub.f32 1.0, %v2368
        %v2373 = vsub.f32 1.0, %v2369
        %v2374 = vsub.f32 1.0, %v2370
        %v2375 = vsub.f32 1.0, %v2371
        %v2376 = vmul.f32 %v2292, %v2372
        %v2377 = vmul.f32 %v2293, %v2373
        %v2378 = vmul.f32 %v2294, %v2374
        %v2379 = vmul.f32 %v2295, %v2375
        %v2380 = vadd.f32 %v2376, 1.0
        %v2381 = vadd.f32 %v2377, 1.0
        %v2382 = vadd.f32 %v2378, 1.0
        %v2383 = vadd.f32 %v2379, 1.0
        %v2384 = vmul.f32 %v2280, %v2380
        %v2385 = vmul.f32 %v2281, %v2381
        %v2386 = vmul.f32 %v2282, %v2382
        %v2387 = vmul.f32 %v2283, %v2383
        %v2388 = vld [vmem:[%s13] sm:$0x1]
        %v2390 = vlaneseq
        %v2391 = vshrl.u32 %v2390, 7
        %v2392 = vsub.s32 0, %v2391
        %v2393 = vrot.slane %v2388, %v2392
        %v2395 = vmul.f32 %v2384, %v2393
        %v2396 = vmul.f32 %v2385, %v2393
        %v2397 = vmul.f32 %v2386, %v2393
        %v2398 = vmul.f32 %v2387, %v2393
        %v2399 = vsel %vm1150, %v2395, 0.0
        %2400 = vadd.xlane.f32.xlu0 %v2399
        %v2401 = vpop.xlane.xlu0 %2400
        %v2402 = vsel %vm1150, %v2396, 0.0
        %2403 = vadd.xlane.f32.xlu0 %v2402
        %v2404 = vpop.xlane.xlu0 %2403
        %v2405 = vsel %vm1150, %v2397, 0.0
        %2406 = vadd.xlane.f32.xlu0 %v2405
        %v2407 = vpop.xlane.xlu0 %2406
        %v2408 = vsel %vm1150, %v2398, 0.0
        %2409 = vadd.xlane.f32.xlu0 %v2408
        %v2410 = vpop.xlane.xlu0 %2409
        %v2411 = vtanh.pop %v2401
        %v2412 = vtanh.pop %v2404
        %v2413 = vtanh.pop %v2407
        %v2414 = vtanh.pop %v2410
        %v2415 = vsel %vm689, %v2411, 0.0
        %v2416 = vsel %vm690, %v2412, 0.0
        %v2417 = vsel %vm691, %v2413, 0.0
        %v2418 = vsel %vm692, %v2414, 0.0
        %v2419 = vsel %vm697, %v2415, 0.0
        %v2420 = vsel %vm697, %v2416, 0.0
        %v2421 = vadd.f32 %v2419, %v2420
        %v2422 = vsel %vm697, %v2417, 0.0
        %v2423 = vadd.f32 %v2421, %v2422
        %v2424 = vsel %vm697, %v2418, 0.0
        %v2425 = vadd.f32 %v2423, %v2424
        %v2426 = vrot.slane %v2425, 4
        %v2427 = vadd.f32 %v2425, %v2426
        %v2428 = vrot.slane %v2427, 2
        %v2429 = vadd.f32 %v2427, %v2428
        %v2430 = vrot.slane %v2429, 1
        %v2431 = vadd.f32 %v2429, %v2430
        %vm2432 = vcmp.gt.f32.partialorder %v2431, %v2411
        %vm2433 = vcmp.gt.f32.partialorder %v2431, %v2412
        %vm2434 = vcmp.gt.f32.partialorder %v2431, %v2413
        %vm2435 = vcmp.gt.f32.partialorder %v2431, %v2414
        %vm2436 = vcmp.eq.f32.partialorder %v2431, %v2411
        %vm2437 = vcmp.eq.f32.partialorder %v2431, %v2412
        %vm2438 = vcmp.eq.f32.partialorder %v2431, %v2413
        %vm2439 = vcmp.eq.f32.partialorder %v2431, %v2414
        %vm2440 = vmand %vm2436, %vm693
        %vm2441 = vmand %vm2437, %vm694
        %vm2442 = vmand %vm2438, %vm695
        %vm2443 = vmand %vm2439, %vm696
        %vm2444 = vmor %vm2432, %vm2440
        %vm2445 = vmor %vm2433, %vm2441
        %vm2446 = vmor %vm2434, %vm2442
        %vm2447 = vmor %vm2435, %vm2443
        %v2448 = vsel %vm2444, 1.0, 0.0
        %v2449 = vsel %vm2445, 1.0, 0.0
        %v2450 = vsel %vm2446, 1.0, 0.0
        %v2451 = vsel %vm2447, 1.0, 0.0
        %v2452 = vmul.f32 %v2448, %v1872
        %v2453 = vmul.f32 %v2449, %v1872
        %v2454 = vmul.f32 %v2450, %v1872
        %v2455 = vmul.f32 %v2451, %v1872
        %v2456 = vsel %vm697, %v2452, 0.0
        %2457 = vadd.xlane.f32.xlu0 %v2456
        %v2458 = vpop.xlane.xlu0 %2457
        %v2459 = vsel %vm697, %v2453, 0.0
        %2460 = vadd.xlane.f32.xlu0 %v2459
        %v2461 = vpop.xlane.xlu0 %2460
        %v2462 = vsel %vm697, %v2454, 0.0
        %2463 = vadd.xlane.f32.xlu0 %v2462
        %v2464 = vpop.xlane.xlu0 %2463
        %v2465 = vsel %vm697, %v2455, 0.0
        %2466 = vadd.xlane.f32.xlu0 %v2465
        %v2467 = vpop.xlane.xlu0 %2466
        %vm2468 = vcmp.lt.f32.partialorder %v2458, 17.0
        %vm2469 = vcmp.lt.f32.partialorder %v2461, 17.0
        %vm2470 = vcmp.lt.f32.partialorder %v2464, 17.0
        %vm2471 = vcmp.lt.f32.partialorder %v2467, 17.0
        %v2472 = vsel %vm2468, 1, 0
        %v2473 = vsel %vm2469, 1, 0
        %v2474 = vsel %vm2470, 1, 0
        %v2475 = vsel %vm2471, 1, 0
        %v2476 = vcvt.s32.f32 %v2472
        %v2477 = vcvt.s32.f32 %v2473
        %v2478 = vcvt.s32.f32 %v2474
        %v2479 = vcvt.s32.f32 %v2475
        %v2480 = vmul.f32 %v1852, %v2476
        %v2481 = vmul.f32 %v1853, %v2477
        %v2482 = vmul.f32 %v1854, %v2478
        %v2483 = vmul.f32 %v1855, %v2479
        %v2484 = vmul.f32 %v2384, %v2411
        %v2485 = vmul.f32 %v2385, %v2412
        %v2486 = vmul.f32 %v2386, %v2413
        %v2487 = vmul.f32 %v2387, %v2414
        %v2488 = vmul.f32 %v2484, %v2480
        %v2489 = vmul.f32 %v2485, %v2481
        %v2490 = vmul.f32 %v2486, %v2482
        %v2491 = vmul.f32 %v2487, %v2483
        %vm2492 = vcmp.gt.f32.partialorder %v2480, 0.5
        %vm2493 = vcmp.gt.f32.partialorder %v2481, 0.5
        %vm2494 = vcmp.gt.f32.partialorder %v2482, 0.5
        %vm2495 = vcmp.gt.f32.partialorder %v2483, 0.5
        %v2496 = vsel %vm2492, 1, 0
        %v2497 = vsel %vm2493, 1, 0
        %v2498 = vsel %vm2494, 1, 0
        %v2499 = vsel %vm2495, 1, 0
        %vm2500 = vcmp.eq.s32.totalorder %v2496, 1
        %vm2501 = vcmp.eq.s32.totalorder %v2497, 1
        %vm2502 = vcmp.eq.s32.totalorder %v2498, 1
        %vm2503 = vcmp.eq.s32.totalorder %v2499, 1
        %v2504 = vsel %vm2500, %v2488, -inf
        %v2505 = vsel %vm2501, %v2489, -inf
        %v2506 = vsel %vm2502, %v2490, -inf
        %v2507 = vsel %vm2503, %v2491, -inf
        %v2508 = vsel %vm1150, %v2504, -inf
        %v2509 = vsel %vm1150, %v2505, -inf
        %v2510 = vsel %vm1150, %v2506, -inf
        %v2511 = vsel %vm1150, %v2507, -inf
        %v2512 = vmax.f32 %v2508, %v2509
        %v2513 = vmax.f32 %v2510, %v2511
        %v2514 = vmax.f32 %v2512, %v2513
        %v2515 = vrot.slane %v2514, 4
        %v2516 = vmax.f32 %v2514, %v2515
        %v2517 = vrot.slane %v2516, 2
        %v2518 = vmax.f32 %v2516, %v2517
        %v2519 = vrot.slane %v2518, 1
        %v2520 = vmax.f32 %v2518, %v2519
        %v2521 = vadd.f32 %v1918, %v2520
        %v2522 = vsel %vm1150, %v2488, 0.0
        %v2523 = vsel %vm1150, %v2489, 0.0
        %v2524 = vadd.f32 %v2522, %v2523
        %v2525 = vsel %vm1150, %v2490, 0.0
        %v2526 = vadd.f32 %v2524, %v2525
        %v2527 = vsel %vm1150, %v2491, 0.0
        %v2528 = vadd.f32 %v2526, %v2527
        %v2529 = vrot.slane %v2528, 4
        %v2530 = vadd.f32 %v2528, %v2529
        %v2531 = vrot.slane %v2530, 2
        %v2532 = vadd.f32 %v2530, %v2531
        %v2533 = vrot.slane %v2532, 1
        %v2534 = vadd.f32 %v2532, %v2533
        %v2535 = vmul.f32 %v2534, 0.05882353
        %v2536 = vadd.f32 %v1933, %v2535
        %v2537 = vld [vmem:[%s14] sm:$0xff]
        %v2538 = vld [vmem:[%s14 + $0x8] sm:$0xff]
        %v2539 = vld [vmem:[%s14 + $0x10] sm:$0xff]
        %v2540 = vld [vmem:[%s14 + $0x18] sm:$0xff]
        %v2541 = vld [vmem:[%s14 + $0x20] sm:$0xff]
        %v2542 = vld [vmem:[%s14 + $0x28] sm:$0xff]
        %v2543 = vld [vmem:[%s14 + $0x30] sm:$0xff]
        %v2544 = vld [vmem:[%s14 + $0x38] sm:$0xff]
        %v2545 = vld [vmem:[%s15] sm:$0xff]
        %v2546 = vld [vmem:[%s15 + $0x8] sm:$0xff]
        %v2547 = vld [vmem:[%s15 + $0x10] sm:$0xff]
        %v2548 = vld [vmem:[%s15 + $0x18] sm:$0xff]
        %v2549 = vld [vmem:[%s15 + $0x20] sm:$0xff]
        %v2550 = vld [vmem:[%s15 + $0x28] sm:$0xff]
        %v2551 = vld [vmem:[%s15 + $0x30] sm:$0xff]
        %v2552 = vld [vmem:[%s15 + $0x38] sm:$0xff]
        %v2554 = vsel %vm1150, %v2536, 0
        %2556 = vmatprep.subr.mxu0 0.0
        %2557 = vmatpush1.msra.mxu0 0.0
        %2558 = vmatprep.subr.mxu0 0.0
        %2559 = vmatpush1.msra.mxu0 0.0
        %2560 = vmatprep.subr.mxu0 0.0
        %2561 = vmatpush1.msra.mxu0 0.0
        %2562 = vmatprep.subr.mxu0 0.0
        %2563 = vmatpush1.msra.mxu0 0.0
        %2564 = vmatprep.subr.mxu0 0.0
        %2565 = vmatpush1.msra.mxu0 0.0
        %2566 = vmatprep.subr.mxu0 0.0
        %2567 = vmatpush1.msra.mxu0 0.0
        %2568 = vmatprep.subr.mxu0 0.0
        %2569 = vmatpush1.msra.mxu0 0.0
        %2570 = vmatprep.subr.mxu0 0.0
        %2571 = vmatpush1.msra.mxu0 0.0
        %2572 = vmatprep.subr.mxu0 0.0
        %2573 = vmatpush1.msra.mxu0 %v2552
        %2574 = vmatprep.subr.mxu0 0.0
        %2575 = vmatpush1.msra.mxu0 %v2551
        %2576 = vmatprep.subr.mxu0 0.0
        %2577 = vmatpush1.msra.mxu0 %v2550
        %2578 = vmatprep.subr.mxu0 0.0
        %2579 = vmatpush1.msra.mxu0 %v2549
        %2580 = vmatprep.subr.mxu0 0.0
        %2581 = vmatpush1.msra.mxu0 %v2548
        %2582 = vmatprep.subr.mxu0 0.0
        %2583 = vmatpush1.msra.mxu0 %v2547
        %2584 = vmatprep.subr.mxu0 0.0
        %2585 = vmatpush1.msra.mxu0 %v2546
        %2586 = vmatprep.subr.mxu0 0.0
        %2587 = vmatpush1.msra.mxu0 %v2545
        %2588 = vmatprep.subr.mxu0 0.0
        %2589 = vmatpush2.msra.mxu0 0.0
        %2590 = vmatprep.subr.mxu0 0.0
        %2591 = vmatpush2.msra.mxu0 0.0
        %2592 = vmatprep.subr.mxu0 0.0
        %2593 = vmatpush2.msra.mxu0 0.0
        %2594 = vmatprep.subr.mxu0 0.0
        %2595 = vmatpush2.msra.mxu0 0.0
        %2596 = vmatprep.subr.mxu0 0.0
        %2597 = vmatpush2.msra.mxu0 0.0
        %2598 = vmatprep.subr.mxu0 0.0
        %2599 = vmatpush2.msra.mxu0 0.0
        %2600 = vmatprep.subr.mxu0 0.0
        %2601 = vmatpush2.msra.mxu0 0.0
        %2602 = vmatprep.subr.mxu0 0.0
        %2603 = vmatpush2.msra.mxu0 0.0
        %2604 = vmatprep.subr.mxu0 0.0
        %2605 = vmatpush2.msra.mxu0 0.0
        %2606 = vmatprep.subr.mxu0 0.0
        %2607 = vmatpush2.msra.mxu0 0.0
        %2608 = vmatprep.subr.mxu0 0.0
        %2609 = vmatpush2.msra.mxu0 0.0
        %2610 = vmatprep.subr.mxu0 0.0
        %2611 = vmatpush2.msra.mxu0 0.0
        %2612 = vmatprep.subr.mxu0 0.0
        %2613 = vmatpush2.msra.mxu0 0.0
        %2614 = vmatprep.subr.mxu0 0.0
        %2615 = vmatpush2.msra.mxu0 0.0
        %2616 = vmatprep.subr.mxu0 0.0
        %2617 = vmatpush2.msra.mxu0 0.0
        %2618 = vmatprep.subr.mxu0 0.0
        %2619 = vmatpush2.msra.mxu0 0.0
        %2620 = vmatprep.mubr.f32.mxu0 0.0
        %2621 = vmatmul.mubr.f32.gmra.mxu0 %v2554
        %v2622 = vpop.f32.mrf.mxu0
        %v2623 = vadd.f32 0.0, %v2622
        %v2624 = vpop.f32.mrf.mxu0
        %2625 = vdwg.mxu0
        %v2627 = vsel %vm1150, %v2521, 0
        %2629 = vmatprep.subr.mxu0 0.0
        %2630 = vmatpush1.msra.mxu0 0.0
        %2631 = vmatprep.subr.mxu0 0.0
        %2632 = vmatpush1.msra.mxu0 0.0
        %2633 = vmatprep.subr.mxu0 0.0
        %2634 = vmatpush1.msra.mxu0 0.0
        %2635 = vmatprep.subr.mxu0 0.0
        %2636 = vmatpush1.msra.mxu0 0.0
        %2637 = vmatprep.subr.mxu0 0.0
        %2638 = vmatpush1.msra.mxu0 0.0
        %2639 = vmatprep.subr.mxu0 0.0
        %2640 = vmatpush1.msra.mxu0 0.0
        %2641 = vmatprep.subr.mxu0 0.0
        %2642 = vmatpush1.msra.mxu0 0.0
        %2643 = vmatprep.subr.mxu0 0.0
        %2644 = vmatpush1.msra.mxu0 0.0
        %2645 = vmatprep.subr.mxu0 0.0
        %2646 = vmatpush1.msra.mxu0 %v2544
        %2647 = vmatprep.subr.mxu0 0.0
        %2648 = vmatpush1.msra.mxu0 %v2543
        %2649 = vmatprep.subr.mxu0 0.0
        %2650 = vmatpush1.msra.mxu0 %v2542
        %2651 = vmatprep.subr.mxu0 0.0
        %2652 = vmatpush1.msra.mxu0 %v2541
        %2653 = vmatprep.subr.mxu0 0.0
        %2654 = vmatpush1.msra.mxu0 %v2540
        %2655 = vmatprep.subr.mxu0 0.0
        %2656 = vmatpush1.msra.mxu0 %v2539
        %2657 = vmatprep.subr.mxu0 0.0
        %2658 = vmatpush1.msra.mxu0 %v2538
        %2659 = vmatprep.subr.mxu0 0.0
        %2660 = vmatpush1.msra.mxu0 %v2537
        %2661 = vmatprep.subr.mxu0 0.0
        %2662 = vmatpush2.msra.mxu0 0.0
        %2663 = vmatprep.subr.mxu0 0.0
        %2664 = vmatpush2.msra.mxu0 0.0
        %2665 = vmatprep.subr.mxu0 0.0
        %2666 = vmatpush2.msra.mxu0 0.0
        %2667 = vmatprep.subr.mxu0 0.0
        %2668 = vmatpush2.msra.mxu0 0.0
        %2669 = vmatprep.subr.mxu0 0.0
        %2670 = vmatpush2.msra.mxu0 0.0
        %2671 = vmatprep.subr.mxu0 0.0
        %2672 = vmatpush2.msra.mxu0 0.0
        %2673 = vmatprep.subr.mxu0 0.0
        %2674 = vmatpush2.msra.mxu0 0.0
        %2675 = vmatprep.subr.mxu0 0.0
        %2676 = vmatpush2.msra.mxu0 0.0
        %2677 = vmatprep.subr.mxu0 0.0
        %2678 = vmatpush2.msra.mxu0 0.0
        %2679 = vmatprep.subr.mxu0 0.0
        %2680 = vmatpush2.msra.mxu0 0.0
        %2681 = vmatprep.subr.mxu0 0.0
        %2682 = vmatpush2.msra.mxu0 0.0
        %2683 = vmatprep.subr.mxu0 0.0
        %2684 = vmatpush2.msra.mxu0 0.0
        %2685 = vmatprep.subr.mxu0 0.0
        %2686 = vmatpush2.msra.mxu0 0.0
        %2687 = vmatprep.subr.mxu0 0.0
        %2688 = vmatpush2.msra.mxu0 0.0
        %2689 = vmatprep.subr.mxu0 0.0
        %2690 = vmatpush2.msra.mxu0 0.0
        %2691 = vmatprep.subr.mxu0 0.0
        %2692 = vmatpush2.msra.mxu0 0.0
        %2693 = vmatprep.mubr.f32.mxu0 0.0
        %2694 = vmatmul.mubr.f32.gmra.mxu0 %v2627
        %v2695 = vpop.f32.mrf.mxu0
        %v2696 = vadd.f32 %v2623, %v2695
        %v2697 = vpop.f32.mrf.mxu0
        %2698 = vdwg.mxu0
        %v2699 = vld [vmem:[%s16] sm:$0x1]
        %v2700 = vadd.f32 %v2696, %v2699
        %v2701 = vmul.f32 %v2700, 0.5
        %v2702 = vmul.f32 %v2700, 0.70710677
        %vm2703 = vcmp.ge.f32.partialorder %v2702, 0.0
        %v2704 = vsel %vm2703, 1.0, -1.0
        %v2705 = vand.u32 2147483647, %v2702
        %v2706 = vmul.f32 %v2705, 0.3275911
        %v2707 = vadd.f32 %v2706, 1.0
        %v2708 = vrcp.pop %v2707
        %v2709 = vmul.f32 1.0, %v2708
        %v2710 = vmul.f32 %v2709, 1.0614054
        %v2711 = vadd.f32 %v2710, -1.4531521
        %v2712 = vmul.f32 %v2711, %v2709
        %v2713 = vadd.f32 %v2712, 1.4214138
        %v2714 = vmul.f32 %v2713, %v2709
        %v2715 = vadd.f32 %v2714, -0.28449672
        %v2716 = vmul.f32 %v2715, %v2709
        %v2717 = vadd.f32 %v2716, 0.2548296
        %v2718 = vmul.f32 %v2717, %v2709
        %v2719 = vsub.f32 0.0, %v2705
        %v2720 = vmul.f32 %v2719, %v2705
        %v2721 = vmul.f32 %v2720, 1.442695
        %v2722 = vpow.pop %v2721
        %v2723 = vmul.f32 %v2718, %v2722
        %v2724 = vsub.f32 1.0, %v2723
        %v2725 = vmul.f32 %v2704, %v2724
        %v2726 = vadd.f32 %v2725, 1.0
        %v2727 = vmul.f32 %v2701, %v2726
        %v2728 = vld [vmem:[%s17] sm:$0xff]
        %v2729 = vld [vmem:[%s17 + $0x8] sm:$0xff]
        %v2730 = vld [vmem:[%s17 + $0x10] sm:$0xff]
        %v2731 = vld [vmem:[%s17 + $0x18] sm:$0xff]
        %v2732 = vld [vmem:[%s17 + $0x20] sm:$0xff]
        %v2733 = vld [vmem:[%s17 + $0x28] sm:$0xff]
        %v2734 = vld [vmem:[%s17 + $0x30] sm:$0xff]
        %v2735 = vld [vmem:[%s17 + $0x38] sm:$0xff]
        %v2736 = vld [vmem:[%s18] sm:$0x1]
        %v2738 = vsel %vm1150, %v2727, 0
        %2740 = vmatprep.subr.mxu0 0.0
        %2741 = vmatpush1.msra.mxu0 0.0
        %2742 = vmatprep.subr.mxu0 0.0
        %2743 = vmatpush1.msra.mxu0 0.0
        %2744 = vmatprep.subr.mxu0 0.0
        %2745 = vmatpush1.msra.mxu0 0.0
        %2746 = vmatprep.subr.mxu0 0.0
        %2747 = vmatpush1.msra.mxu0 0.0
        %2748 = vmatprep.subr.mxu0 0.0
        %2749 = vmatpush1.msra.mxu0 0.0
        %2750 = vmatprep.subr.mxu0 0.0
        %2751 = vmatpush1.msra.mxu0 0.0
        %2752 = vmatprep.subr.mxu0 0.0
        %2753 = vmatpush1.msra.mxu0 0.0
        %2754 = vmatprep.subr.mxu0 0.0
        %2755 = vmatpush1.msra.mxu0 0.0
        %2756 = vmatprep.subr.mxu0 0.0
        %2757 = vmatpush1.msra.mxu0 %v2735
        %2758 = vmatprep.subr.mxu0 0.0
        %2759 = vmatpush1.msra.mxu0 %v2734
        %2760 = vmatprep.subr.mxu0 0.0
        %2761 = vmatpush1.msra.mxu0 %v2733
        %2762 = vmatprep.subr.mxu0 0.0
        %2763 = vmatpush1.msra.mxu0 %v2732
        %2764 = vmatprep.subr.mxu0 0.0
        %2765 = vmatpush1.msra.mxu0 %v2731
        %2766 = vmatprep.subr.mxu0 0.0
        %2767 = vmatpush1.msra.mxu0 %v2730
        %2768 = vmatprep.subr.mxu0 0.0
        %2769 = vmatpush1.msra.mxu0 %v2729
        %2770 = vmatprep.subr.mxu0 0.0
        %2771 = vmatpush1.msra.mxu0 %v2728
        %2772 = vmatprep.subr.mxu0 0.0
        %2773 = vmatpush2.msra.mxu0 0.0
        %2774 = vmatprep.subr.mxu0 0.0
        %2775 = vmatpush2.msra.mxu0 0.0
        %2776 = vmatprep.subr.mxu0 0.0
        %2777 = vmatpush2.msra.mxu0 0.0
        %2778 = vmatprep.subr.mxu0 0.0
        %2779 = vmatpush2.msra.mxu0 0.0
        %2780 = vmatprep.subr.mxu0 0.0
        %2781 = vmatpush2.msra.mxu0 0.0
        %2782 = vmatprep.subr.mxu0 0.0
        %2783 = vmatpush2.msra.mxu0 0.0
        %2784 = vmatprep.subr.mxu0 0.0
        %2785 = vmatpush2.msra.mxu0 0.0
        %2786 = vmatprep.subr.mxu0 0.0
        %2787 = vmatpush2.msra.mxu0 0.0
        %2788 = vmatprep.subr.mxu0 0.0
        %2789 = vmatpush2.msra.mxu0 0.0
        %2790 = vmatprep.subr.mxu0 0.0
        %2791 = vmatpush2.msra.mxu0 0.0
        %2792 = vmatprep.subr.mxu0 0.0
        %2793 = vmatpush2.msra.mxu0 0.0
        %2794 = vmatprep.subr.mxu0 0.0
        %2795 = vmatpush2.msra.mxu0 0.0
        %2796 = vmatprep.subr.mxu0 0.0
        %2797 = vmatpush2.msra.mxu0 0.0
        %2798 = vmatprep.subr.mxu0 0.0
        %2799 = vmatpush2.msra.mxu0 0.0
        %2800 = vmatprep.subr.mxu0 0.0
        %2801 = vmatpush2.msra.mxu0 0.0
        %2802 = vmatprep.subr.mxu0 0.0
        %2803 = vmatpush2.msra.mxu0 0.0
        %2804 = vmatprep.mubr.f32.mxu0 0.0
        %2805 = vmatmul.mubr.f32.gmra.mxu0 %v2738
        %v2806 = vpop.f32.mrf.mxu0
        %v2807 = vadd.f32 %v2736, %v2806
        %v2808 = vpop.f32.mrf.mxu0
        %2809 = vdwg.mxu0
        %v2810 = vmul.f32 %v2807, 0.5
        %v2811 = vmul.f32 %v2807, 0.70710677
        %vm2812 = vcmp.ge.f32.partialorder %v2811, 0.0
        %v2813 = vsel %vm2812, 1.0, -1.0
        %v2814 = vand.u32 2147483647, %v2811
        %v2815 = vmul.f32 %v2814, 0.3275911
        %v2816 = vadd.f32 %v2815, 1.0
        %v2817 = vrcp.pop %v2816
        %v2818 = vmul.f32 1.0, %v2817
        %v2819 = vmul.f32 %v2818, 1.0614054
        %v2820 = vadd.f32 %v2819, -1.4531521
        %v2821 = vmul.f32 %v2820, %v2818
        %v2822 = vadd.f32 %v2821, 1.4214138
        %v2823 = vmul.f32 %v2822, %v2818
        %v2824 = vadd.f32 %v2823, -0.28449672
        %v2825 = vmul.f32 %v2824, %v2818
        %v2826 = vadd.f32 %v2825, 0.2548296
        %v2827 = vmul.f32 %v2826, %v2818
        %v2828 = vsub.f32 0.0, %v2814
        %v2829 = vmul.f32 %v2828, %v2814
        %v2830 = vmul.f32 %v2829, 1.442695
        %v2831 = vpow.pop %v2830
        %v2832 = vmul.f32 %v2827, %v2831
        %v2833 = vsub.f32 1.0, %v2832
        %v2834 = vmul.f32 %v2813, %v2833
        %v2835 = vadd.f32 %v2834, 1.0
        %v2836 = vmul.f32 %v2810, %v2835
        %v2837 = vld [vmem:[%s19] sm:$0xff]
        %v2838 = vld [vmem:[%s19 + $0x8] sm:$0xff]
        %v2839 = vld [vmem:[%s19 + $0x10] sm:$0xff]
        %v2840 = vld [vmem:[%s19 + $0x18] sm:$0xff]
        %v2841 = vld [vmem:[%s19 + $0x20] sm:$0xff]
        %v2842 = vld [vmem:[%s19 + $0x28] sm:$0xff]
        %v2843 = vld [vmem:[%s19 + $0x30] sm:$0xff]
        %v2844 = vld [vmem:[%s19 + $0x38] sm:$0xff]
        %v2845 = vld [vmem:[%s20] sm:$0x1]
        %v2847 = vsel %vm1150, %v2836, 0
        %2849 = vmatprep.subr.mxu0 0.0
        %2850 = vmatpush1.msra.mxu0 0.0
        %2851 = vmatprep.subr.mxu0 0.0
        %2852 = vmatpush1.msra.mxu0 0.0
        %2853 = vmatprep.subr.mxu0 0.0
        %2854 = vmatpush1.msra.mxu0 0.0
        %2855 = vmatprep.subr.mxu0 0.0
        %2856 = vmatpush1.msra.mxu0 0.0
        %2857 = vmatprep.subr.mxu0 0.0
        %2858 = vmatpush1.msra.mxu0 0.0
        %2859 = vmatprep.subr.mxu0 0.0
        %2860 = vmatpush1.msra.mxu0 0.0
        %2861 = vmatprep.subr.mxu0 0.0
        %2862 = vmatpush1.msra.mxu0 0.0
        %2863 = vmatprep.subr.mxu0 0.0
        %2864 = vmatpush1.msra.mxu0 0.0
        %2865 = vmatprep.subr.mxu0 0.0
        %2866 = vmatpush1.msra.mxu0 %v2844
        %2867 = vmatprep.subr.mxu0 0.0
        %2868 = vmatpush1.msra.mxu0 %v2843
        %2869 = vmatprep.subr.mxu0 0.0
        %2870 = vmatpush1.msra.mxu0 %v2842
        %2871 = vmatprep.subr.mxu0 0.0
        %2872 = vmatpush1.msra.mxu0 %v2841
        %2873 = vmatprep.subr.mxu0 0.0
        %2874 = vmatpush1.msra.mxu0 %v2840
        %2875 = vmatprep.subr.mxu0 0.0
        %2876 = vmatpush1.msra.mxu0 %v2839
        %2877 = vmatprep.subr.mxu0 0.0
        %2878 = vmatpush1.msra.mxu0 %v2838
        %2879 = vmatprep.subr.mxu0 0.0
        %2880 = vmatpush1.msra.mxu0 %v2837
        %2881 = vmatprep.subr.mxu0 0.0
        %2882 = vmatpush2.msra.mxu0 0.0
        %2883 = vmatprep.subr.mxu0 0.0
        %2884 = vmatpush2.msra.mxu0 0.0
        %2885 = vmatprep.subr.mxu0 0.0
        %2886 = vmatpush2.msra.mxu0 0.0
        %2887 = vmatprep.subr.mxu0 0.0
        %2888 = vmatpush2.msra.mxu0 0.0
        %2889 = vmatprep.subr.mxu0 0.0
        %2890 = vmatpush2.msra.mxu0 0.0
        %2891 = vmatprep.subr.mxu0 0.0
        %2892 = vmatpush2.msra.mxu0 0.0
        %2893 = vmatprep.subr.mxu0 0.0
        %2894 = vmatpush2.msra.mxu0 0.0
        %2895 = vmatprep.subr.mxu0 0.0
        %2896 = vmatpush2.msra.mxu0 0.0
        %2897 = vmatprep.subr.mxu0 0.0
        %2898 = vmatpush2.msra.mxu0 0.0
        %2899 = vmatprep.subr.mxu0 0.0
        %2900 = vmatpush2.msra.mxu0 0.0
        %2901 = vmatprep.subr.mxu0 0.0
        %2902 = vmatpush2.msra.mxu0 0.0
        %2903 = vmatprep.subr.mxu0 0.0
        %2904 = vmatpush2.msra.mxu0 0.0
        %2905 = vmatprep.subr.mxu0 0.0
        %2906 = vmatpush2.msra.mxu0 0.0
        %2907 = vmatprep.subr.mxu0 0.0
        %2908 = vmatpush2.msra.mxu0 0.0
        %2909 = vmatprep.subr.mxu0 0.0
        %2910 = vmatpush2.msra.mxu0 0.0
        %2911 = vmatprep.subr.mxu0 0.0
        %2912 = vmatpush2.msra.mxu0 0.0
        %2913 = vmatprep.mubr.f32.mxu0 0.0
        %2914 = vmatmul.mubr.f32.gmra.mxu0 %v2847
        %v2915 = vpop.f32.mrf.mxu0
        %v2916 = vadd.f32 %v2845, %v2915
        %v2917 = vpop.f32.mrf.mxu0
        %2918 = vdwg.mxu0
        %vm2919 = vcmask 24576
        %2920 = vst.msk [vmem:[%s663] sm:$0x1] %vm2919, %v2916
        %s2921 = sand.u32 %s494, 1
        %s2922 = scalar_lea.sflag [#allocation3], %s2921
        %s2923 = sand.u32 %s494, 1
        %s2924 = scalar_lea.vmem [#allocation2], %s2923
        // Predicated region
        $region105: #{recognizer_forward.1} parent=103 // pred_check
          %p2925 = pneg %p504
        $region106: #{recognizer_forward.1} parent=103 // pred_check_branch
          %2927 = sbr.rel (%p2925) target = $region108
        $region107: #{recognizer_forward.1} parent=103 // pred_region
          %s2929 = ssub.s32 16, 16
          %2930 = vsyncadd %s2922, %s2929
          %s2931 = smul.addr %s35, 16
          %s2932 = scalar_lea.hbm %s21, %s2931
          %s2934 = sshll.u32 %s2924, 4
          %s2935 = int_to_ptr.vmem [resolvable:$true] %s2934
          %2937 = dma.vmem_to_hbm [thread:$0]  %s2935, 16, %s2932, %s2922
        $region108: #{recognizer_forward.1} parent=103 // pred_fallthru
          _
      $region104: #{recognizer_forward.1} parent=5 // pred_fallthru
        _
      %p2938 = scmp.le.s32.totalorder 2, %s30
      // Predicated region
      $region109: #{recognizer_forward.1} parent=5 // pred_check
        %p2939 = pneg %p2938
      $region110: #{recognizer_forward.1} parent=5 // pred_check_branch
        %2941 = sbr.rel (%p2939) target = $region112
      $region111: #{recognizer_forward.1} parent=5 // pred_region
        %s2942 = ssub.s32 %s30, 2
        // Predicated region
        $region113: #{recognizer_forward.1} parent=111 // pred_check
          %p2943 = pneg %p510
        $region114: #{recognizer_forward.1} parent=111 // pred_check_branch
          %2945 = sbr.rel (%p2943) target = $region116
        $region115: #{recognizer_forward.1} parent=111 // pred_region
          %s2946 = sand.u32 %s495, 1
          %s2947 = scalar_lea.sflag [#allocation3], %s2946
          %s2948 = sand.u32 %s495, 1
          %s2949 = scalar_lea.vmem [#allocation2], %s2948
          %2950 = dma.done %s2947, 16
        $region116: #{recognizer_forward.1} parent=111 // pred_fallthru
          _
      $region112: #{recognizer_forward.1} parent=5 // pred_fallthru
        _
    $region6: #{recognizer_forward.1} parent=1 // loop_footer
      %s34 = sadd.s32 1, %s30
    $region7: #{recognizer_forward.1} parent=1 // loop_footer_branch
      %29 = sbr.rel target = $region3
    $region8: #{recognizer_forward.1} parent=1 // loop_exit
      _
    %2951 = vsyncpa [#allocation3], 1
    %s2952 = scalar_lea.sflag [#allocation3], 1
    %2953 = vsyncpa %s2952, 1

</llo_original>
